<compile_context>
chip_gen: v6e
topology: v6e:2x2x1
jax: 0.10.0
libtpu: 0.0.40
codegen_flags: <defaults>
</compile_context>

<pallas_src>
import numpy as np
import jax
import jax.numpy as jnp
from jax.experimental import pallas as pl
from jax.experimental.pallas import tpu as pltpu


def _graphormer_layer_kernel(xq_ref, xk_ref, b_ref, mask_ref, pmean_ref,
                             wqkv_ref, bqkv_ref, we_ref, wo_ref, wff_ref,
                             vecs_ref, out_ref, acc_ref, m_ref, l_ref):
    ki = pl.program_id(1)
    nk = pl.num_programs(1)

    d = xq_ref.shape[-1]
    num_heads = m_ref.shape[0]
    e_dim = pmean_ref.shape[0]
    hd = num_heads * d
    scale = 1.0 / float(d) ** 0.5

    # packed per-channel vectors: rows = ln1g, ln1b, ln2g, ln2b, bo, bff, pad, pad
    ln1g = vecs_ref[0:1, :]
    ln1b = vecs_ref[1:2, :]
    ln2g = vecs_ref[2:3, :]
    ln2b = vecs_ref[3:4, :]
    bo = vecs_ref[4:5, :]
    bff = vecs_ref[5:6, :]

    def layer_norm(v, g, beta):          # f32 elementwise math (v5e has no bf16 VPU)
        mu = jnp.mean(v, axis=-1, keepdims=True)
        var = jnp.mean((v - mu) ** 2, axis=-1, keepdims=True)
        return (v - mu) * jax.lax.rsqrt(var + 1e-5) * g + beta

    @pl.when(ki == 0)
    def _init():
        m_ref[...] = jnp.full(m_ref.shape, -jnp.inf, m_ref.dtype)
        l_ref[...] = jnp.zeros(l_ref.shape, l_ref.dtype)
        acc_ref[...] = jnp.zeros(acc_ref.shape, acc_ref.dtype)

    # h'(l) = MHA(LN(h(l-1))) + h(l-1)
    xq = xq_ref[...]                                                  # [TQ, D] f32
    xqn = layer_norm(xq, ln1g, ln1b).astype(jnp.bfloat16)
    xkn = layer_norm(xk_ref[...], ln1g, ln1b).astype(jnp.bfloat16)

    # fused Q and K/V projections for all heads (bf16 MXU operands, f32 accum).
    q_all = jnp.dot(xqn, wqkv_ref[:, :hd],
                    preferred_element_type=jnp.float32) + bqkv_ref[:, :hd]
    kv_all = jnp.dot(xkn, wqkv_ref[:, hd:],
                     preferred_element_type=jnp.float32) + bqkv_ref[:, hd:]

    bmat = b_ref[...]                                                 # [TQ, TK]
    mask = mask_ref[...]                                              # [TQ, TK]

    for h in range(num_heads):                      # static unrolled head loop
        qh = q_all[:, h * d:(h + 1) * d].astype(jnp.bfloat16)
        kh = kv_all[:, h * d:(h + 1) * d].astype(jnp.bfloat16)
        vh = kv_all[:, hd + h * d:hd + (h + 1) * d].astype(jnp.bfloat16)

        s = jax.lax.dot_general(qh, kh, (((1,), (1,)), ((), ())),
                                preferred_element_type=jnp.float32)   # q @ k.T
        s = s * scale + bmat
        # head-major edge encoding: accumulate each bf16 E-plane directly into
        # the f32 score tile (no [N,N,H] tensor, no one-hot select).
        for ee in range(e_dim):
            s = s + we_ref[h, ee] * pmean_ref[ee].astype(jnp.float32)
        # multiplicative mask: logits of cross-graph pairs become 0 (not -inf),
        # exactly matching the reference PyTorch module's semantics.
        s = s * mask

        # flash-style online softmax for this head.
        m_prev = m_ref[h]                                             # [TQ, 1]
        m_new = jnp.maximum(m_prev, jnp.max(s, axis=-1, keepdims=True))
        alpha = jnp.exp(m_prev - m_new)
        p = jnp.exp(s - m_new)
        l_ref[h] = alpha * l_ref[h] + jnp.sum(p, axis=-1, keepdims=True)
        m_ref[h] = m_new

        pv = jnp.dot(p.astype(jnp.bfloat16), vh,
                     preferred_element_type=jnp.float32)              # [TQ, D]
        acc_ref[:, h * d:(h + 1) * d] = (
            alpha * acc_ref[:, h * d:(h + 1) * d] + pv)

    @pl.when(ki == nk - 1)
    def _finalize():
        for h in range(num_heads):
            inv_l = pl.reciprocal(l_ref[h], approx=True)              # EUP divide
            acc_ref[:, h * d:(h + 1) * d] = acc_ref[:, h * d:(h + 1) * d] * inv_l

        # fused output projection from the [TQ, H*D] scratch (lane-dense, K=128).
        cat = acc_ref[...].astype(jnp.bfloat16)
        x_prime = jnp.dot(cat, wo_ref[...],
                          preferred_element_type=jnp.float32) + bo + xq

        # h(l) = FFN(LN(h'(l))) + h'(l)
        x2 = layer_norm(x_prime, ln2g, ln2b).astype(jnp.bfloat16)
        ff = jnp.dot(x2, wff_ref[...], preferred_element_type=jnp.float32) + bff
        result = ff + x_prime                                         # [TQ, D]

        pad = out_ref.shape[-1] - d
        if pad > 0:   # lane-dense (unmasked) store; wrapper slices back to [:, :D]
            result = jnp.concatenate(
                [result, jnp.zeros((result.shape[0], pad), result.dtype)], axis=-1)
        out_ref[...] = result


def graphormer_encoder_layer(x, b, batch_mask, path_mean, params,
                             tile_q=128, tile_k=512):
    n, d = x.shape
    num_heads = params["wq"].shape[0]
    e_dim = params["we"].shape[1]
    hd = num_heads * d

    tq = min(tile_q, n)
    tk = min(tile_k, n)
    # TODO(synk): for ragged node counts, pad N up to the tile size and extend
    # batch_mask with zero rows/cols instead of requiring divisibility.
    assert n % tq == 0 and n % tk == 0

    # torch Linear convention is W[out, in]; pre-transpose to [in, out] and
    # pre-cast all MXU weight operands to bf16 host-side.
    def pack_heads(w):                       # [H, out, in] -> [in, H*out]
        return jnp.concatenate([w[i].T for i in range(num_heads)], axis=1)

    wqkv = jnp.concatenate([pack_heads(params["wq"]),
                            pack_heads(params["wk"]),
                            pack_heads(params["wv"])], axis=1).astype(jnp.bfloat16)
    bqkv = jnp.concatenate([params["bq"].reshape(-1),
                            params["bk"].reshape(-1),
                            params["bv"].reshape(-1)]).reshape(1, 3 * hd)
    bqkv = bqkv.astype(jnp.float32)
    we = params["we"].astype(jnp.float32)                        # [H, E] -> SMEM
    wo_t = jnp.transpose(params["wo_full"]).astype(jnp.bfloat16)  # [H*D, D]
    wff_t = jnp.transpose(params["wff_w"]).astype(jnp.bfloat16)   # [D, D]
    vecs = jnp.concatenate([params["ln1g"], params["ln1b"],
                            params["ln2g"], params["ln2b"],
                            params["bo"], params["bff"],
                            jnp.zeros((2, d), jnp.float32)], axis=0)   # [8, D]

    # E-major bf16 path_mean: lane dim = kv nodes (dense), halved HBM traffic.
    pmean_em = jnp.transpose(path_mean, (2, 0, 1)).astype(jnp.bfloat16)  # [E,N,N]

    out_lanes = ((d + 127) // 128) * 128      # lane-dense output slab width
    grid = (n // tq, n // tk)

    in_specs = [
        pl.BlockSpec((tq, d), lambda qi, ki: (qi, 0)),              # x (query rows)
        pl.BlockSpec((tk, d), lambda qi, ki: (ki, 0)),              # x (kv rows)
        pl.BlockSpec((tq, tk), lambda qi, ki: (qi, ki)),            # spatial bias b
        pl.BlockSpec((tq, tk), lambda qi, ki: (qi, ki)),            # batch mask
        pl.BlockSpec((e_dim, tq, tk), lambda qi, ki: (0, qi, ki)),  # path_mean
        pl.BlockSpec((d, 3 * hd), lambda qi, ki: (0, 0)),           # fused Wqkv
        pl.BlockSpec((1, 3 * hd), lambda qi, ki: (0, 0)),           # fused bqkv
        pl.BlockSpec(memory_space=pltpu.MemorySpace.SMEM),          # we scalars
        pl.BlockSpec((hd, d), lambda qi, ki: (0, 0)),               # Wo^T
        pl.BlockSpec((d, d), lambda qi, ki: (0, 0)),                # Wff^T
        pl.BlockSpec((8, d), lambda qi, ki: (0, 0)),                # packed vectors
    ]
    out_specs = pl.BlockSpec((tq, out_lanes), lambda qi, ki: (qi, 0))

    scratch_shapes = [
        pltpu.VMEM((tq, hd), jnp.float32),             # per-head output accumulator
        pltpu.VMEM((num_heads, tq, 1), jnp.float32),   # running max (per head)
        pltpu.VMEM((num_heads, tq, 1), jnp.float32),   # running sum (per head)
    ]

    # Rough per-step VMEM budget (double-buffered streams + resident weights).
    def _pad(r, c, itemsize):
        return ((r + 7) // 8 * 8) * ((c + 127) // 128 * 128) * itemsize
    est = (2 * e_dim * _pad(tq, tk, 2)
           + 2 * 2 * _pad(tq, tk, 4)
           + 2 * (_pad(tq, d, 4) + _pad(tk, d, 4))
           + _pad(d, 3 * hd, 2) + _pad(1, 3 * hd, 4)
           + _pad(hd, d, 2) + _pad(d, d, 2) + _pad(8, d, 4)
           + 2 * _pad(tq, out_lanes, 4)
           + _pad(tq, hd, 4) + 2 * num_heads * _pad(tq, 1, 4))
    vmem_limit = int(min(64 * 2 ** 20, max(32 * 2 ** 20, 4 * est)))

    out = pl.pallas_call(
        _graphormer_layer_kernel,
        out_shape=jax.ShapeDtypeStruct((n, out_lanes), jnp.float32),
        grid=grid,
        in_specs=in_specs,
        out_specs=out_specs,
        scratch_shapes=scratch_shapes,
        compiler_params=pltpu.CompilerParams(
            dimension_semantics=("parallel", "arbitrary"),
            vmem_limit_bytes=vmem_limit),
    )(x, x, b, batch_mask, pmean_em, wqkv, bqkv, we, wo_t, wff_t, vecs)
    return out[:, :d]


def reference(x, bmat, mask, pmean, p):
    """Pure-f32 JAX mirror of the PyTorch forward (using precomputed pmean/mask)."""
    def ln(v, g, be):
        mu = v.mean(-1, keepdims=True)
        var = ((v - mu) ** 2).mean(-1, keepdims=True)
        return (v - mu) / jnp.sqrt(var + 1e-5) * g + be

    D = x.shape[1]
    xn = ln(x, p["ln1g"], p["ln1b"])
    heads = []
    for h in range(p["wq"].shape[0]):
        q = xn @ p["wq"][h].T + p["bq"][h]
        k = xn @ p["wk"][h].T + p["bk"][h]
        v = xn @ p["wv"][h].T + p["bv"][h]
        c = jnp.einsum("ije,e->ij", pmean, p["we"][h])
        a = (q @ k.T) / (D ** 0.5)
        a = (a + bmat + c) * mask
        heads.append(jax.nn.softmax(a, axis=-1) @ v)
    cat = jnp.concatenate(heads, axis=-1)
    x_prime = cat @ p["wo_full"].T + p["bo"] + x
    ff = ln(x_prime, p["ln2g"], p["ln2b"]) @ p["wff_w"].T + p["bff"]
    return ff + x_prime


if __name__ == "__main__":
    N, D, E_DIM, H = 8, 32, 16, 4      # nodes, node_dim, edge_dim, n_heads
    NUM_EDGES = 8

    key = jax.random.PRNGKey(0)
    keys = jax.random.split(key, 20)

    x = jax.random.normal(keys[0], (N, D), jnp.float32)
    edge_attr = jax.random.normal(keys[1], (NUM_EDGES, E_DIM), jnp.float32)
    b = jax.random.normal(keys[2], (N, N), jnp.float32) * 0.1

    # batch pointer: two graphs of 4 nodes each
    ptr = [0, 4, 8]
    # pairwise node paths expressed as lists of edge indices (python dict glue)
    edge_paths = {0: {1: [0], 2: [0, 1], 3: []},
                  1: {2: [1]},
                  2: {3: [2, 3]},
                  4: {5: [4], 6: [4, 5]},
                  5: {6: [5], 7: [5, 6]},
                  6: {7: [6]}}

    # --- host-side glue: dense batch mask + per-pair mean edge features ---
    batch_mask = np.zeros((N, N), np.float32)
    for i in range(len(ptr) - 1):
        batch_mask[ptr[i]:ptr[i + 1], ptr[i]:ptr[i + 1]] = 1.0
    ea_np = np.asarray(edge_attr)
    path_mean = np.zeros((N, N, E_DIM), np.float32)
    for src in edge_paths:
        for dst in edge_paths[src]:
            eids = edge_paths[src][dst]
            if len(eids) > 0:                      # empty path -> nan_to_num -> 0
                path_mean[src, dst] = ea_np[eids].mean(axis=0)
    batch_mask = jnp.asarray(batch_mask)
    path_mean = jnp.asarray(path_mean)

    # --- deterministic synthetic parameters (torch Linear convention: W[out,in]) ---
    def rnd(k, shape, s=0.2):
        return jax.random.normal(k, shape, jnp.float32) * s

    wo_full = rnd(keys[10], (D, H * D))
    wff_w = rnd(keys[16], (D, D))
    params = dict(
        wq=rnd(keys[3], (H, D, D)), bq=rnd(keys[4], (H, D)),
        wk=rnd(keys[5], (H, D, D)), bk=rnd(keys[6], (H, D)),
        wv=rnd(keys[7], (H, D, D)), bv=rnd(keys[8], (H, D)),
        we=rnd(keys[9], (H, E_DIM)),
        wo_full=wo_full,
        bo=rnd(keys[11], (1, D)),
        ln1g=rnd(keys[12], (1, D), 0.3) + 1.0, ln1b=rnd(keys[13], (1, D)),
        ln2g=rnd(keys[14], (1, D), 0.3) + 1.0, ln2b=rnd(keys[15], (1, D)),
        wff_w=wff_w, bff=rnd(keys[17], (1, D)),
    )

    out = graphormer_encoder_layer(x, b, batch_mask, path_mean, params)
    out = jax.block_until_ready(out)

    ref = reference(x, b, batch_mask, path_mean, params)
    assert out.shape == (N, D)
    out_np, ref_np = np.asarray(out), np.asarray(ref)
    assert np.all(np.isfinite(out_np))
    # bf16 MXU operands (per perf feedback) -> looser per-element tolerance vs
    # the pure-f32 reference, plus a global relative-error sanity check.
    assert np.allclose(out_np, ref_np, atol=1e-1, rtol=1e-1)
    rel = np.linalg.norm(out_np - ref_np) / np.linalg.norm(ref_np)
    assert rel < 5e-2
    print("KERNEL_OK")
</pallas_src>

<mosaic_0001>
module attributes {stable_mosaic.version = 11 : i64} {
  func.func @_graphormer_layer_kernel(%arg0: i32, %arg1: i32, %arg2: memref<8x32xf32, #tpu.memory_space<vmem>>, %arg3: memref<8x32xf32, #tpu.memory_space<vmem>>, %arg4: memref<8x8xf32, #tpu.memory_space<vmem>>, %arg5: memref<8x8xf32, #tpu.memory_space<vmem>>, %arg6: memref<16x8x8xbf16, #tpu.memory_space<vmem>>, %arg7: memref<32x384xbf16, #tpu.memory_space<vmem>>, %arg8: memref<1x384xf32, #tpu.memory_space<vmem>>, %arg9: memref<4x16xf32, #tpu.memory_space<smem>>, %arg10: memref<128x32xbf16, #tpu.memory_space<vmem>>, %arg11: memref<32x32xbf16, #tpu.memory_space<vmem>>, %arg12: memref<8x32xf32, #tpu.memory_space<vmem>>, %arg13: memref<8x128xf32, #tpu.memory_space<vmem>>, %arg14: memref<8x128xf32, #tpu.memory_space<vmem>>, %arg15: memref<4x8x1xf32, #tpu.memory_space<vmem>>, %arg16: memref<4x8x1xf32, #tpu.memory_space<vmem>>) attributes {dimension_semantics = [#tpu.dimension_semantics<parallel>, #tpu.dimension_semantics<arbitrary>], iteration_bounds = array<i64: 1, 1>, scalar_prefetch = 0 : i64, scratch_operands = 3 : i64, tpu.core_type = #tpu.core_type<tc>, window_params = [{transform_indices = @transform_0, window_bounds = array<i64: 8, 32>}, {transform_indices = @transform_1, window_bounds = array<i64: 8, 32>}, {transform_indices = @transform_2, window_bounds = array<i64: 8, 8>}, {transform_indices = @transform_3, window_bounds = array<i64: 8, 8>}, {transform_indices = @transform_4, window_bounds = array<i64: 16, 8, 8>}, {pipeline_mode = #tpu.pipeline_mode<synchronous>, transform_indices = @transform_5, window_bounds = array<i64: 32, 384>}, {pipeline_mode = #tpu.pipeline_mode<synchronous>, transform_indices = @transform_6, window_bounds = array<i64: 1, 384>}, {transform_indices = @transform_7, window_bounds = array<i64: 4, 16>}, {pipeline_mode = #tpu.pipeline_mode<synchronous>, transform_indices = @transform_8, window_bounds = array<i64: 128, 32>}, {pipeline_mode = #tpu.pipeline_mode<synchronous>, transform_indices = @transform_9, window_bounds = array<i64: 32, 32>}, {pipeline_mode = #tpu.pipeline_mode<synchronous>, transform_indices = @transform_10, window_bounds = array<i64: 8, 32>}, {transform_indices = @transform_11, window_bounds = array<i64: 8, 128>}]} {
    %c0 = arith.constant 0 : index
    %c0_0 = arith.constant 0 : index
    %0 = vector.load %arg12[%c0, %c0_0] : memref<8x32xf32, #tpu.memory_space<vmem>>, vector<1x32xf32>
    %c1 = arith.constant 1 : index
    %c0_1 = arith.constant 0 : index
    %1 = vector.load %arg12[%c1, %c0_1] : memref<8x32xf32, #tpu.memory_space<vmem>>, vector<1x32xf32>
    %c2 = arith.constant 2 : index
    %c0_2 = arith.constant 0 : index
    %2 = vector.load %arg12[%c2, %c0_2] : memref<8x32xf32, #tpu.memory_space<vmem>>, vector<1x32xf32>
    %c3 = arith.constant 3 : index
    %c0_3 = arith.constant 0 : index
    %3 = vector.load %arg12[%c3, %c0_3] : memref<8x32xf32, #tpu.memory_space<vmem>>, vector<1x32xf32>
    %c4 = arith.constant 4 : index
    %c0_4 = arith.constant 0 : index
    %4 = vector.load %arg12[%c4, %c0_4] : memref<8x32xf32, #tpu.memory_space<vmem>>, vector<1x32xf32>
    %c5 = arith.constant 5 : index
    %c0_5 = arith.constant 0 : index
    %5 = vector.load %arg12[%c5, %c0_5] : memref<8x32xf32, #tpu.memory_space<vmem>>, vector<1x32xf32>
    %c0_i32 = arith.constant 0 : i32
    %6 = arith.cmpi eq, %arg1, %c0_i32 : i32
    %7 = arith.extui %6 : i1 to i32
    %c0_i32_6 = arith.constant 0 : i32
    %8 = arith.cmpi ne, %7, %c0_i32_6 : i32
    scf.if %8 {
      %cst_426 = arith.constant 0xFF800000 : f32
      %680 = vector.broadcast %cst_426 : f32 to vector<4x8x1xf32>
      %c0_427 = arith.constant 0 : index
      %c0_428 = arith.constant 0 : index
      %c0_429 = arith.constant 0 : index
      %681 = vector.load %arg15[%c0_427, %c0_428, %c0_429] : memref<4x8x1xf32, #tpu.memory_space<vmem>>, vector<4x8x1xf32>
      tpu.vector_store %arg15[%c0_427, %c0_428, %c0_429], %680 {strides = array<i32>} : memref<4x8x1xf32, #tpu.memory_space<vmem>>, vector<4x8x1xf32>,
      %cst_430 = arith.constant 0.000000e+00 : f32
      %682 = vector.broadcast %cst_430 : f32 to vector<4x8x1xf32>
      %c0_431 = arith.constant 0 : index
      %c0_432 = arith.constant 0 : index
      %c0_433 = arith.constant 0 : index
      %683 = vector.load %arg16[%c0_431, %c0_432, %c0_433] : memref<4x8x1xf32, #tpu.memory_space<vmem>>, vector<4x8x1xf32>
      tpu.vector_store %arg16[%c0_431, %c0_432, %c0_433], %682 {strides = array<i32>} : memref<4x8x1xf32, #tpu.memory_space<vmem>>, vector<4x8x1xf32>,
      %cst_434 = arith.constant 0.000000e+00 : f32
      %684 = vector.broadcast %cst_434 : f32 to vector<8x128xf32>
      %c0_435 = arith.constant 0 : index
      %c0_436 = arith.constant 0 : index
      %685 = vector.load %arg14[%c0_435, %c0_436] : memref<8x128xf32, #tpu.memory_space<vmem>>, vector<8x128xf32>
      tpu.vector_store %arg14[%c0_435, %c0_436], %684 {strides = array<i32>} : memref<8x128xf32, #tpu.memory_space<vmem>>, vector<8x128xf32>,
    } else {
    }
    %c0_7 = arith.constant 0 : index
    %c0_8 = arith.constant 0 : index
    %9 = vector.load %arg2[%c0_7, %c0_8] : memref<8x32xf32, #tpu.memory_space<vmem>>, vector<8x32xf32>
    %cst = arith.constant dense<0.000000e+00> : vector<8xf32>
    %10 = vector.multi_reduction <add>, %9, %cst [1] : vector<8x32xf32> to vector<8xf32>
    %11 = vector.shape_cast %10 : vector<8xf32> to vector<8x1xf32>
    %cst_9 = arith.constant 3.200000e+01 : f32
    %12 = vector.broadcast %cst_9 : f32 to vector<8x1xf32>
    %13 = arith.divf %11, %12 : vector<8x1xf32>
    %14 = vector.broadcast %13 : vector<8x1xf32> to vector<8x32xf32>
    %15 = arith.subf %9, %14 : vector<8x32xf32>
    %16 = arith.mulf %15, %15 : vector<8x32xf32>
    %cst_10 = arith.constant dense<0.000000e+00> : vector<8xf32>
    %17 = vector.multi_reduction <add>, %16, %cst_10 [1] : vector<8x32xf32> to vector<8xf32>
    %18 = vector.shape_cast %17 : vector<8xf32> to vector<8x1xf32>
    %cst_11 = arith.constant 3.200000e+01 : f32
    %19 = vector.broadcast %cst_11 : f32 to vector<8x1xf32>
    %20 = arith.divf %18, %19 : vector<8x1xf32>
    %21 = vector.broadcast %13 : vector<8x1xf32> to vector<8x32xf32>
    %22 = arith.subf %9, %21 : vector<8x32xf32>
    %cst_12 = arith.constant 9.99999974E-6 : f32
    %23 = vector.broadcast %cst_12 : f32 to vector<8x1xf32>
    %24 = arith.addf %20, %23 : vector<8x1xf32>
    %25 = math.rsqrt %24 : vector<8x1xf32>
    %26 = vector.broadcast %25 : vector<8x1xf32> to vector<8x32xf32>
    %27 = arith.mulf %22, %26 : vector<8x32xf32>
    %28 = vector.broadcast %0 : vector<1x32xf32> to vector<8x32xf32>
    %29 = arith.mulf %27, %28 : vector<8x32xf32>
    %30 = vector.broadcast %1 : vector<1x32xf32> to vector<8x32xf32>
    %31 = arith.addf %29, %30 : vector<8x32xf32>
    %32 = arith.truncf %31 : vector<8x32xf32> to vector<8x32xbf16>
    %c0_13 = arith.constant 0 : index
    %c0_14 = arith.constant 0 : index
    %33 = vector.load %arg3[%c0_13, %c0_14] : memref<8x32xf32, #tpu.memory_space<vmem>>, vector<8x32xf32>
    %cst_15 = arith.constant dense<0.000000e+00> : vector<8xf32>
    %34 = vector.multi_reduction <add>, %33, %cst_15 [1] : vector<8x32xf32> to vector<8xf32>
    %35 = vector.shape_cast %34 : vector<8xf32> to vector<8x1xf32>
    %cst_16 = arith.constant 3.200000e+01 : f32
    %36 = vector.broadcast %cst_16 : f32 to vector<8x1xf32>
    %37 = arith.divf %35, %36 : vector<8x1xf32>
    %38 = vector.broadcast %37 : vector<8x1xf32> to vector<8x32xf32>
    %39 = arith.subf %33, %38 : vector<8x32xf32>
    %40 = arith.mulf %39, %39 : vector<8x32xf32>
    %cst_17 = arith.constant dense<0.000000e+00> : vector<8xf32>
    %41 = vector.multi_reduction <add>, %40, %cst_17 [1] : vector<8x32xf32> to vector<8xf32>
    %42 = vector.shape_cast %41 : vector<8xf32> to vector<8x1xf32>
    %cst_18 = arith.constant 3.200000e+01 : f32
    %43 = vector.broadcast %cst_18 : f32 to vector<8x1xf32>
    %44 = arith.divf %42, %43 : vector<8x1xf32>
    %45 = vector.broadcast %37 : vector<8x1xf32> to vector<8x32xf32>
    %46 = arith.subf %33, %45 : vector<8x32xf32>
    %cst_19 = arith.constant 9.99999974E-6 : f32
    %47 = vector.broadcast %cst_19 : f32 to vector<8x1xf32>
    %48 = arith.addf %44, %47 : vector<8x1xf32>
    %49 = math.rsqrt %48 : vector<8x1xf32>
    %50 = vector.broadcast %49 : vector<8x1xf32> to vector<8x32xf32>
    %51 = arith.mulf %46, %50 : vector<8x32xf32>
    %52 = vector.broadcast %0 : vector<1x32xf32> to vector<8x32xf32>
    %53 = arith.mulf %51, %52 : vector<8x32xf32>
    %54 = vector.broadcast %1 : vector<1x32xf32> to vector<8x32xf32>
    %55 = arith.addf %53, %54 : vector<8x32xf32>
    %56 = arith.truncf %55 : vector<8x32xf32> to vector<8x32xbf16>
    %c0_20 = arith.constant 0 : index
    %c0_21 = arith.constant 0 : index
    %57 = vector.load %arg7[%c0_20, %c0_21] : memref<32x384xbf16, #tpu.memory_space<vmem>>, vector<32x128xbf16>
    %cst_22 = arith.constant dense<0.000000e+00> : vector<8x128xf32>
    %58 = tpu.matmul %32, %57, %cst_22 {dimension_numbers = #tpu.dot_dimension_numbers<[1], [0], [0], [1], [0, 0, 1, 1], [], []>} : vector<8x32xbf16>, vector<32x128xbf16>, vector<8x128xf32> -> vector<8x128xf32>
    %c0_23 = arith.constant 0 : index
    %c0_24 = arith.constant 0 : index
    %59 = vector.load %arg8[%c0_23, %c0_24] : memref<1x384xf32, #tpu.memory_space<vmem>>, vector<1x128xf32>
    %60 = vector.broadcast %59 : vector<1x128xf32> to vector<8x128xf32>
    %61 = arith.addf %58, %60 : vector<8x128xf32>
    %c0_25 = arith.constant 0 : index
    %c128 = arith.constant 128 : index
    %62 = vector.load %arg7[%c0_25, %c128] : memref<32x384xbf16, #tpu.memory_space<vmem>>, vector<32x256xbf16>
    %cst_26 = arith.constant dense<0.000000e+00> : vector<8x256xf32>
    %63 = tpu.matmul %56, %62, %cst_26 {dimension_numbers = #tpu.dot_dimension_numbers<[1], [0], [0], [1], [0, 0, 1, 1], [], []>} : vector<8x32xbf16>, vector<32x256xbf16>, vector<8x256xf32> -> vector<8x256xf32>
    %c0_27 = arith.constant 0 : index
    %c128_28 = arith.constant 128 : index
    %64 = vector.load %arg8[%c0_27, %c128_28] : memref<1x384xf32, #tpu.memory_space<vmem>>, vector<1x256xf32>
    %65 = vector.broadcast %64 : vector<1x256xf32> to vector<8x256xf32>
    %66 = arith.addf %63, %65 : vector<8x256xf32>
    %c0_29 = arith.constant 0 : index
    %c0_30 = arith.constant 0 : index
    %67 = vector.load %arg4[%c0_29, %c0_30] : memref<8x8xf32, #tpu.memory_space<vmem>>, vector<8x8xf32>
    %c0_31 = arith.constant 0 : index
    %c0_32 = arith.constant 0 : index
    %68 = vector.load %arg5[%c0_31, %c0_32] : memref<8x8xf32, #tpu.memory_space<vmem>>, vector<8x8xf32>
    %69 = vector.extract_strided_slice %61 {offsets = [0, 0], sizes = [8, 32], strides = [1, 1]} : vector<8x128xf32> to vector<8x32xf32>
    %70 = arith.truncf %69 : vector<8x32xf32> to vector<8x32xbf16>
    %71 = vector.extract_strided_slice %66 {offsets = [0, 0], sizes = [8, 32], strides = [1, 1]} : vector<8x256xf32> to vector<8x32xf32>
    %72 = arith.truncf %71 : vector<8x32xf32> to vector<8x32xbf16>
    %73 = vector.extract_strided_slice %66 {offsets = [0, 128], sizes = [8, 32], strides = [1, 1]} : vector<8x256xf32> to vector<8x32xf32>
    %74 = arith.truncf %73 : vector<8x32xf32> to vector<8x32xbf16>
    %cst_33 = arith.constant dense<0.000000e+00> : vector<8x8xf32>
    %75 = tpu.matmul %70, %72, %cst_33 {dimension_numbers = #tpu.dot_dimension_numbers<[1], [1], [0], [0], [0, 0, 1, 0], [], []>} : vector<8x32xbf16>, vector<8x32xbf16>, vector<8x8xf32> -> vector<8x8xf32>
    %cst_34 = arith.constant 0.176776692 : f32
    %76 = vector.broadcast %cst_34 : f32 to vector<8x8xf32>
    %77 = arith.mulf %75, %76 : vector<8x8xf32>
    %78 = arith.addf %77, %67 : vector<8x8xf32>
    %c0_35 = arith.constant 0 : index
    %c0_36 = arith.constant 0 : index
    %79 = memref.load %arg9[%c0_35, %c0_36] : memref<4x16xf32, #tpu.memory_space<smem>>
    %c0_37 = arith.constant 0 : index
    %c0_38 = arith.constant 0 : index
    %c0_39 = arith.constant 0 : index
    %80 = vector.load %arg6[%c0_37, %c0_38, %c0_39] : memref<16x8x8xbf16, #tpu.memory_space<vmem>>, vector<1x8x8xbf16>
    %81 = vector.shape_cast %80 : vector<1x8x8xbf16> to vector<8x8xbf16>
    %82 = arith.extf %81 : vector<8x8xbf16> to vector<8x8xf32>
    %83 = vector.broadcast %79 : f32 to vector<8x8xf32>
    %84 = arith.mulf %83, %82 : vector<8x8xf32>
    %85 = arith.addf %78, %84 : vector<8x8xf32>
    %c0_40 = arith.constant 0 : index
    %c1_41 = arith.constant 1 : index
    %86 = memref.load %arg9[%c0_40, %c1_41] : memref<4x16xf32, #tpu.memory_space<smem>>
    %c1_42 = arith.constant 1 : index
    %c0_43 = arith.constant 0 : index
    %c0_44 = arith.constant 0 : index
    %87 = vector.load %arg6[%c1_42, %c0_43, %c0_44] : memref<16x8x8xbf16, #tpu.memory_space<vmem>>, vector<1x8x8xbf16>
    %88 = vector.shape_cast %87 : vector<1x8x8xbf16> to vector<8x8xbf16>
    %89 = arith.extf %88 : vector<8x8xbf16> to vector<8x8xf32>
    %90 = vector.broadcast %86 : f32 to vector<8x8xf32>
    %91 = arith.mulf %90, %89 : vector<8x8xf32>
    %92 = arith.addf %85, %91 : vector<8x8xf32>
    %c0_45 = arith.constant 0 : index
    %c2_46 = arith.constant 2 : index
    %93 = memref.load %arg9[%c0_45, %c2_46] : memref<4x16xf32, #tpu.memory_space<smem>>
    %c2_47 = arith.constant 2 : index
    %c0_48 = arith.constant 0 : index
    %c0_49 = arith.constant 0 : index
    %94 = vector.load %arg6[%c2_47, %c0_48, %c0_49] : memref<16x8x8xbf16, #tpu.memory_space<vmem>>, vector<1x8x8xbf16>
    %95 = vector.shape_cast %94 : vector<1x8x8xbf16> to vector<8x8xbf16>
    %96 = arith.extf %95 : vector<8x8xbf16> to vector<8x8xf32>
    %97 = vector.broadcast %93 : f32 to vector<8x8xf32>
    %98 = arith.mulf %97, %96 : vector<8x8xf32>
    %99 = arith.addf %92, %98 : vector<8x8xf32>
    %c0_50 = arith.constant 0 : index
    %c3_51 = arith.constant 3 : index
    %100 = memref.load %arg9[%c0_50, %c3_51] : memref<4x16xf32, #tpu.memory_space<smem>>
    %c3_52 = arith.constant 3 : index
    %c0_53 = arith.constant 0 : index
    %c0_54 = arith.constant 0 : index
    %101 = vector.load %arg6[%c3_52, %c0_53, %c0_54] : memref<16x8x8xbf16, #tpu.memory_space<vmem>>, vector<1x8x8xbf16>
    %102 = vector.shape_cast %101 : vector<1x8x8xbf16> to vector<8x8xbf16>
    %103 = arith.extf %102 : vector<8x8xbf16> to vector<8x8xf32>
    %104 = vector.broadcast %100 : f32 to vector<8x8xf32>
    %105 = arith.mulf %104, %103 : vector<8x8xf32>
    %106 = arith.addf %99, %105 : vector<8x8xf32>
    %c0_55 = arith.constant 0 : index
    %c4_56 = arith.constant 4 : index
    %107 = memref.load %arg9[%c0_55, %c4_56] : memref<4x16xf32, #tpu.memory_space<smem>>
    %c4_57 = arith.constant 4 : index
    %c0_58 = arith.constant 0 : index
    %c0_59 = arith.constant 0 : index
    %108 = vector.load %arg6[%c4_57, %c0_58, %c0_59] : memref<16x8x8xbf16, #tpu.memory_space<vmem>>, vector<1x8x8xbf16>
    %109 = vector.shape_cast %108 : vector<1x8x8xbf16> to vector<8x8xbf16>
    %110 = arith.extf %109 : vector<8x8xbf16> to vector<8x8xf32>
    %111 = vector.broadcast %107 : f32 to vector<8x8xf32>
    %112 = arith.mulf %111, %110 : vector<8x8xf32>
    %113 = arith.addf %106, %112 : vector<8x8xf32>
    %c0_60 = arith.constant 0 : index
    %c5_61 = arith.constant 5 : index
    %114 = memref.load %arg9[%c0_60, %c5_61] : memref<4x16xf32, #tpu.memory_space<smem>>
    %c5_62 = arith.constant 5 : index
    %c0_63 = arith.constant 0 : index
    %c0_64 = arith.constant 0 : index
    %115 = vector.load %arg6[%c5_62, %c0_63, %c0_64] : memref<16x8x8xbf16, #tpu.memory_space<vmem>>, vector<1x8x8xbf16>
    %116 = vector.shape_cast %115 : vector<1x8x8xbf16> to vector<8x8xbf16>
    %117 = arith.extf %116 : vector<8x8xbf16> to vector<8x8xf32>
    %118 = vector.broadcast %114 : f32 to vector<8x8xf32>
    %119 = arith.mulf %118, %117 : vector<8x8xf32>
    %120 = arith.addf %113, %119 : vector<8x8xf32>
    %c0_65 = arith.constant 0 : index
    %c6 = arith.constant 6 : index
    %121 = memref.load %arg9[%c0_65, %c6] : memref<4x16xf32, #tpu.memory_space<smem>>
    %c6_66 = arith.constant 6 : index
    %c0_67 = arith.constant 0 : index
    %c0_68 = arith.constant 0 : index
    %122 = vector.load %arg6[%c6_66, %c0_67, %c0_68] : memref<16x8x8xbf16, #tpu.memory_space<vmem>>, vector<1x8x8xbf16>
    %123 = vector.shape_cast %122 : vector<1x8x8xbf16> to vector<8x8xbf16>
    %124 = arith.extf %123 : vector<8x8xbf16> to vector<8x8xf32>
    %125 = vector.broadcast %121 : f32 to vector<8x8xf32>
    %126 = arith.mulf %125, %124 : vector<8x8xf32>
    %127 = arith.addf %120, %126 : vector<8x8xf32>
    %c0_69 = arith.constant 0 : index
    %c7 = arith.constant 7 : index
    %128 = memref.load %arg9[%c0_69, %c7] : memref<4x16xf32, #tpu.memory_space<smem>>
    %c7_70 = arith.constant 7 : index
    %c0_71 = arith.constant 0 : index
    %c0_72 = arith.constant 0 : index
    %129 = vector.load %arg6[%c7_70, %c0_71, %c0_72] : memref<16x8x8xbf16, #tpu.memory_space<vmem>>, vector<1x8x8xbf16>
    %130 = vector.shape_cast %129 : vector<1x8x8xbf16> to vector<8x8xbf16>
    %131 = arith.extf %130 : vector<8x8xbf16> to vector<8x8xf32>
    %132 = vector.broadcast %128 : f32 to vector<8x8xf32>
    %133 = arith.mulf %132, %131 : vector<8x8xf32>
    %134 = arith.addf %127, %133 : vector<8x8xf32>
    %c0_73 = arith.constant 0 : index
    %c8 = arith.constant 8 : index
    %135 = memref.load %arg9[%c0_73, %c8] : memref<4x16xf32, #tpu.memory_space<smem>>
    %c8_74 = arith.constant 8 : index
    %c0_75 = arith.constant 0 : index
    %c0_76 = arith.constant 0 : index
    %136 = vector.load %arg6[%c8_74, %c0_75, %c0_76] : memref<16x8x8xbf16, #tpu.memory_space<vmem>>, vector<1x8x8xbf16>
    %137 = vector.shape_cast %136 : vector<1x8x8xbf16> to vector<8x8xbf16>
    %138 = arith.extf %137 : vector<8x8xbf16> to vector<8x8xf32>
    %139 = vector.broadcast %135 : f32 to vector<8x8xf32>
    %140 = arith.mulf %139, %138 : vector<8x8xf32>
    %141 = arith.addf %134, %140 : vector<8x8xf32>
    %c0_77 = arith.constant 0 : index
    %c9 = arith.constant 9 : index
    %142 = memref.load %arg9[%c0_77, %c9] : memref<4x16xf32, #tpu.memory_space<smem>>
    %c9_78 = arith.constant 9 : index
    %c0_79 = arith.constant 0 : index
    %c0_80 = arith.constant 0 : index
    %143 = vector.load %arg6[%c9_78, %c0_79, %c0_80] : memref<16x8x8xbf16, #tpu.memory_space<vmem>>, vector<1x8x8xbf16>
    %144 = vector.shape_cast %143 : vector<1x8x8xbf16> to vector<8x8xbf16>
    %145 = arith.extf %144 : vector<8x8xbf16> to vector<8x8xf32>
    %146 = vector.broadcast %142 : f32 to vector<8x8xf32>
    %147 = arith.mulf %146, %145 : vector<8x8xf32>
    %148 = arith.addf %141, %147 : vector<8x8xf32>
    %c0_81 = arith.constant 0 : index
    %c10 = arith.constant 10 : index
    %149 = memref.load %arg9[%c0_81, %c10] : memref<4x16xf32, #tpu.memory_space<smem>>
    %c10_82 = arith.constant 10 : index
    %c0_83 = arith.constant 0 : index
    %c0_84 = arith.constant 0 : index
    %150 = vector.load %arg6[%c10_82, %c0_83, %c0_84] : memref<16x8x8xbf16, #tpu.memory_space<vmem>>, vector<1x8x8xbf16>
    %151 = vector.shape_cast %150 : vector<1x8x8xbf16> to vector<8x8xbf16>
    %152 = arith.extf %151 : vector<8x8xbf16> to vector<8x8xf32>
    %153 = vector.broadcast %149 : f32 to vector<8x8xf32>
    %154 = arith.mulf %153, %152 : vector<8x8xf32>
    %155 = arith.addf %148, %154 : vector<8x8xf32>
    %c0_85 = arith.constant 0 : index
    %c11 = arith.constant 11 : index
    %156 = memref.load %arg9[%c0_85, %c11] : memref<4x16xf32, #tpu.memory_space<smem>>
    %c11_86 = arith.constant 11 : index
    %c0_87 = arith.constant 0 : index
    %c0_88 = arith.constant 0 : index
    %157 = vector.load %arg6[%c11_86, %c0_87, %c0_88] : memref<16x8x8xbf16, #tpu.memory_space<vmem>>, vector<1x8x8xbf16>
    %158 = vector.shape_cast %157 : vector<1x8x8xbf16> to vector<8x8xbf16>
    %159 = arith.extf %158 : vector<8x8xbf16> to vector<8x8xf32>
    %160 = vector.broadcast %156 : f32 to vector<8x8xf32>
    %161 = arith.mulf %160, %159 : vector<8x8xf32>
    %162 = arith.addf %155, %161 : vector<8x8xf32>
    %c0_89 = arith.constant 0 : index
    %c12 = arith.constant 12 : index
    %163 = memref.load %arg9[%c0_89, %c12] : memref<4x16xf32, #tpu.memory_space<smem>>
    %c12_90 = arith.constant 12 : index
    %c0_91 = arith.constant 0 : index
    %c0_92 = arith.constant 0 : index
    %164 = vector.load %arg6[%c12_90, %c0_91, %c0_92] : memref<16x8x8xbf16, #tpu.memory_space<vmem>>, vector<1x8x8xbf16>
    %165 = vector.shape_cast %164 : vector<1x8x8xbf16> to vector<8x8xbf16>
    %166 = arith.extf %165 : vector<8x8xbf16> to vector<8x8xf32>
    %167 = vector.broadcast %163 : f32 to vector<8x8xf32>
    %168 = arith.mulf %167, %166 : vector<8x8xf32>
    %169 = arith.addf %162, %168 : vector<8x8xf32>
    %c0_93 = arith.constant 0 : index
    %c13 = arith.constant 13 : index
    %170 = memref.load %arg9[%c0_93, %c13] : memref<4x16xf32, #tpu.memory_space<smem>>
    %c13_94 = arith.constant 13 : index
    %c0_95 = arith.constant 0 : index
    %c0_96 = arith.constant 0 : index
    %171 = vector.load %arg6[%c13_94, %c0_95, %c0_96] : memref<16x8x8xbf16, #tpu.memory_space<vmem>>, vector<1x8x8xbf16>
    %172 = vector.shape_cast %171 : vector<1x8x8xbf16> to vector<8x8xbf16>
    %173 = arith.extf %172 : vector<8x8xbf16> to vector<8x8xf32>
    %174 = vector.broadcast %170 : f32 to vector<8x8xf32>
    %175 = arith.mulf %174, %173 : vector<8x8xf32>
    %176 = arith.addf %169, %175 : vector<8x8xf32>
    %c0_97 = arith.constant 0 : index
    %c14 = arith.constant 14 : index
    %177 = memref.load %arg9[%c0_97, %c14] : memref<4x16xf32, #tpu.memory_space<smem>>
    %c14_98 = arith.constant 14 : index
    %c0_99 = arith.constant 0 : index
    %c0_100 = arith.constant 0 : index
    %178 = vector.load %arg6[%c14_98, %c0_99, %c0_100] : memref<16x8x8xbf16, #tpu.memory_space<vmem>>, vector<1x8x8xbf16>
    %179 = vector.shape_cast %178 : vector<1x8x8xbf16> to vector<8x8xbf16>
    %180 = arith.extf %179 : vector<8x8xbf16> to vector<8x8xf32>
    %181 = vector.broadcast %177 : f32 to vector<8x8xf32>
    %182 = arith.mulf %181, %180 : vector<8x8xf32>
    %183 = arith.addf %176, %182 : vector<8x8xf32>
    %c0_101 = arith.constant 0 : index
    %c15 = arith.constant 15 : index
    %184 = memref.load %arg9[%c0_101, %c15] : memref<4x16xf32, #tpu.memory_space<smem>>
    %c15_102 = arith.constant 15 : index
    %c0_103 = arith.constant 0 : index
    %c0_104 = arith.constant 0 : index
    %185 = vector.load %arg6[%c15_102, %c0_103, %c0_104] : memref<16x8x8xbf16, #tpu.memory_space<vmem>>, vector<1x8x8xbf16>
    %186 = vector.shape_cast %185 : vector<1x8x8xbf16> to vector<8x8xbf16>
    %187 = arith.extf %186 : vector<8x8xbf16> to vector<8x8xf32>
    %188 = vector.broadcast %184 : f32 to vector<8x8xf32>
    %189 = arith.mulf %188, %187 : vector<8x8xf32>
    %190 = arith.addf %183, %189 : vector<8x8xf32>
    %191 = arith.mulf %190, %68 : vector<8x8xf32>
    %c0_105 = arith.constant 0 : index
    %c0_106 = arith.constant 0 : index
    %c0_107 = arith.constant 0 : index
    %192 = vector.load %arg15[%c0_105, %c0_106, %c0_107] : memref<4x8x1xf32, #tpu.memory_space<vmem>>, vector<1x8x1xf32>
    %193 = vector.shape_cast %192 : vector<1x8x1xf32> to vector<8x1xf32>
    %cst_108 = arith.constant dense<0xFF800000> : vector<8xf32>
    %194 = vector.multi_reduction <maximumf>, %191, %cst_108 [1] : vector<8x8xf32> to vector<8xf32>
    %195 = vector.shape_cast %194 : vector<8xf32> to vector<8x1xf32>
    %196 = arith.maximumf %193, %195 : vector<8x1xf32>
    %197 = arith.subf %193, %196 : vector<8x1xf32>
    %198 = math.exp %197 : vector<8x1xf32>
    %199 = vector.broadcast %196 : vector<8x1xf32> to vector<8x8xf32>
    %200 = arith.subf %191, %199 : vector<8x8xf32>
    %201 = math.exp %200 : vector<8x8xf32>
    %c0_109 = arith.constant 0 : index
    %c0_110 = arith.constant 0 : index
    %c0_111 = arith.constant 0 : index
    %202 = vector.load %arg16[%c0_109, %c0_110, %c0_111] : memref<4x8x1xf32, #tpu.memory_space<vmem>>, vector<1x8x1xf32>
    %203 = vector.shape_cast %202 : vector<1x8x1xf32> to vector<8x1xf32>
    %204 = arith.mulf %198, %203 : vector<8x1xf32>
    %cst_112 = arith.constant dense<0.000000e+00> : vector<8xf32>
    %205 = vector.multi_reduction <add>, %201, %cst_112 [1] : vector<8x8xf32> to vector<8xf32>
    %206 = vector.shape_cast %205 : vector<8xf32> to vector<8x1xf32>
    %207 = arith.addf %204, %206 : vector<8x1xf32>
    %c0_113 = arith.constant 0 : index
    %c0_114 = arith.constant 0 : index
    %c0_115 = arith.constant 0 : index
    %208 = vector.load %arg16[%c0_113, %c0_114, %c0_115] : memref<4x8x1xf32, #tpu.memory_space<vmem>>, vector<1x8x1xf32>
    %209 = vector.shape_cast %208 : vector<1x8x1xf32> to vector<8x1xf32>
    %210 = vector.shape_cast %207 : vector<8x1xf32> to vector<1x8x1xf32>
    tpu.vector_store %arg16[%c0_113, %c0_114, %c0_115], %210 {strides = array<i32>} : memref<4x8x1xf32, #tpu.memory_space<vmem>>, vector<1x8x1xf32>,
    %c0_116 = arith.constant 0 : index
    %c0_117 = arith.constant 0 : index
    %c0_118 = arith.constant 0 : index
    %211 = vector.load %arg15[%c0_116, %c0_117, %c0_118] : memref<4x8x1xf32, #tpu.memory_space<vmem>>, vector<1x8x1xf32>
    %212 = vector.shape_cast %211 : vector<1x8x1xf32> to vector<8x1xf32>
    %213 = vector.shape_cast %196 : vector<8x1xf32> to vector<1x8x1xf32>
    tpu.vector_store %arg15[%c0_116, %c0_117, %c0_118], %213 {strides = array<i32>} : memref<4x8x1xf32, #tpu.memory_space<vmem>>, vector<1x8x1xf32>,
    %214 = arith.truncf %201 : vector<8x8xf32> to vector<8x8xbf16>
    %cst_119 = arith.constant dense<0.000000e+00> : vector<8x32xf32>
    %215 = tpu.matmul %214, %74, %cst_119 {dimension_numbers = #tpu.dot_dimension_numbers<[1], [0], [0], [1], [0, 0, 1, 1], [], []>} : vector<8x8xbf16>, vector<8x32xbf16>, vector<8x32xf32> -> vector<8x32xf32>
    %c0_120 = arith.constant 0 : index
    %c0_121 = arith.constant 0 : index
    %216 = vector.load %arg14[%c0_120, %c0_121] : memref<8x128xf32, #tpu.memory_space<vmem>>, vector<8x32xf32>
    %217 = vector.broadcast %198 : vector<8x1xf32> to vector<8x32xf32>
    %218 = arith.mulf %217, %216 : vector<8x32xf32>
    %219 = arith.addf %218, %215 : vector<8x32xf32>
    %c0_122 = arith.constant 0 : index
    %c0_123 = arith.constant 0 : index
    %220 = vector.load %arg14[%c0_122, %c0_123] : memref<8x128xf32, #tpu.memory_space<vmem>>, vector<8x32xf32>
    tpu.vector_store %arg14[%c0_122, %c0_123], %219 {strides = array<i32>} : memref<8x128xf32, #tpu.memory_space<vmem>>, vector<8x32xf32>,
    %221 = vector.extract_strided_slice %61 {offsets = [0, 32], sizes = [8, 32], strides = [1, 1]} : vector<8x128xf32> to vector<8x32xf32>
    %222 = arith.truncf %221 : vector<8x32xf32> to vector<8x32xbf16>
    %223 = vector.extract_strided_slice %66 {offsets = [0, 32], sizes = [8, 32], strides = [1, 1]} : vector<8x256xf32> to vector<8x32xf32>
    %224 = arith.truncf %223 : vector<8x32xf32> to vector<8x32xbf16>
    %225 = vector.extract_strided_slice %66 {offsets = [0, 160], sizes = [8, 32], strides = [1, 1]} : vector<8x256xf32> to vector<8x32xf32>
    %226 = arith.truncf %225 : vector<8x32xf32> to vector<8x32xbf16>
    %cst_124 = arith.constant dense<0.000000e+00> : vector<8x8xf32>
    %227 = tpu.matmul %222, %224, %cst_124 {dimension_numbers = #tpu.dot_dimension_numbers<[1], [1], [0], [0], [0, 0, 1, 0], [], []>} : vector<8x32xbf16>, vector<8x32xbf16>, vector<8x8xf32> -> vector<8x8xf32>
    %cst_125 = arith.constant 0.176776692 : f32
    %228 = vector.broadcast %cst_125 : f32 to vector<8x8xf32>
    %229 = arith.mulf %227, %228 : vector<8x8xf32>
    %230 = arith.addf %229, %67 : vector<8x8xf32>
    %c1_126 = arith.constant 1 : index
    %c0_127 = arith.constant 0 : index
    %231 = memref.load %arg9[%c1_126, %c0_127] : memref<4x16xf32, #tpu.memory_space<smem>>
    %c0_128 = arith.constant 0 : index
    %c0_129 = arith.constant 0 : index
    %c0_130 = arith.constant 0 : index
    %232 = vector.load %arg6[%c0_128, %c0_129, %c0_130] : memref<16x8x8xbf16, #tpu.memory_space<vmem>>, vector<1x8x8xbf16>
    %233 = vector.shape_cast %232 : vector<1x8x8xbf16> to vector<8x8xbf16>
    %234 = arith.extf %233 : vector<8x8xbf16> to vector<8x8xf32>
    %235 = vector.broadcast %231 : f32 to vector<8x8xf32>
    %236 = arith.mulf %235, %234 : vector<8x8xf32>
    %237 = arith.addf %230, %236 : vector<8x8xf32>
    %c1_131 = arith.constant 1 : index
    %c1_132 = arith.constant 1 : index
    %238 = memref.load %arg9[%c1_131, %c1_132] : memref<4x16xf32, #tpu.memory_space<smem>>
    %c1_133 = arith.constant 1 : index
    %c0_134 = arith.constant 0 : index
    %c0_135 = arith.constant 0 : index
    %239 = vector.load %arg6[%c1_133, %c0_134, %c0_135] : memref<16x8x8xbf16, #tpu.memory_space<vmem>>, vector<1x8x8xbf16>
    %240 = vector.shape_cast %239 : vector<1x8x8xbf16> to vector<8x8xbf16>
    %241 = arith.extf %240 : vector<8x8xbf16> to vector<8x8xf32>
    %242 = vector.broadcast %238 : f32 to vector<8x8xf32>
    %243 = arith.mulf %242, %241 : vector<8x8xf32>
    %244 = arith.addf %237, %243 : vector<8x8xf32>
    %c1_136 = arith.constant 1 : index
    %c2_137 = arith.constant 2 : index
    %245 = memref.load %arg9[%c1_136, %c2_137] : memref<4x16xf32, #tpu.memory_space<smem>>
    %c2_138 = arith.constant 2 : index
    %c0_139 = arith.constant 0 : index
    %c0_140 = arith.constant 0 : index
    %246 = vector.load %arg6[%c2_138, %c0_139, %c0_140] : memref<16x8x8xbf16, #tpu.memory_space<vmem>>, vector<1x8x8xbf16>
    %247 = vector.shape_cast %246 : vector<1x8x8xbf16> to vector<8x8xbf16>
    %248 = arith.extf %247 : vector<8x8xbf16> to vector<8x8xf32>
    %249 = vector.broadcast %245 : f32 to vector<8x8xf32>
    %250 = arith.mulf %249, %248 : vector<8x8xf32>
    %251 = arith.addf %244, %250 : vector<8x8xf32>
    %c1_141 = arith.constant 1 : index
    %c3_142 = arith.constant 3 : index
    %252 = memref.load %arg9[%c1_141, %c3_142] : memref<4x16xf32, #tpu.memory_space<smem>>
    %c3_143 = arith.constant 3 : index
    %c0_144 = arith.constant 0 : index
    %c0_145 = arith.constant 0 : index
    %253 = vector.load %arg6[%c3_143, %c0_144, %c0_145] : memref<16x8x8xbf16, #tpu.memory_space<vmem>>, vector<1x8x8xbf16>
    %254 = vector.shape_cast %253 : vector<1x8x8xbf16> to vector<8x8xbf16>
    %255 = arith.extf %254 : vector<8x8xbf16> to vector<8x8xf32>
    %256 = vector.broadcast %252 : f32 to vector<8x8xf32>
    %257 = arith.mulf %256, %255 : vector<8x8xf32>
    %258 = arith.addf %251, %257 : vector<8x8xf32>
    %c1_146 = arith.constant 1 : index
    %c4_147 = arith.constant 4 : index
    %259 = memref.load %arg9[%c1_146, %c4_147] : memref<4x16xf32, #tpu.memory_space<smem>>
    %c4_148 = arith.constant 4 : index
    %c0_149 = arith.constant 0 : index
    %c0_150 = arith.constant 0 : index
    %260 = vector.load %arg6[%c4_148, %c0_149, %c0_150] : memref<16x8x8xbf16, #tpu.memory_space<vmem>>, vector<1x8x8xbf16>
    %261 = vector.shape_cast %260 : vector<1x8x8xbf16> to vector<8x8xbf16>
    %262 = arith.extf %261 : vector<8x8xbf16> to vector<8x8xf32>
    %263 = vector.broadcast %259 : f32 to vector<8x8xf32>
    %264 = arith.mulf %263, %262 : vector<8x8xf32>
    %265 = arith.addf %258, %264 : vector<8x8xf32>
    %c1_151 = arith.constant 1 : index
    %c5_152 = arith.constant 5 : index
    %266 = memref.load %arg9[%c1_151, %c5_152] : memref<4x16xf32, #tpu.memory_space<smem>>
    %c5_153 = arith.constant 5 : index
    %c0_154 = arith.constant 0 : index
    %c0_155 = arith.constant 0 : index
    %267 = vector.load %arg6[%c5_153, %c0_154, %c0_155] : memref<16x8x8xbf16, #tpu.memory_space<vmem>>, vector<1x8x8xbf16>
    %268 = vector.shape_cast %267 : vector<1x8x8xbf16> to vector<8x8xbf16>
    %269 = arith.extf %268 : vector<8x8xbf16> to vector<8x8xf32>
    %270 = vector.broadcast %266 : f32 to vector<8x8xf32>
    %271 = arith.mulf %270, %269 : vector<8x8xf32>
    %272 = arith.addf %265, %271 : vector<8x8xf32>
    %c1_156 = arith.constant 1 : index
    %c6_157 = arith.constant 6 : index
    %273 = memref.load %arg9[%c1_156, %c6_157] : memref<4x16xf32, #tpu.memory_space<smem>>
    %c6_158 = arith.constant 6 : index
    %c0_159 = arith.constant 0 : index
    %c0_160 = arith.constant 0 : index
    %274 = vector.load %arg6[%c6_158, %c0_159, %c0_160] : memref<16x8x8xbf16, #tpu.memory_space<vmem>>, vector<1x8x8xbf16>
    %275 = vector.shape_cast %274 : vector<1x8x8xbf16> to vector<8x8xbf16>
    %276 = arith.extf %275 : vector<8x8xbf16> to vector<8x8xf32>
    %277 = vector.broadcast %273 : f32 to vector<8x8xf32>
    %278 = arith.mulf %277, %276 : vector<8x8xf32>
    %279 = arith.addf %272, %278 : vector<8x8xf32>
    %c1_161 = arith.constant 1 : index
    %c7_162 = arith.constant 7 : index
    %280 = memref.load %arg9[%c1_161, %c7_162] : memref<4x16xf32, #tpu.memory_space<smem>>
    %c7_163 = arith.constant 7 : index
    %c0_164 = arith.constant 0 : index
    %c0_165 = arith.constant 0 : index
    %281 = vector.load %arg6[%c7_163, %c0_164, %c0_165] : memref<16x8x8xbf16, #tpu.memory_space<vmem>>, vector<1x8x8xbf16>
    %282 = vector.shape_cast %281 : vector<1x8x8xbf16> to vector<8x8xbf16>
    %283 = arith.extf %282 : vector<8x8xbf16> to vector<8x8xf32>
    %284 = vector.broadcast %280 : f32 to vector<8x8xf32>
    %285 = arith.mulf %284, %283 : vector<8x8xf32>
    %286 = arith.addf %279, %285 : vector<8x8xf32>
    %c1_166 = arith.constant 1 : index
    %c8_167 = arith.constant 8 : index
    %287 = memref.load %arg9[%c1_166, %c8_167] : memref<4x16xf32, #tpu.memory_space<smem>>
    %c8_168 = arith.constant 8 : index
    %c0_169 = arith.constant 0 : index
    %c0_170 = arith.constant 0 : index
    %288 = vector.load %arg6[%c8_168, %c0_169, %c0_170] : memref<16x8x8xbf16, #tpu.memory_space<vmem>>, vector<1x8x8xbf16>
    %289 = vector.shape_cast %288 : vector<1x8x8xbf16> to vector<8x8xbf16>
    %290 = arith.extf %289 : vector<8x8xbf16> to vector<8x8xf32>
    %291 = vector.broadcast %287 : f32 to vector<8x8xf32>
    %292 = arith.mulf %291, %290 : vector<8x8xf32>
    %293 = arith.addf %286, %292 : vector<8x8xf32>
    %c1_171 = arith.constant 1 : index
    %c9_172 = arith.constant 9 : index
    %294 = memref.load %arg9[%c1_171, %c9_172] : memref<4x16xf32, #tpu.memory_space<smem>>
    %c9_173 = arith.constant 9 : index
    %c0_174 = arith.constant 0 : index
    %c0_175 = arith.constant 0 : index
    %295 = vector.load %arg6[%c9_173, %c0_174, %c0_175] : memref<16x8x8xbf16, #tpu.memory_space<vmem>>, vector<1x8x8xbf16>
    %296 = vector.shape_cast %295 : vector<1x8x8xbf16> to vector<8x8xbf16>
    %297 = arith.extf %296 : vector<8x8xbf16> to vector<8x8xf32>
    %298 = vector.broadcast %294 : f32 to vector<8x8xf32>
    %299 = arith.mulf %298, %297 : vector<8x8xf32>
    %300 = arith.addf %293, %299 : vector<8x8xf32>
    %c1_176 = arith.constant 1 : index
    %c10_177 = arith.constant 10 : index
    %301 = memref.load %arg9[%c1_176, %c10_177] : memref<4x16xf32, #tpu.memory_space<smem>>
    %c10_178 = arith.constant 10 : index
    %c0_179 = arith.constant 0 : index
    %c0_180 = arith.constant 0 : index
    %302 = vector.load %arg6[%c10_178, %c0_179, %c0_180] : memref<16x8x8xbf16, #tpu.memory_space<vmem>>, vector<1x8x8xbf16>
    %303 = vector.shape_cast %302 : vector<1x8x8xbf16> to vector<8x8xbf16>
    %304 = arith.extf %303 : vector<8x8xbf16> to vector<8x8xf32>
    %305 = vector.broadcast %301 : f32 to vector<8x8xf32>
    %306 = arith.mulf %305, %304 : vector<8x8xf32>
    %307 = arith.addf %300, %306 : vector<8x8xf32>
    %c1_181 = arith.constant 1 : index
    %c11_182 = arith.constant 11 : index
    %308 = memref.load %arg9[%c1_181, %c11_182] : memref<4x16xf32, #tpu.memory_space<smem>>
    %c11_183 = arith.constant 11 : index
    %c0_184 = arith.constant 0 : index
    %c0_185 = arith.constant 0 : index
    %309 = vector.load %arg6[%c11_183, %c0_184, %c0_185] : memref<16x8x8xbf16, #tpu.memory_space<vmem>>, vector<1x8x8xbf16>
    %310 = vector.shape_cast %309 : vector<1x8x8xbf16> to vector<8x8xbf16>
    %311 = arith.extf %310 : vector<8x8xbf16> to vector<8x8xf32>
    %312 = vector.broadcast %308 : f32 to vector<8x8xf32>
    %313 = arith.mulf %312, %311 : vector<8x8xf32>
    %314 = arith.addf %307, %313 : vector<8x8xf32>
    %c1_186 = arith.constant 1 : index
    %c12_187 = arith.constant 12 : index
    %315 = memref.load %arg9[%c1_186, %c12_187] : memref<4x16xf32, #tpu.memory_space<smem>>
    %c12_188 = arith.constant 12 : index
    %c0_189 = arith.constant 0 : index
    %c0_190 = arith.constant 0 : index
    %316 = vector.load %arg6[%c12_188, %c0_189, %c0_190] : memref<16x8x8xbf16, #tpu.memory_space<vmem>>, vector<1x8x8xbf16>
    %317 = vector.shape_cast %316 : vector<1x8x8xbf16> to vector<8x8xbf16>
    %318 = arith.extf %317 : vector<8x8xbf16> to vector<8x8xf32>
    %319 = vector.broadcast %315 : f32 to vector<8x8xf32>
    %320 = arith.mulf %319, %318 : vector<8x8xf32>
    %321 = arith.addf %314, %320 : vector<8x8xf32>
    %c1_191 = arith.constant 1 : index
    %c13_192 = arith.constant 13 : index
    %322 = memref.load %arg9[%c1_191, %c13_192] : memref<4x16xf32, #tpu.memory_space<smem>>
    %c13_193 = arith.constant 13 : index
    %c0_194 = arith.constant 0 : index
    %c0_195 = arith.constant 0 : index
    %323 = vector.load %arg6[%c13_193, %c0_194, %c0_195] : memref<16x8x8xbf16, #tpu.memory_space<vmem>>, vector<1x8x8xbf16>
    %324 = vector.shape_cast %323 : vector<1x8x8xbf16> to vector<8x8xbf16>
    %325 = arith.extf %324 : vector<8x8xbf16> to vector<8x8xf32>
    %326 = vector.broadcast %322 : f32 to vector<8x8xf32>
    %327 = arith.mulf %326, %325 : vector<8x8xf32>
    %328 = arith.addf %321, %327 : vector<8x8xf32>
    %c1_196 = arith.constant 1 : index
    %c14_197 = arith.constant 14 : index
    %329 = memref.load %arg9[%c1_196, %c14_197] : memref<4x16xf32, #tpu.memory_space<smem>>
    %c14_198 = arith.constant 14 : index
    %c0_199 = arith.constant 0 : index
    %c0_200 = arith.constant 0 : index
    %330 = vector.load %arg6[%c14_198, %c0_199, %c0_200] : memref<16x8x8xbf16, #tpu.memory_space<vmem>>, vector<1x8x8xbf16>
    %331 = vector.shape_cast %330 : vector<1x8x8xbf16> to vector<8x8xbf16>
    %332 = arith.extf %331 : vector<8x8xbf16> to vector<8x8xf32>
    %333 = vector.broadcast %329 : f32 to vector<8x8xf32>
    %334 = arith.mulf %333, %332 : vector<8x8xf32>
    %335 = arith.addf %328, %334 : vector<8x8xf32>
    %c1_201 = arith.constant 1 : index
    %c15_202 = arith.constant 15 : index
    %336 = memref.load %arg9[%c1_201, %c15_202] : memref<4x16xf32, #tpu.memory_space<smem>>
    %c15_203 = arith.constant 15 : index
    %c0_204 = arith.constant 0 : index
    %c0_205 = arith.constant 0 : index
    %337 = vector.load %arg6[%c15_203, %c0_204, %c0_205] : memref<16x8x8xbf16, #tpu.memory_space<vmem>>, vector<1x8x8xbf16>
    %338 = vector.shape_cast %337 : vector<1x8x8xbf16> to vector<8x8xbf16>
    %339 = arith.extf %338 : vector<8x8xbf16> to vector<8x8xf32>
    %340 = vector.broadcast %336 : f32 to vector<8x8xf32>
    %341 = arith.mulf %340, %339 : vector<8x8xf32>
    %342 = arith.addf %335, %341 : vector<8x8xf32>
    %343 = arith.mulf %342, %68 : vector<8x8xf32>
    %c1_206 = arith.constant 1 : index
    %c0_207 = arith.constant 0 : index
    %c0_208 = arith.constant 0 : index
    %344 = vector.load %arg15[%c1_206, %c0_207, %c0_208] : memref<4x8x1xf32, #tpu.memory_space<vmem>>, vector<1x8x1xf32>
    %345 = vector.shape_cast %344 : vector<1x8x1xf32> to vector<8x1xf32>
    %cst_209 = arith.constant dense<0xFF800000> : vector<8xf32>
    %346 = vector.multi_reduction <maximumf>, %343, %cst_209 [1] : vector<8x8xf32> to vector<8xf32>
    %347 = vector.shape_cast %346 : vector<8xf32> to vector<8x1xf32>
    %348 = arith.maximumf %345, %347 : vector<8x1xf32>
    %349 = arith.subf %345, %348 : vector<8x1xf32>
    %350 = math.exp %349 : vector<8x1xf32>
    %351 = vector.broadcast %348 : vector<8x1xf32> to vector<8x8xf32>
    %352 = arith.subf %343, %351 : vector<8x8xf32>
    %353 = math.exp %352 : vector<8x8xf32>
    %c1_210 = arith.constant 1 : index
    %c0_211 = arith.constant 0 : index
    %c0_212 = arith.constant 0 : index
    %354 = vector.load %arg16[%c1_210, %c0_211, %c0_212] : memref<4x8x1xf32, #tpu.memory_space<vmem>>, vector<1x8x1xf32>
    %355 = vector.shape_cast %354 : vector<1x8x1xf32> to vector<8x1xf32>
    %356 = arith.mulf %350, %355 : vector<8x1xf32>
    %cst_213 = arith.constant dense<0.000000e+00> : vector<8xf32>
    %357 = vector.multi_reduction <add>, %353, %cst_213 [1] : vector<8x8xf32> to vector<8xf32>
    %358 = vector.shape_cast %357 : vector<8xf32> to vector<8x1xf32>
    %359 = arith.addf %356, %358 : vector<8x1xf32>
    %c1_214 = arith.constant 1 : index
    %c0_215 = arith.constant 0 : index
    %c0_216 = arith.constant 0 : index
    %360 = vector.load %arg16[%c1_214, %c0_215, %c0_216] : memref<4x8x1xf32, #tpu.memory_space<vmem>>, vector<1x8x1xf32>
    %361 = vector.shape_cast %360 : vector<1x8x1xf32> to vector<8x1xf32>
    %362 = vector.shape_cast %359 : vector<8x1xf32> to vector<1x8x1xf32>
    tpu.vector_store %arg16[%c1_214, %c0_215, %c0_216], %362 {strides = array<i32>} : memref<4x8x1xf32, #tpu.memory_space<vmem>>, vector<1x8x1xf32>,
    %c1_217 = arith.constant 1 : index
    %c0_218 = arith.constant 0 : index
    %c0_219 = arith.constant 0 : index
    %363 = vector.load %arg15[%c1_217, %c0_218, %c0_219] : memref<4x8x1xf32, #tpu.memory_space<vmem>>, vector<1x8x1xf32>
    %364 = vector.shape_cast %363 : vector<1x8x1xf32> to vector<8x1xf32>
    %365 = vector.shape_cast %348 : vector<8x1xf32> to vector<1x8x1xf32>
    tpu.vector_store %arg15[%c1_217, %c0_218, %c0_219], %365 {strides = array<i32>} : memref<4x8x1xf32, #tpu.memory_space<vmem>>, vector<1x8x1xf32>,
    %366 = arith.truncf %353 : vector<8x8xf32> to vector<8x8xbf16>
    %cst_220 = arith.constant dense<0.000000e+00> : vector<8x32xf32>
    %367 = tpu.matmul %366, %226, %cst_220 {dimension_numbers = #tpu.dot_dimension_numbers<[1], [0], [0], [1], [0, 0, 1, 1], [], []>} : vector<8x8xbf16>, vector<8x32xbf16>, vector<8x32xf32> -> vector<8x32xf32>
    %c0_221 = arith.constant 0 : index
    %c32 = arith.constant 32 : index
    %368 = vector.load %arg14[%c0_221, %c32] : memref<8x128xf32, #tpu.memory_space<vmem>>, vector<8x32xf32>
    %369 = vector.broadcast %350 : vector<8x1xf32> to vector<8x32xf32>
    %370 = arith.mulf %369, %368 : vector<8x32xf32>
    %371 = arith.addf %370, %367 : vector<8x32xf32>
    %c0_222 = arith.constant 0 : index
    %c32_223 = arith.constant 32 : index
    %372 = vector.load %arg14[%c0_222, %c32_223] : memref<8x128xf32, #tpu.memory_space<vmem>>, vector<8x32xf32>
    tpu.vector_store %arg14[%c0_222, %c32_223], %371 {strides = array<i32>} : memref<8x128xf32, #tpu.memory_space<vmem>>, vector<8x32xf32>,
    %373 = vector.extract_strided_slice %61 {offsets = [0, 64], sizes = [8, 32], strides = [1, 1]} : vector<8x128xf32> to vector<8x32xf32>
    %374 = arith.truncf %373 : vector<8x32xf32> to vector<8x32xbf16>
    %375 = vector.extract_strided_slice %66 {offsets = [0, 64], sizes = [8, 32], strides = [1, 1]} : vector<8x256xf32> to vector<8x32xf32>
    %376 = arith.truncf %375 : vector<8x32xf32> to vector<8x32xbf16>
    %377 = vector.extract_strided_slice %66 {offsets = [0, 192], sizes = [8, 32], strides = [1, 1]} : vector<8x256xf32> to vector<8x32xf32>
    %378 = arith.truncf %377 : vector<8x32xf32> to vector<8x32xbf16>
    %cst_224 = arith.constant dense<0.000000e+00> : vector<8x8xf32>
    %379 = tpu.matmul %374, %376, %cst_224 {dimension_numbers = #tpu.dot_dimension_numbers<[1], [1], [0], [0], [0, 0, 1, 0], [], []>} : vector<8x32xbf16>, vector<8x32xbf16>, vector<8x8xf32> -> vector<8x8xf32>
    %cst_225 = arith.constant 0.176776692 : f32
    %380 = vector.broadcast %cst_225 : f32 to vector<8x8xf32>
    %381 = arith.mulf %379, %380 : vector<8x8xf32>
    %382 = arith.addf %381, %67 : vector<8x8xf32>
    %c2_226 = arith.constant 2 : index
    %c0_227 = arith.constant 0 : index
    %383 = memref.load %arg9[%c2_226, %c0_227] : memref<4x16xf32, #tpu.memory_space<smem>>
    %c0_228 = arith.constant 0 : index
    %c0_229 = arith.constant 0 : index
    %c0_230 = arith.constant 0 : index
    %384 = vector.load %arg6[%c0_228, %c0_229, %c0_230] : memref<16x8x8xbf16, #tpu.memory_space<vmem>>, vector<1x8x8xbf16>
    %385 = vector.shape_cast %384 : vector<1x8x8xbf16> to vector<8x8xbf16>
    %386 = arith.extf %385 : vector<8x8xbf16> to vector<8x8xf32>
    %387 = vector.broadcast %383 : f32 to vector<8x8xf32>
    %388 = arith.mulf %387, %386 : vector<8x8xf32>
    %389 = arith.addf %382, %388 : vector<8x8xf32>
    %c2_231 = arith.constant 2 : index
    %c1_232 = arith.constant 1 : index
    %390 = memref.load %arg9[%c2_231, %c1_232] : memref<4x16xf32, #tpu.memory_space<smem>>
    %c1_233 = arith.constant 1 : index
    %c0_234 = arith.constant 0 : index
    %c0_235 = arith.constant 0 : index
    %391 = vector.load %arg6[%c1_233, %c0_234, %c0_235] : memref<16x8x8xbf16, #tpu.memory_space<vmem>>, vector<1x8x8xbf16>
    %392 = vector.shape_cast %391 : vector<1x8x8xbf16> to vector<8x8xbf16>
    %393 = arith.extf %392 : vector<8x8xbf16> to vector<8x8xf32>
    %394 = vector.broadcast %390 : f32 to vector<8x8xf32>
    %395 = arith.mulf %394, %393 : vector<8x8xf32>
    %396 = arith.addf %389, %395 : vector<8x8xf32>
    %c2_236 = arith.constant 2 : index
    %c2_237 = arith.constant 2 : index
    %397 = memref.load %arg9[%c2_236, %c2_237] : memref<4x16xf32, #tpu.memory_space<smem>>
    %c2_238 = arith.constant 2 : index
    %c0_239 = arith.constant 0 : index
    %c0_240 = arith.constant 0 : index
    %398 = vector.load %arg6[%c2_238, %c0_239, %c0_240] : memref<16x8x8xbf16, #tpu.memory_space<vmem>>, vector<1x8x8xbf16>
    %399 = vector.shape_cast %398 : vector<1x8x8xbf16> to vector<8x8xbf16>
    %400 = arith.extf %399 : vector<8x8xbf16> to vector<8x8xf32>
    %401 = vector.broadcast %397 : f32 to vector<8x8xf32>
    %402 = arith.mulf %401, %400 : vector<8x8xf32>
    %403 = arith.addf %396, %402 : vector<8x8xf32>
    %c2_241 = arith.constant 2 : index
    %c3_242 = arith.constant 3 : index
    %404 = memref.load %arg9[%c2_241, %c3_242] : memref<4x16xf32, #tpu.memory_space<smem>>
    %c3_243 = arith.constant 3 : index
    %c0_244 = arith.constant 0 : index
    %c0_245 = arith.constant 0 : index
    %405 = vector.load %arg6[%c3_243, %c0_244, %c0_245] : memref<16x8x8xbf16, #tpu.memory_space<vmem>>, vector<1x8x8xbf16>
    %406 = vector.shape_cast %405 : vector<1x8x8xbf16> to vector<8x8xbf16>
    %407 = arith.extf %406 : vector<8x8xbf16> to vector<8x8xf32>
    %408 = vector.broadcast %404 : f32 to vector<8x8xf32>
    %409 = arith.mulf %408, %407 : vector<8x8xf32>
    %410 = arith.addf %403, %409 : vector<8x8xf32>
    %c2_246 = arith.constant 2 : index
    %c4_247 = arith.constant 4 : index
    %411 = memref.load %arg9[%c2_246, %c4_247] : memref<4x16xf32, #tpu.memory_space<smem>>
    %c4_248 = arith.constant 4 : index
    %c0_249 = arith.constant 0 : index
    %c0_250 = arith.constant 0 : index
    %412 = vector.load %arg6[%c4_248, %c0_249, %c0_250] : memref<16x8x8xbf16, #tpu.memory_space<vmem>>, vector<1x8x8xbf16>
    %413 = vector.shape_cast %412 : vector<1x8x8xbf16> to vector<8x8xbf16>
    %414 = arith.extf %413 : vector<8x8xbf16> to vector<8x8xf32>
    %415 = vector.broadcast %411 : f32 to vector<8x8xf32>
    %416 = arith.mulf %415, %414 : vector<8x8xf32>
    %417 = arith.addf %410, %416 : vector<8x8xf32>
    %c2_251 = arith.constant 2 : index
    %c5_252 = arith.constant 5 : index
    %418 = memref.load %arg9[%c2_251, %c5_252] : memref<4x16xf32, #tpu.memory_space<smem>>
    %c5_253 = arith.constant 5 : index
    %c0_254 = arith.constant 0 : index
    %c0_255 = arith.constant 0 : index
    %419 = vector.load %arg6[%c5_253, %c0_254, %c0_255] : memref<16x8x8xbf16, #tpu.memory_space<vmem>>, vector<1x8x8xbf16>
    %420 = vector.shape_cast %419 : vector<1x8x8xbf16> to vector<8x8xbf16>
    %421 = arith.extf %420 : vector<8x8xbf16> to vector<8x8xf32>
    %422 = vector.broadcast %418 : f32 to vector<8x8xf32>
    %423 = arith.mulf %422, %421 : vector<8x8xf32>
    %424 = arith.addf %417, %423 : vector<8x8xf32>
    %c2_256 = arith.constant 2 : index
    %c6_257 = arith.constant 6 : index
    %425 = memref.load %arg9[%c2_256, %c6_257] : memref<4x16xf32, #tpu.memory_space<smem>>
    %c6_258 = arith.constant 6 : index
    %c0_259 = arith.constant 0 : index
    %c0_260 = arith.constant 0 : index
    %426 = vector.load %arg6[%c6_258, %c0_259, %c0_260] : memref<16x8x8xbf16, #tpu.memory_space<vmem>>, vector<1x8x8xbf16>
    %427 = vector.shape_cast %426 : vector<1x8x8xbf16> to vector<8x8xbf16>
    %428 = arith.extf %427 : vector<8x8xbf16> to vector<8x8xf32>
    %429 = vector.broadcast %425 : f32 to vector<8x8xf32>
    %430 = arith.mulf %429, %428 : vector<8x8xf32>
    %431 = arith.addf %424, %430 : vector<8x8xf32>
    %c2_261 = arith.constant 2 : index
    %c7_262 = arith.constant 7 : index
    %432 = memref.load %arg9[%c2_261, %c7_262] : memref<4x16xf32, #tpu.memory_space<smem>>
    %c7_263 = arith.constant 7 : index
    %c0_264 = arith.constant 0 : index
    %c0_265 = arith.constant 0 : index
    %433 = vector.load %arg6[%c7_263, %c0_264, %c0_265] : memref<16x8x8xbf16, #tpu.memory_space<vmem>>, vector<1x8x8xbf16>
    %434 = vector.shape_cast %433 : vector<1x8x8xbf16> to vector<8x8xbf16>
    %435 = arith.extf %434 : vector<8x8xbf16> to vector<8x8xf32>
    %436 = vector.broadcast %432 : f32 to vector<8x8xf32>
    %437 = arith.mulf %436, %435 : vector<8x8xf32>
    %438 = arith.addf %431, %437 : vector<8x8xf32>
    %c2_266 = arith.constant 2 : index
    %c8_267 = arith.constant 8 : index
    %439 = memref.load %arg9[%c2_266, %c8_267] : memref<4x16xf32, #tpu.memory_space<smem>>
    %c8_268 = arith.constant 8 : index
    %c0_269 = arith.constant 0 : index
    %c0_270 = arith.constant 0 : index
    %440 = vector.load %arg6[%c8_268, %c0_269, %c0_270] : memref<16x8x8xbf16, #tpu.memory_space<vmem>>, vector<1x8x8xbf16>
    %441 = vector.shape_cast %440 : vector<1x8x8xbf16> to vector<8x8xbf16>
    %442 = arith.extf %441 : vector<8x8xbf16> to vector<8x8xf32>
    %443 = vector.broadcast %439 : f32 to vector<8x8xf32>
    %444 = arith.mulf %443, %442 : vector<8x8xf32>
    %445 = arith.addf %438, %444 : vector<8x8xf32>
    %c2_271 = arith.constant 2 : index
    %c9_272 = arith.constant 9 : index
    %446 = memref.load %arg9[%c2_271, %c9_272] : memref<4x16xf32, #tpu.memory_space<smem>>
    %c9_273 = arith.constant 9 : index
    %c0_274 = arith.constant 0 : index
    %c0_275 = arith.constant 0 : index
    %447 = vector.load %arg6[%c9_273, %c0_274, %c0_275] : memref<16x8x8xbf16, #tpu.memory_space<vmem>>, vector<1x8x8xbf16>
    %448 = vector.shape_cast %447 : vector<1x8x8xbf16> to vector<8x8xbf16>
    %449 = arith.extf %448 : vector<8x8xbf16> to vector<8x8xf32>
    %450 = vector.broadcast %446 : f32 to vector<8x8xf32>
    %451 = arith.mulf %450, %449 : vector<8x8xf32>
    %452 = arith.addf %445, %451 : vector<8x8xf32>
    %c2_276 = arith.constant 2 : index
    %c10_277 = arith.constant 10 : index
    %453 = memref.load %arg9[%c2_276, %c10_277] : memref<4x16xf32, #tpu.memory_space<smem>>
    %c10_278 = arith.constant 10 : index
    %c0_279 = arith.constant 0 : index
    %c0_280 = arith.constant 0 : index
    %454 = vector.load %arg6[%c10_278, %c0_279, %c0_280] : memref<16x8x8xbf16, #tpu.memory_space<vmem>>, vector<1x8x8xbf16>
    %455 = vector.shape_cast %454 : vector<1x8x8xbf16> to vector<8x8xbf16>
    %456 = arith.extf %455 : vector<8x8xbf16> to vector<8x8xf32>
    %457 = vector.broadcast %453 : f32 to vector<8x8xf32>
    %458 = arith.mulf %457, %456 : vector<8x8xf32>
    %459 = arith.addf %452, %458 : vector<8x8xf32>
    %c2_281 = arith.constant 2 : index
    %c11_282 = arith.constant 11 : index
    %460 = memref.load %arg9[%c2_281, %c11_282] : memref<4x16xf32, #tpu.memory_space<smem>>
    %c11_283 = arith.constant 11 : index
    %c0_284 = arith.constant 0 : index
    %c0_285 = arith.constant 0 : index
    %461 = vector.load %arg6[%c11_283, %c0_284, %c0_285] : memref<16x8x8xbf16, #tpu.memory_space<vmem>>, vector<1x8x8xbf16>
    %462 = vector.shape_cast %461 : vector<1x8x8xbf16> to vector<8x8xbf16>
    %463 = arith.extf %462 : vector<8x8xbf16> to vector<8x8xf32>
    %464 = vector.broadcast %460 : f32 to vector<8x8xf32>
    %465 = arith.mulf %464, %463 : vector<8x8xf32>
    %466 = arith.addf %459, %465 : vector<8x8xf32>
    %c2_286 = arith.constant 2 : index
    %c12_287 = arith.constant 12 : index
    %467 = memref.load %arg9[%c2_286, %c12_287] : memref<4x16xf32, #tpu.memory_space<smem>>
    %c12_288 = arith.constant 12 : index
    %c0_289 = arith.constant 0 : index
    %c0_290 = arith.constant 0 : index
    %468 = vector.load %arg6[%c12_288, %c0_289, %c0_290] : memref<16x8x8xbf16, #tpu.memory_space<vmem>>, vector<1x8x8xbf16>
    %469 = vector.shape_cast %468 : vector<1x8x8xbf16> to vector<8x8xbf16>
    %470 = arith.extf %469 : vector<8x8xbf16> to vector<8x8xf32>
    %471 = vector.broadcast %467 : f32 to vector<8x8xf32>
    %472 = arith.mulf %471, %470 : vector<8x8xf32>
    %473 = arith.addf %466, %472 : vector<8x8xf32>
    %c2_291 = arith.constant 2 : index
    %c13_292 = arith.constant 13 : index
    %474 = memref.load %arg9[%c2_291, %c13_292] : memref<4x16xf32, #tpu.memory_space<smem>>
    %c13_293 = arith.constant 13 : index
    %c0_294 = arith.constant 0 : index
    %c0_295 = arith.constant 0 : index
    %475 = vector.load %arg6[%c13_293, %c0_294, %c0_295] : memref<16x8x8xbf16, #tpu.memory_space<vmem>>, vector<1x8x8xbf16>
    %476 = vector.shape_cast %475 : vector<1x8x8xbf16> to vector<8x8xbf16>
    %477 = arith.extf %476 : vector<8x8xbf16> to vector<8x8xf32>
    %478 = vector.broadcast %474 : f32 to vector<8x8xf32>
    %479 = arith.mulf %478, %477 : vector<8x8xf32>
    %480 = arith.addf %473, %479 : vector<8x8xf32>
    %c2_296 = arith.constant 2 : index
    %c14_297 = arith.constant 14 : index
    %481 = memref.load %arg9[%c2_296, %c14_297] : memref<4x16xf32, #tpu.memory_space<smem>>
    %c14_298 = arith.constant 14 : index
    %c0_299 = arith.constant 0 : index
    %c0_300 = arith.constant 0 : index
    %482 = vector.load %arg6[%c14_298, %c0_299, %c0_300] : memref<16x8x8xbf16, #tpu.memory_space<vmem>>, vector<1x8x8xbf16>
    %483 = vector.shape_cast %482 : vector<1x8x8xbf16> to vector<8x8xbf16>
    %484 = arith.extf %483 : vector<8x8xbf16> to vector<8x8xf32>
    %485 = vector.broadcast %481 : f32 to vector<8x8xf32>
    %486 = arith.mulf %485, %484 : vector<8x8xf32>
    %487 = arith.addf %480, %486 : vector<8x8xf32>
    %c2_301 = arith.constant 2 : index
    %c15_302 = arith.constant 15 : index
    %488 = memref.load %arg9[%c2_301, %c15_302] : memref<4x16xf32, #tpu.memory_space<smem>>
    %c15_303 = arith.constant 15 : index
    %c0_304 = arith.constant 0 : index
    %c0_305 = arith.constant 0 : index
    %489 = vector.load %arg6[%c15_303, %c0_304, %c0_305] : memref<16x8x8xbf16, #tpu.memory_space<vmem>>, vector<1x8x8xbf16>
    %490 = vector.shape_cast %489 : vector<1x8x8xbf16> to vector<8x8xbf16>
    %491 = arith.extf %490 : vector<8x8xbf16> to vector<8x8xf32>
    %492 = vector.broadcast %488 : f32 to vector<8x8xf32>
    %493 = arith.mulf %492, %491 : vector<8x8xf32>
    %494 = arith.addf %487, %493 : vector<8x8xf32>
    %495 = arith.mulf %494, %68 : vector<8x8xf32>
    %c2_306 = arith.constant 2 : index
    %c0_307 = arith.constant 0 : index
    %c0_308 = arith.constant 0 : index
    %496 = vector.load %arg15[%c2_306, %c0_307, %c0_308] : memref<4x8x1xf32, #tpu.memory_space<vmem>>, vector<1x8x1xf32>
    %497 = vector.shape_cast %496 : vector<1x8x1xf32> to vector<8x1xf32>
    %cst_309 = arith.constant dense<0xFF800000> : vector<8xf32>
    %498 = vector.multi_reduction <maximumf>, %495, %cst_309 [1] : vector<8x8xf32> to vector<8xf32>
    %499 = vector.shape_cast %498 : vector<8xf32> to vector<8x1xf32>
    %500 = arith.maximumf %497, %499 : vector<8x1xf32>
    %501 = arith.subf %497, %500 : vector<8x1xf32>
    %502 = math.exp %501 : vector<8x1xf32>
    %503 = vector.broadcast %500 : vector<8x1xf32> to vector<8x8xf32>
    %504 = arith.subf %495, %503 : vector<8x8xf32>
    %505 = math.exp %504 : vector<8x8xf32>
    %c2_310 = arith.constant 2 : index
    %c0_311 = arith.constant 0 : index
    %c0_312 = arith.constant 0 : index
    %506 = vector.load %arg16[%c2_310, %c0_311, %c0_312] : memref<4x8x1xf32, #tpu.memory_space<vmem>>, vector<1x8x1xf32>
    %507 = vector.shape_cast %506 : vector<1x8x1xf32> to vector<8x1xf32>
    %508 = arith.mulf %502, %507 : vector<8x1xf32>
    %cst_313 = arith.constant dense<0.000000e+00> : vector<8xf32>
    %509 = vector.multi_reduction <add>, %505, %cst_313 [1] : vector<8x8xf32> to vector<8xf32>
    %510 = vector.shape_cast %509 : vector<8xf32> to vector<8x1xf32>
    %511 = arith.addf %508, %510 : vector<8x1xf32>
    %c2_314 = arith.constant 2 : index
    %c0_315 = arith.constant 0 : index
    %c0_316 = arith.constant 0 : index
    %512 = vector.load %arg16[%c2_314, %c0_315, %c0_316] : memref<4x8x1xf32, #tpu.memory_space<vmem>>, vector<1x8x1xf32>
    %513 = vector.shape_cast %512 : vector<1x8x1xf32> to vector<8x1xf32>
    %514 = vector.shape_cast %511 : vector<8x1xf32> to vector<1x8x1xf32>
    tpu.vector_store %arg16[%c2_314, %c0_315, %c0_316], %514 {strides = array<i32>} : memref<4x8x1xf32, #tpu.memory_space<vmem>>, vector<1x8x1xf32>,
    %c2_317 = arith.constant 2 : index
    %c0_318 = arith.constant 0 : index
    %c0_319 = arith.constant 0 : index
    %515 = vector.load %arg15[%c2_317, %c0_318, %c0_319] : memref<4x8x1xf32, #tpu.memory_space<vmem>>, vector<1x8x1xf32>
    %516 = vector.shape_cast %515 : vector<1x8x1xf32> to vector<8x1xf32>
    %517 = vector.shape_cast %500 : vector<8x1xf32> to vector<1x8x1xf32>
    tpu.vector_store %arg15[%c2_317, %c0_318, %c0_319], %517 {strides = array<i32>} : memref<4x8x1xf32, #tpu.memory_space<vmem>>, vector<1x8x1xf32>,
    %518 = arith.truncf %505 : vector<8x8xf32> to vector<8x8xbf16>
    %cst_320 = arith.constant dense<0.000000e+00> : vector<8x32xf32>
    %519 = tpu.matmul %518, %378, %cst_320 {dimension_numbers = #tpu.dot_dimension_numbers<[1], [0], [0], [1], [0, 0, 1, 1], [], []>} : vector<8x8xbf16>, vector<8x32xbf16>, vector<8x32xf32> -> vector<8x32xf32>
    %c0_321 = arith.constant 0 : index
    %c64 = arith.constant 64 : index
    %520 = vector.load %arg14[%c0_321, %c64] : memref<8x128xf32, #tpu.memory_space<vmem>>, vector<8x32xf32>
    %521 = vector.broadcast %502 : vector<8x1xf32> to vector<8x32xf32>
    %522 = arith.mulf %521, %520 : vector<8x32xf32>
    %523 = arith.addf %522, %519 : vector<8x32xf32>
    %c0_322 = arith.constant 0 : index
    %c64_323 = arith.constant 64 : index
    %524 = vector.load %arg14[%c0_322, %c64_323] : memref<8x128xf32, #tpu.memory_space<vmem>>, vector<8x32xf32>
    tpu.vector_store %arg14[%c0_322, %c64_323], %523 {strides = array<i32>} : memref<8x128xf32, #tpu.memory_space<vmem>>, vector<8x32xf32>,
    %525 = vector.extract_strided_slice %61 {offsets = [0, 96], sizes = [8, 32], strides = [1, 1]} : vector<8x128xf32> to vector<8x32xf32>
    %526 = arith.truncf %525 : vector<8x32xf32> to vector<8x32xbf16>
    %527 = vector.extract_strided_slice %66 {offsets = [0, 96], sizes = [8, 32], strides = [1, 1]} : vector<8x256xf32> to vector<8x32xf32>
    %528 = arith.truncf %527 : vector<8x32xf32> to vector<8x32xbf16>
    %529 = vector.extract_strided_slice %66 {offsets = [0, 224], sizes = [8, 32], strides = [1, 1]} : vector<8x256xf32> to vector<8x32xf32>
    %530 = arith.truncf %529 : vector<8x32xf32> to vector<8x32xbf16>
    %cst_324 = arith.constant dense<0.000000e+00> : vector<8x8xf32>
    %531 = tpu.matmul %526, %528, %cst_324 {dimension_numbers = #tpu.dot_dimension_numbers<[1], [1], [0], [0], [0, 0, 1, 0], [], []>} : vector<8x32xbf16>, vector<8x32xbf16>, vector<8x8xf32> -> vector<8x8xf32>
    %cst_325 = arith.constant 0.176776692 : f32
    %532 = vector.broadcast %cst_325 : f32 to vector<8x8xf32>
    %533 = arith.mulf %531, %532 : vector<8x8xf32>
    %534 = arith.addf %533, %67 : vector<8x8xf32>
    %c3_326 = arith.constant 3 : index
    %c0_327 = arith.constant 0 : index
    %535 = memref.load %arg9[%c3_326, %c0_327] : memref<4x16xf32, #tpu.memory_space<smem>>
    %c0_328 = arith.constant 0 : index
    %c0_329 = arith.constant 0 : index
    %c0_330 = arith.constant 0 : index
    %536 = vector.load %arg6[%c0_328, %c0_329, %c0_330] : memref<16x8x8xbf16, #tpu.memory_space<vmem>>, vector<1x8x8xbf16>
    %537 = vector.shape_cast %536 : vector<1x8x8xbf16> to vector<8x8xbf16>
    %538 = arith.extf %537 : vector<8x8xbf16> to vector<8x8xf32>
    %539 = vector.broadcast %535 : f32 to vector<8x8xf32>
    %540 = arith.mulf %539, %538 : vector<8x8xf32>
    %541 = arith.addf %534, %540 : vector<8x8xf32>
    %c3_331 = arith.constant 3 : index
    %c1_332 = arith.constant 1 : index
    %542 = memref.load %arg9[%c3_331, %c1_332] : memref<4x16xf32, #tpu.memory_space<smem>>
    %c1_333 = arith.constant 1 : index
    %c0_334 = arith.constant 0 : index
    %c0_335 = arith.constant 0 : index
    %543 = vector.load %arg6[%c1_333, %c0_334, %c0_335] : memref<16x8x8xbf16, #tpu.memory_space<vmem>>, vector<1x8x8xbf16>
    %544 = vector.shape_cast %543 : vector<1x8x8xbf16> to vector<8x8xbf16>
    %545 = arith.extf %544 : vector<8x8xbf16> to vector<8x8xf32>
    %546 = vector.broadcast %542 : f32 to vector<8x8xf32>
    %547 = arith.mulf %546, %545 : vector<8x8xf32>
    %548 = arith.addf %541, %547 : vector<8x8xf32>
    %c3_336 = arith.constant 3 : index
    %c2_337 = arith.constant 2 : index
    %549 = memref.load %arg9[%c3_336, %c2_337] : memref<4x16xf32, #tpu.memory_space<smem>>
    %c2_338 = arith.constant 2 : index
    %c0_339 = arith.constant 0 : index
    %c0_340 = arith.constant 0 : index
    %550 = vector.load %arg6[%c2_338, %c0_339, %c0_340] : memref<16x8x8xbf16, #tpu.memory_space<vmem>>, vector<1x8x8xbf16>
    %551 = vector.shape_cast %550 : vector<1x8x8xbf16> to vector<8x8xbf16>
    %552 = arith.extf %551 : vector<8x8xbf16> to vector<8x8xf32>
    %553 = vector.broadcast %549 : f32 to vector<8x8xf32>
    %554 = arith.mulf %553, %552 : vector<8x8xf32>
    %555 = arith.addf %548, %554 : vector<8x8xf32>
    %c3_341 = arith.constant 3 : index
    %c3_342 = arith.constant 3 : index
    %556 = memref.load %arg9[%c3_341, %c3_342] : memref<4x16xf32, #tpu.memory_space<smem>>
    %c3_343 = arith.constant 3 : index
    %c0_344 = arith.constant 0 : index
    %c0_345 = arith.constant 0 : index
    %557 = vector.load %arg6[%c3_343, %c0_344, %c0_345] : memref<16x8x8xbf16, #tpu.memory_space<vmem>>, vector<1x8x8xbf16>
    %558 = vector.shape_cast %557 : vector<1x8x8xbf16> to vector<8x8xbf16>
    %559 = arith.extf %558 : vector<8x8xbf16> to vector<8x8xf32>
    %560 = vector.broadcast %556 : f32 to vector<8x8xf32>
    %561 = arith.mulf %560, %559 : vector<8x8xf32>
    %562 = arith.addf %555, %561 : vector<8x8xf32>
    %c3_346 = arith.constant 3 : index
    %c4_347 = arith.constant 4 : index
    %563 = memref.load %arg9[%c3_346, %c4_347] : memref<4x16xf32, #tpu.memory_space<smem>>
    %c4_348 = arith.constant 4 : index
    %c0_349 = arith.constant 0 : index
    %c0_350 = arith.constant 0 : index
    %564 = vector.load %arg6[%c4_348, %c0_349, %c0_350] : memref<16x8x8xbf16, #tpu.memory_space<vmem>>, vector<1x8x8xbf16>
    %565 = vector.shape_cast %564 : vector<1x8x8xbf16> to vector<8x8xbf16>
    %566 = arith.extf %565 : vector<8x8xbf16> to vector<8x8xf32>
    %567 = vector.broadcast %563 : f32 to vector<8x8xf32>
    %568 = arith.mulf %567, %566 : vector<8x8xf32>
    %569 = arith.addf %562, %568 : vector<8x8xf32>
    %c3_351 = arith.constant 3 : index
    %c5_352 = arith.constant 5 : index
    %570 = memref.load %arg9[%c3_351, %c5_352] : memref<4x16xf32, #tpu.memory_space<smem>>
    %c5_353 = arith.constant 5 : index
    %c0_354 = arith.constant 0 : index
    %c0_355 = arith.constant 0 : index
    %571 = vector.load %arg6[%c5_353, %c0_354, %c0_355] : memref<16x8x8xbf16, #tpu.memory_space<vmem>>, vector<1x8x8xbf16>
    %572 = vector.shape_cast %571 : vector<1x8x8xbf16> to vector<8x8xbf16>
    %573 = arith.extf %572 : vector<8x8xbf16> to vector<8x8xf32>
    %574 = vector.broadcast %570 : f32 to vector<8x8xf32>
    %575 = arith.mulf %574, %573 : vector<8x8xf32>
    %576 = arith.addf %569, %575 : vector<8x8xf32>
    %c3_356 = arith.constant 3 : index
    %c6_357 = arith.constant 6 : index
    %577 = memref.load %arg9[%c3_356, %c6_357] : memref<4x16xf32, #tpu.memory_space<smem>>
    %c6_358 = arith.constant 6 : index
    %c0_359 = arith.constant 0 : index
    %c0_360 = arith.constant 0 : index
    %578 = vector.load %arg6[%c6_358, %c0_359, %c0_360] : memref<16x8x8xbf16, #tpu.memory_space<vmem>>, vector<1x8x8xbf16>
    %579 = vector.shape_cast %578 : vector<1x8x8xbf16> to vector<8x8xbf16>
    %580 = arith.extf %579 : vector<8x8xbf16> to vector<8x8xf32>
    %581 = vector.broadcast %577 : f32 to vector<8x8xf32>
    %582 = arith.mulf %581, %580 : vector<8x8xf32>
    %583 = arith.addf %576, %582 : vector<8x8xf32>
    %c3_361 = arith.constant 3 : index
    %c7_362 = arith.constant 7 : index
    %584 = memref.load %arg9[%c3_361, %c7_362] : memref<4x16xf32, #tpu.memory_space<smem>>
    %c7_363 = arith.constant 7 : index
    %c0_364 = arith.constant 0 : index
    %c0_365 = arith.constant 0 : index
    %585 = vector.load %arg6[%c7_363, %c0_364, %c0_365] : memref<16x8x8xbf16, #tpu.memory_space<vmem>>, vector<1x8x8xbf16>
    %586 = vector.shape_cast %585 : vector<1x8x8xbf16> to vector<8x8xbf16>
    %587 = arith.extf %586 : vector<8x8xbf16> to vector<8x8xf32>
    %588 = vector.broadcast %584 : f32 to vector<8x8xf32>
    %589 = arith.mulf %588, %587 : vector<8x8xf32>
    %590 = arith.addf %583, %589 : vector<8x8xf32>
    %c3_366 = arith.constant 3 : index
    %c8_367 = arith.constant 8 : index
    %591 = memref.load %arg9[%c3_366, %c8_367] : memref<4x16xf32, #tpu.memory_space<smem>>
    %c8_368 = arith.constant 8 : index
    %c0_369 = arith.constant 0 : index
    %c0_370 = arith.constant 0 : index
    %592 = vector.load %arg6[%c8_368, %c0_369, %c0_370] : memref<16x8x8xbf16, #tpu.memory_space<vmem>>, vector<1x8x8xbf16>
    %593 = vector.shape_cast %592 : vector<1x8x8xbf16> to vector<8x8xbf16>
    %594 = arith.extf %593 : vector<8x8xbf16> to vector<8x8xf32>
    %595 = vector.broadcast %591 : f32 to vector<8x8xf32>
    %596 = arith.mulf %595, %594 : vector<8x8xf32>
    %597 = arith.addf %590, %596 : vector<8x8xf32>
    %c3_371 = arith.constant 3 : index
    %c9_372 = arith.constant 9 : index
    %598 = memref.load %arg9[%c3_371, %c9_372] : memref<4x16xf32, #tpu.memory_space<smem>>
    %c9_373 = arith.constant 9 : index
    %c0_374 = arith.constant 0 : index
    %c0_375 = arith.constant 0 : index
    %599 = vector.load %arg6[%c9_373, %c0_374, %c0_375] : memref<16x8x8xbf16, #tpu.memory_space<vmem>>, vector<1x8x8xbf16>
    %600 = vector.shape_cast %599 : vector<1x8x8xbf16> to vector<8x8xbf16>
    %601 = arith.extf %600 : vector<8x8xbf16> to vector<8x8xf32>
    %602 = vector.broadcast %598 : f32 to vector<8x8xf32>
    %603 = arith.mulf %602, %601 : vector<8x8xf32>
    %604 = arith.addf %597, %603 : vector<8x8xf32>
    %c3_376 = arith.constant 3 : index
    %c10_377 = arith.constant 10 : index
    %605 = memref.load %arg9[%c3_376, %c10_377] : memref<4x16xf32, #tpu.memory_space<smem>>
    %c10_378 = arith.constant 10 : index
    %c0_379 = arith.constant 0 : index
    %c0_380 = arith.constant 0 : index
    %606 = vector.load %arg6[%c10_378, %c0_379, %c0_380] : memref<16x8x8xbf16, #tpu.memory_space<vmem>>, vector<1x8x8xbf16>
    %607 = vector.shape_cast %606 : vector<1x8x8xbf16> to vector<8x8xbf16>
    %608 = arith.extf %607 : vector<8x8xbf16> to vector<8x8xf32>
    %609 = vector.broadcast %605 : f32 to vector<8x8xf32>
    %610 = arith.mulf %609, %608 : vector<8x8xf32>
    %611 = arith.addf %604, %610 : vector<8x8xf32>
    %c3_381 = arith.constant 3 : index
    %c11_382 = arith.constant 11 : index
    %612 = memref.load %arg9[%c3_381, %c11_382] : memref<4x16xf32, #tpu.memory_space<smem>>
    %c11_383 = arith.constant 11 : index
    %c0_384 = arith.constant 0 : index
    %c0_385 = arith.constant 0 : index
    %613 = vector.load %arg6[%c11_383, %c0_384, %c0_385] : memref<16x8x8xbf16, #tpu.memory_space<vmem>>, vector<1x8x8xbf16>
    %614 = vector.shape_cast %613 : vector<1x8x8xbf16> to vector<8x8xbf16>
    %615 = arith.extf %614 : vector<8x8xbf16> to vector<8x8xf32>
    %616 = vector.broadcast %612 : f32 to vector<8x8xf32>
    %617 = arith.mulf %616, %615 : vector<8x8xf32>
    %618 = arith.addf %611, %617 : vector<8x8xf32>
    %c3_386 = arith.constant 3 : index
    %c12_387 = arith.constant 12 : index
    %619 = memref.load %arg9[%c3_386, %c12_387] : memref<4x16xf32, #tpu.memory_space<smem>>
    %c12_388 = arith.constant 12 : index
    %c0_389 = arith.constant 0 : index
    %c0_390 = arith.constant 0 : index
    %620 = vector.load %arg6[%c12_388, %c0_389, %c0_390] : memref<16x8x8xbf16, #tpu.memory_space<vmem>>, vector<1x8x8xbf16>
    %621 = vector.shape_cast %620 : vector<1x8x8xbf16> to vector<8x8xbf16>
    %622 = arith.extf %621 : vector<8x8xbf16> to vector<8x8xf32>
    %623 = vector.broadcast %619 : f32 to vector<8x8xf32>
    %624 = arith.mulf %623, %622 : vector<8x8xf32>
    %625 = arith.addf %618, %624 : vector<8x8xf32>
    %c3_391 = arith.constant 3 : index
    %c13_392 = arith.constant 13 : index
    %626 = memref.load %arg9[%c3_391, %c13_392] : memref<4x16xf32, #tpu.memory_space<smem>>
    %c13_393 = arith.constant 13 : index
    %c0_394 = arith.constant 0 : index
    %c0_395 = arith.constant 0 : index
    %627 = vector.load %arg6[%c13_393, %c0_394, %c0_395] : memref<16x8x8xbf16, #tpu.memory_space<vmem>>, vector<1x8x8xbf16>
    %628 = vector.shape_cast %627 : vector<1x8x8xbf16> to vector<8x8xbf16>
    %629 = arith.extf %628 : vector<8x8xbf16> to vector<8x8xf32>
    %630 = vector.broadcast %626 : f32 to vector<8x8xf32>
    %631 = arith.mulf %630, %629 : vector<8x8xf32>
    %632 = arith.addf %625, %631 : vector<8x8xf32>
    %c3_396 = arith.constant 3 : index
    %c14_397 = arith.constant 14 : index
    %633 = memref.load %arg9[%c3_396, %c14_397] : memref<4x16xf32, #tpu.memory_space<smem>>
    %c14_398 = arith.constant 14 : index
    %c0_399 = arith.constant 0 : index
    %c0_400 = arith.constant 0 : index
    %634 = vector.load %arg6[%c14_398, %c0_399, %c0_400] : memref<16x8x8xbf16, #tpu.memory_space<vmem>>, vector<1x8x8xbf16>
    %635 = vector.shape_cast %634 : vector<1x8x8xbf16> to vector<8x8xbf16>
    %636 = arith.extf %635 : vector<8x8xbf16> to vector<8x8xf32>
    %637 = vector.broadcast %633 : f32 to vector<8x8xf32>
    %638 = arith.mulf %637, %636 : vector<8x8xf32>
    %639 = arith.addf %632, %638 : vector<8x8xf32>
    %c3_401 = arith.constant 3 : index
    %c15_402 = arith.constant 15 : index
    %640 = memref.load %arg9[%c3_401, %c15_402] : memref<4x16xf32, #tpu.memory_space<smem>>
    %c15_403 = arith.constant 15 : index
    %c0_404 = arith.constant 0 : index
    %c0_405 = arith.constant 0 : index
    %641 = vector.load %arg6[%c15_403, %c0_404, %c0_405] : memref<16x8x8xbf16, #tpu.memory_space<vmem>>, vector<1x8x8xbf16>
    %642 = vector.shape_cast %641 : vector<1x8x8xbf16> to vector<8x8xbf16>
    %643 = arith.extf %642 : vector<8x8xbf16> to vector<8x8xf32>
    %644 = vector.broadcast %640 : f32 to vector<8x8xf32>
    %645 = arith.mulf %644, %643 : vector<8x8xf32>
    %646 = arith.addf %639, %645 : vector<8x8xf32>
    %647 = arith.mulf %646, %68 : vector<8x8xf32>
    %c3_406 = arith.constant 3 : index
    %c0_407 = arith.constant 0 : index
    %c0_408 = arith.constant 0 : index
    %648 = vector.load %arg15[%c3_406, %c0_407, %c0_408] : memref<4x8x1xf32, #tpu.memory_space<vmem>>, vector<1x8x1xf32>
    %649 = vector.shape_cast %648 : vector<1x8x1xf32> to vector<8x1xf32>
    %cst_409 = arith.constant dense<0xFF800000> : vector<8xf32>
    %650 = vector.multi_reduction <maximumf>, %647, %cst_409 [1] : vector<8x8xf32> to vector<8xf32>
    %651 = vector.shape_cast %650 : vector<8xf32> to vector<8x1xf32>
    %652 = arith.maximumf %649, %651 : vector<8x1xf32>
    %653 = arith.subf %649, %652 : vector<8x1xf32>
    %654 = math.exp %653 : vector<8x1xf32>
    %655 = vector.broadcast %652 : vector<8x1xf32> to vector<8x8xf32>
    %656 = arith.subf %647, %655 : vector<8x8xf32>
    %657 = math.exp %656 : vector<8x8xf32>
    %c3_410 = arith.constant 3 : index
    %c0_411 = arith.constant 0 : index
    %c0_412 = arith.constant 0 : index
    %658 = vector.load %arg16[%c3_410, %c0_411, %c0_412] : memref<4x8x1xf32, #tpu.memory_space<vmem>>, vector<1x8x1xf32>
    %659 = vector.shape_cast %658 : vector<1x8x1xf32> to vector<8x1xf32>
    %660 = arith.mulf %654, %659 : vector<8x1xf32>
    %cst_413 = arith.constant dense<0.000000e+00> : vector<8xf32>
    %661 = vector.multi_reduction <add>, %657, %cst_413 [1] : vector<8x8xf32> to vector<8xf32>
    %662 = vector.shape_cast %661 : vector<8xf32> to vector<8x1xf32>
    %663 = arith.addf %660, %662 : vector<8x1xf32>
    %c3_414 = arith.constant 3 : index
    %c0_415 = arith.constant 0 : index
    %c0_416 = arith.constant 0 : index
    %664 = vector.load %arg16[%c3_414, %c0_415, %c0_416] : memref<4x8x1xf32, #tpu.memory_space<vmem>>, vector<1x8x1xf32>
    %665 = vector.shape_cast %664 : vector<1x8x1xf32> to vector<8x1xf32>
    %666 = vector.shape_cast %663 : vector<8x1xf32> to vector<1x8x1xf32>
    tpu.vector_store %arg16[%c3_414, %c0_415, %c0_416], %666 {strides = array<i32>} : memref<4x8x1xf32, #tpu.memory_space<vmem>>, vector<1x8x1xf32>,
    %c3_417 = arith.constant 3 : index
    %c0_418 = arith.constant 0 : index
    %c0_419 = arith.constant 0 : index
    %667 = vector.load %arg15[%c3_417, %c0_418, %c0_419] : memref<4x8x1xf32, #tpu.memory_space<vmem>>, vector<1x8x1xf32>
    %668 = vector.shape_cast %667 : vector<1x8x1xf32> to vector<8x1xf32>
    %669 = vector.shape_cast %652 : vector<8x1xf32> to vector<1x8x1xf32>
    tpu.vector_store %arg15[%c3_417, %c0_418, %c0_419], %669 {strides = array<i32>} : memref<4x8x1xf32, #tpu.memory_space<vmem>>, vector<1x8x1xf32>,
    %670 = arith.truncf %657 : vector<8x8xf32> to vector<8x8xbf16>
    %cst_420 = arith.constant dense<0.000000e+00> : vector<8x32xf32>
    %671 = tpu.matmul %670, %530, %cst_420 {dimension_numbers = #tpu.dot_dimension_numbers<[1], [0], [0], [1], [0, 0, 1, 1], [], []>} : vector<8x8xbf16>, vector<8x32xbf16>, vector<8x32xf32> -> vector<8x32xf32>
    %c0_421 = arith.constant 0 : index
    %c96 = arith.constant 96 : index
    %672 = vector.load %arg14[%c0_421, %c96] : memref<8x128xf32, #tpu.memory_space<vmem>>, vector<8x32xf32>
    %673 = vector.broadcast %654 : vector<8x1xf32> to vector<8x32xf32>
    %674 = arith.mulf %673, %672 : vector<8x32xf32>
    %675 = arith.addf %674, %671 : vector<8x32xf32>
    %c0_422 = arith.constant 0 : index
    %c96_423 = arith.constant 96 : index
    %676 = vector.load %arg14[%c0_422, %c96_423] : memref<8x128xf32, #tpu.memory_space<vmem>>, vector<8x32xf32>
    tpu.vector_store %arg14[%c0_422, %c96_423], %675 {strides = array<i32>} : memref<8x128xf32, #tpu.memory_space<vmem>>, vector<8x32xf32>,
    %c0_i32_424 = arith.constant 0 : i32
    %677 = arith.cmpi eq, %arg1, %c0_i32_424 : i32
    %678 = arith.extui %677 : i1 to i32
    %c0_i32_425 = arith.constant 0 : i32
    %679 = arith.cmpi ne, %678, %c0_i32_425 : i32
    scf.if %679 {
      %c0_426 = arith.constant 0 : index
      %c0_427 = arith.constant 0 : index
      %c0_428 = arith.constant 0 : index
      %680 = vector.load %arg16[%c0_426, %c0_427, %c0_428] : memref<4x8x1xf32, #tpu.memory_space<vmem>>, vector<1x8x1xf32>
      %681 = vector.shape_cast %680 : vector<1x8x1xf32> to vector<8x1xf32>
      %682 = tpu.reciprocal %681 {approx = true} : vector<8x1xf32> -> vector<8x1xf32>
      %c0_429 = arith.constant 0 : index
      %c0_430 = arith.constant 0 : index
      %683 = vector.load %arg14[%c0_429, %c0_430] : memref<8x128xf32, #tpu.memory_space<vmem>>, vector<8x32xf32>
      %684 = vector.broadcast %682 : vector<8x1xf32> to vector<8x32xf32>
      %685 = arith.mulf %683, %684 : vector<8x32xf32>
      %c0_431 = arith.constant 0 : index
      %c0_432 = arith.constant 0 : index
      %686 = vector.load %arg14[%c0_431, %c0_432] : memref<8x128xf32, #tpu.memory_space<vmem>>, vector<8x32xf32>
      tpu.vector_store %arg14[%c0_431, %c0_432], %685 {strides = array<i32>} : memref<8x128xf32, #tpu.memory_space<vmem>>, vector<8x32xf32>,
      %c1_433 = arith.constant 1 : index
      %c0_434 = arith.constant 0 : index
      %c0_435 = arith.constant 0 : index
      %687 = vector.load %arg16[%c1_433, %c0_434, %c0_435] : memref<4x8x1xf32, #tpu.memory_space<vmem>>, vector<1x8x1xf32>
      %688 = vector.shape_cast %687 : vector<1x8x1xf32> to vector<8x1xf32>
      %689 = tpu.reciprocal %688 {approx = true} : vector<8x1xf32> -> vector<8x1xf32>
      %c0_436 = arith.constant 0 : index
      %c32_437 = arith.constant 32 : index
      %690 = vector.load %arg14[%c0_436, %c32_437] : memref<8x128xf32, #tpu.memory_space<vmem>>, vector<8x32xf32>
      %691 = vector.broadcast %689 : vector<8x1xf32> to vector<8x32xf32>
      %692 = arith.mulf %690, %691 : vector<8x32xf32>
      %c0_438 = arith.constant 0 : index
      %c32_439 = arith.constant 32 : index
      %693 = vector.load %arg14[%c0_438, %c32_439] : memref<8x128xf32, #tpu.memory_space<vmem>>, vector<8x32xf32>
      tpu.vector_store %arg14[%c0_438, %c32_439], %692 {strides = array<i32>} : memref<8x128xf32, #tpu.memory_space<vmem>>, vector<8x32xf32>,
      %c2_440 = arith.constant 2 : index
      %c0_441 = arith.constant 0 : index
      %c0_442 = arith.constant 0 : index
      %694 = vector.load %arg16[%c2_440, %c0_441, %c0_442] : memref<4x8x1xf32, #tpu.memory_space<vmem>>, vector<1x8x1xf32>
      %695 = vector.shape_cast %694 : vector<1x8x1xf32> to vector<8x1xf32>
      %696 = tpu.reciprocal %695 {approx = true} : vector<8x1xf32> -> vector<8x1xf32>
      %c0_443 = arith.constant 0 : index
      %c64_444 = arith.constant 64 : index
      %697 = vector.load %arg14[%c0_443, %c64_444] : memref<8x128xf32, #tpu.memory_space<vmem>>, vector<8x32xf32>
      %698 = vector.broadcast %696 : vector<8x1xf32> to vector<8x32xf32>
      %699 = arith.mulf %697, %698 : vector<8x32xf32>
      %c0_445 = arith.constant 0 : index
      %c64_446 = arith.constant 64 : index
      %700 = vector.load %arg14[%c0_445, %c64_446] : memref<8x128xf32, #tpu.memory_space<vmem>>, vector<8x32xf32>
      tpu.vector_store %arg14[%c0_445, %c64_446], %699 {strides = array<i32>} : memref<8x128xf32, #tpu.memory_space<vmem>>, vector<8x32xf32>,
      %c3_447 = arith.constant 3 : index
      %c0_448 = arith.constant 0 : index
      %c0_449 = arith.constant 0 : index
      %701 = vector.load %arg16[%c3_447, %c0_448, %c0_449] : memref<4x8x1xf32, #tpu.memory_space<vmem>>, vector<1x8x1xf32>
      %702 = vector.shape_cast %701 : vector<1x8x1xf32> to vector<8x1xf32>
      %703 = tpu.reciprocal %702 {approx = true} : vector<8x1xf32> -> vector<8x1xf32>
      %c0_450 = arith.constant 0 : index
      %c96_451 = arith.constant 96 : index
      %704 = vector.load %arg14[%c0_450, %c96_451] : memref<8x128xf32, #tpu.memory_space<vmem>>, vector<8x32xf32>
      %705 = vector.broadcast %703 : vector<8x1xf32> to vector<8x32xf32>
      %706 = arith.mulf %704, %705 : vector<8x32xf32>
      %c0_452 = arith.constant 0 : index
      %c96_453 = arith.constant 96 : index
      %707 = vector.load %arg14[%c0_452, %c96_453] : memref<8x128xf32, #tpu.memory_space<vmem>>, vector<8x32xf32>
      tpu.vector_store %arg14[%c0_452, %c96_453], %706 {strides = array<i32>} : memref<8x128xf32, #tpu.memory_space<vmem>>, vector<8x32xf32>,
      %c0_454 = arith.constant 0 : index
      %c0_455 = arith.constant 0 : index
      %708 = vector.load %arg14[%c0_454, %c0_455] : memref<8x128xf32, #tpu.memory_space<vmem>>, vector<8x128xf32>
      %709 = arith.truncf %708 : vector<8x128xf32> to vector<8x128xbf16>
      %c0_456 = arith.constant 0 : index
      %c0_457 = arith.constant 0 : index
      %710 = vector.load %arg10[%c0_456, %c0_457] : memref<128x32xbf16, #tpu.memory_space<vmem>>, vector<128x32xbf16>
      %cst_458 = arith.constant dense<0.000000e+00> : vector<8x32xf32>
      %711 = tpu.matmul %709, %710, %cst_458 {dimension_numbers = #tpu.dot_dimension_numbers<[1], [0], [0], [1], [0, 0, 1, 1], [], []>} : vector<8x128xbf16>, vector<128x32xbf16>, vector<8x32xf32> -> vector<8x32xf32>
      %712 = vector.broadcast %4 : vector<1x32xf32> to vector<8x32xf32>
      %713 = arith.addf %711, %712 : vector<8x32xf32>
      %714 = arith.addf %713, %9 : vector<8x32xf32>
      %cst_459 = arith.constant dense<0.000000e+00> : vector<8xf32>
      %715 = vector.multi_reduction <add>, %714, %cst_459 [1] : vector<8x32xf32> to vector<8xf32>
      %716 = vector.shape_cast %715 : vector<8xf32> to vector<8x1xf32>
      %cst_460 = arith.constant 3.200000e+01 : f32
      %717 = vector.broadcast %cst_460 : f32 to vector<8x1xf32>
      %718 = arith.divf %716, %717 : vector<8x1xf32>
      %719 = vector.broadcast %718 : vector<8x1xf32> to vector<8x32xf32>
      %720 = arith.subf %714, %719 : vector<8x32xf32>
      %721 = arith.mulf %720, %720 : vector<8x32xf32>
      %cst_461 = arith.constant dense<0.000000e+00> : vector<8xf32>
      %722 = vector.multi_reduction <add>, %721, %cst_461 [1] : vector<8x32xf32> to vector<8xf32>
      %723 = vector.shape_cast %722 : vector<8xf32> to vector<8x1xf32>
      %cst_462 = arith.constant 3.200000e+01 : f32
      %724 = vector.broadcast %cst_462 : f32 to vector<8x1xf32>
      %725 = arith.divf %723, %724 : vector<8x1xf32>
      %726 = vector.broadcast %718 : vector<8x1xf32> to vector<8x32xf32>
      %727 = arith.subf %714, %726 : vector<8x32xf32>
      %cst_463 = arith.constant 9.99999974E-6 : f32
      %728 = vector.broadcast %cst_463 : f32 to vector<8x1xf32>
      %729 = arith.addf %725, %728 : vector<8x1xf32>
      %730 = math.rsqrt %729 : vector<8x1xf32>
      %731 = vector.broadcast %730 : vector<8x1xf32> to vector<8x32xf32>
      %732 = arith.mulf %727, %731 : vector<8x32xf32>
      %733 = vector.broadcast %2 : vector<1x32xf32> to vector<8x32xf32>
      %734 = arith.mulf %732, %733 : vector<8x32xf32>
      %735 = vector.broadcast %3 : vector<1x32xf32> to vector<8x32xf32>
      %736 = arith.addf %734, %735 : vector<8x32xf32>
      %737 = arith.truncf %736 : vector<8x32xf32> to vector<8x32xbf16>
      %c0_464 = arith.constant 0 : index
      %c0_465 = arith.constant 0 : index
      %738 = vector.load %arg11[%c0_464, %c0_465] : memref<32x32xbf16, #tpu.memory_space<vmem>>, vector<32x32xbf16>
      %cst_466 = arith.constant dense<0.000000e+00> : vector<8x32xf32>
      %739 = tpu.matmul %737, %738, %cst_466 {dimension_numbers = #tpu.dot_dimension_numbers<[1], [0], [0], [1], [0, 0, 1, 1], [], []>} : vector<8x32xbf16>, vector<32x32xbf16>, vector<8x32xf32> -> vector<8x32xf32>
      %740 = vector.broadcast %5 : vector<1x32xf32> to vector<8x32xf32>
      %741 = arith.addf %739, %740 : vector<8x32xf32>
      %742 = arith.addf %741, %714 : vector<8x32xf32>
      %cst_467 = arith.constant 0.000000e+00 : f32
      %743 = vector.broadcast %cst_467 : f32 to vector<8x96xf32>
      %744 = tpu.concatenate %742, %743 in 1 : vector<8x32xf32>, vector<8x96xf32> -> vector<8x128xf32>
      %c0_468 = arith.constant 0 : index
      %c0_469 = arith.constant 0 : index
      %745 = vector.load %arg13[%c0_468, %c0_469] : memref<8x128xf32, #tpu.memory_space<vmem>>, vector<8x128xf32>
      tpu.vector_store %arg13[%c0_468, %c0_469], %744 {strides = array<i32>} : memref<8x128xf32, #tpu.memory_space<vmem>>, vector<8x128xf32>,
    } else {
    }
    return
  }
  func.func @transform_0(%arg0: i32, %arg1: i32) -> (i32, i32) {
    %c0_i32 = arith.constant 0 : i32
    %c0_i32_0 = arith.constant 0 : i32
    return %arg0, %c0_i32 : i32, i32
  }
  func.func @transform_1(%arg0: i32, %arg1: i32) -> (i32, i32) {
    %c0_i32 = arith.constant 0 : i32
    %c0_i32_0 = arith.constant 0 : i32
    return %arg1, %c0_i32 : i32, i32
  }
  func.func @transform_2(%arg0: i32, %arg1: i32) -> (i32, i32) {
    %c0_i32 = arith.constant 0 : i32
    return %arg0, %arg1 : i32, i32
  }
  func.func @transform_3(%arg0: i32, %arg1: i32) -> (i32, i32) {
    %c0_i32 = arith.constant 0 : i32
    return %arg0, %arg1 : i32, i32
  }
  func.func @transform_4(%arg0: i32, %arg1: i32) -> (i32, i32, i32) {
    %c0_i32 = arith.constant 0 : i32
    %c0_i32_0 = arith.constant 0 : i32
    return %c0_i32, %arg0, %arg1 : i32, i32, i32
  }
  func.func @transform_5(%arg0: i32, %arg1: i32) -> (i32, i32) {
    %c0_i32 = arith.constant 0 : i32
    %c0_i32_0 = arith.constant 0 : i32
    %c0_i32_1 = arith.constant 0 : i32
    return %c0_i32, %c0_i32_0 : i32, i32
  }
  func.func @transform_6(%arg0: i32, %arg1: i32) -> (i32, i32) {
    %c0_i32 = arith.constant 0 : i32
    %c0_i32_0 = arith.constant 0 : i32
    %c0_i32_1 = arith.constant 0 : i32
    return %c0_i32, %c0_i32_0 : i32, i32
  }
  func.func @transform_7(%arg0: i32, %arg1: i32) -> (i32, i32) {
    %c0_i32 = arith.constant 0 : i32
    %c0_i32_0 = arith.constant 0 : i32
    %c0_i32_1 = arith.constant 0 : i32
    return %c0_i32, %c0_i32_0 : i32, i32
  }
  func.func @transform_8(%arg0: i32, %arg1: i32) -> (i32, i32) {
    %c0_i32 = arith.constant 0 : i32
    %c0_i32_0 = arith.constant 0 : i32
    %c0_i32_1 = arith.constant 0 : i32
    return %c0_i32, %c0_i32_0 : i32, i32
  }
  func.func @transform_9(%arg0: i32, %arg1: i32) -> (i32, i32) {
    %c0_i32 = arith.constant 0 : i32
    %c0_i32_0 = arith.constant 0 : i32
    %c0_i32_1 = arith.constant 0 : i32
    return %c0_i32, %c0_i32_0 : i32, i32
  }
  func.func @transform_10(%arg0: i32, %arg1: i32) -> (i32, i32) {
    %c0_i32 = arith.constant 0 : i32
    %c0_i32_0 = arith.constant 0 : i32
    %c0_i32_1 = arith.constant 0 : i32
    return %c0_i32, %c0_i32_0 : i32, i32
  }
  func.func @transform_11(%arg0: i32, %arg1: i32) -> (i32, i32) {
    %c0_i32 = arith.constant 0 : i32
    %c0_i32_0 = arith.constant 0 : i32
    return %arg0, %c0_i32 : i32, i32
  }
}

</mosaic_0001>

<llo_original>
// kernel: tpu_custom_call.1
$region0: #{tpu_custom_call.1}
  #allocation0 [shape = 'u32[]', space=smem, size = 0x4, offset = 0x4, fixed_abs, tag = 'smem constant byte address 0x4 - core index']
  #allocation1 [shape = 'u32[144,128]{1,0:T(1,128)}', space=vmem, size = 0x12000, scoped, tag = 'internal scratch']
  #allocation2 [shape = 'f32[8,128]{1,0:T(8,128)}', space=vmem, size = 0x1000, scoped, tag = 'scratch operand']
  #allocation3 [shape = 'f32[4,8,1]{2,1,0:T(8,128)}', space=vmem, size = 0x4000, scoped, tag = 'scratch operand']
  #allocation4 [shape = 'f32[4,8,1]{2,1,0:T(8,128)}', space=vmem, size = 0x4000, scoped, tag = 'scratch operand']
  %s0 = inlined_call_operand.vmem [shape: f32[8,32], index: 0, kind: input, shape index: {}]
  %s1 = inlined_call_operand.vmem [shape: f32[8,32], index: 1, kind: input, shape index: {}]
  %s2 = inlined_call_operand.vmem [shape: f32[8,8], index: 2, kind: input, shape index: {}]
  %s3 = inlined_call_operand.vmem [shape: f32[8,8], index: 3, kind: input, shape index: {}]
  %s4 = inlined_call_operand.vmem [shape: bf16[16,8,8], index: 4, kind: input, shape index: {}]
  %s5 = inlined_call_operand.vmem [shape: bf16[32,384], index: 5, kind: input, shape index: {}]
  %s6 = inlined_call_operand.vmem [shape: f32[1,384], index: 6, kind: input, shape index: {}]
  %s7 = inlined_call_operand.vmem [shape: f32[4,16], index: 7, kind: input, shape index: {}]
  %s8 = inlined_call_operand.vmem [shape: bf16[128,32], index: 8, kind: input, shape index: {}]
  %s9 = inlined_call_operand.vmem [shape: bf16[32,32], index: 9, kind: input, shape index: {}]
  %s10 = inlined_call_operand.vmem [shape: f32[8,32], index: 10, kind: input, shape index: {}]
  %s11 = inlined_call_operand.hbm [shape: f32[8,128], index: 11, kind: output, shape index: {}]
  %s12 = sld [smem:[#allocation0]]
  $region66: #{tpu_custom_call.1} parent=0
    _
  %s14 = ssub.s32 1, %s12
  %s15 = scalar_select 0, %s14, %s12
  $region1: #{tpu_custom_call.1} parent=0
    #allocation5 [shape = 'u8[2048]{0}', space=smem, size = 0x800, scoped, tag = 'input window, operand 7, single buffered']
    #allocation6 [shape = 's32[1]{0}', space=sflag, size = 0x4, scoped, tag = 'scoped memory for tpu_custom_call.1']
    #allocation7 [shape = 's32[1]{0}', space=sflag, size = 0x4, scoped, tag = 'scoped memory for tpu_custom_call.1']
    #allocation8 [shape = 'u8[4096]{0}', space=vmem, size = 0x1000, scoped, tag = 'output window, operand 0, single buffered']
    %16 = vsyncpa [#allocation7], 0
    %17 = vsyncpa [#allocation6], 0
    // Predicated region
    $region2: #{tpu_custom_call.1} parent=1 // pred_check
      _
    $region3: #{tpu_custom_call.1} parent=1 // pred_check_branch
      %19 = sbr.rel (0) target = $region5
    $region4: #{tpu_custom_call.1} parent=1 // pred_region
      _
    $region5: #{tpu_custom_call.1} parent=1 // pred_fallthru
      _
    // Predicated region
    $region6: #{tpu_custom_call.1} parent=1 // pred_check
      _
    $region7: #{tpu_custom_call.1} parent=1 // pred_check_branch
      %21 = sbr.rel (0) target = $region9
    $region8: #{tpu_custom_call.1} parent=1 // pred_region
      _
    $region9: #{tpu_custom_call.1} parent=1 // pred_fallthru
      _
    // Predicated region
    $region10: #{tpu_custom_call.1} parent=1 // pred_check
      _
    $region11: #{tpu_custom_call.1} parent=1 // pred_check_branch
      %23 = sbr.rel (0) target = $region13
    $region12: #{tpu_custom_call.1} parent=1 // pred_region
      _
    $region13: #{tpu_custom_call.1} parent=1 // pred_fallthru
      _
    // Predicated region
    $region14: #{tpu_custom_call.1} parent=1 // pred_check
      _
    $region15: #{tpu_custom_call.1} parent=1 // pred_check_branch
      %25 = sbr.rel (0) target = $region17
    $region16: #{tpu_custom_call.1} parent=1 // pred_region
      _
    $region17: #{tpu_custom_call.1} parent=1 // pred_fallthru
      _
    // Predicated region
    $region18: #{tpu_custom_call.1} parent=1 // pred_check
      _
    $region19: #{tpu_custom_call.1} parent=1 // pred_check_branch
      %27 = sbr.rel (0) target = $region21
    $region20: #{tpu_custom_call.1} parent=1 // pred_region
      _
    $region21: #{tpu_custom_call.1} parent=1 // pred_fallthru
      _
    // Predicated region
    $region22: #{tpu_custom_call.1} parent=1 // pred_check
      _
    $region23: #{tpu_custom_call.1} parent=1 // pred_check_branch
      %29 = sbr.rel (0) target = $region25
    $region24: #{tpu_custom_call.1} parent=1 // pred_region
      _
    $region25: #{tpu_custom_call.1} parent=1 // pred_fallthru
      _
    // Predicated region
    $region26: #{tpu_custom_call.1} parent=1 // pred_check
      _
    $region27: #{tpu_custom_call.1} parent=1 // pred_check_branch
      %31 = sbr.rel (0) target = $region29
    $region28: #{tpu_custom_call.1} parent=1 // pred_region
      _
    $region29: #{tpu_custom_call.1} parent=1 // pred_fallthru
      _
    // Predicated region
    $region30: #{tpu_custom_call.1} parent=1 // pred_check
      _
    $region31: #{tpu_custom_call.1} parent=1 // pred_check_branch
      %33 = sbr.rel (0) target = $region33
    $region32: #{tpu_custom_call.1} parent=1 // pred_region
      %s35 = ssub.s32 64, 64
      %36 = vsyncadd [#allocation7], %s35
      %s38 = sshll.u32 %s7, 4
      %s39 = int_to_ptr.vmem [resolvable:$true] %s38
      %41 = dma.vmem_to_smem %s39, 64, [#allocation5], [#allocation7]
    $region33: #{tpu_custom_call.1} parent=1 // pred_fallthru
      _
    // Predicated region
    $region34: #{tpu_custom_call.1} parent=1 // pred_check
      _
    $region35: #{tpu_custom_call.1} parent=1 // pred_check_branch
      %43 = sbr.rel (0) target = $region37
    $region36: #{tpu_custom_call.1} parent=1 // pred_region
      _
    $region37: #{tpu_custom_call.1} parent=1 // pred_fallthru
      _
    // Predicated region
    $region38: #{tpu_custom_call.1} parent=1 // pred_check
      _
    $region39: #{tpu_custom_call.1} parent=1 // pred_check_branch
      %45 = sbr.rel (0) target = $region41
    $region40: #{tpu_custom_call.1} parent=1 // pred_region
      _
    $region41: #{tpu_custom_call.1} parent=1 // pred_fallthru
      _
    // Predicated region
    $region42: #{tpu_custom_call.1} parent=1 // pred_check
      _
    $region43: #{tpu_custom_call.1} parent=1 // pred_check_branch
      %47 = sbr.rel (0) target = $region45
    $region44: #{tpu_custom_call.1} parent=1 // pred_region
      _
    $region45: #{tpu_custom_call.1} parent=1 // pred_fallthru
      _
    // Predicated region
    $region46: #{tpu_custom_call.1} parent=1 // pred_check
      _
    $region47: #{tpu_custom_call.1} parent=1 // pred_check_branch
      %49 = sbr.rel (0) target = $region49
    $region48: #{tpu_custom_call.1} parent=1 // pred_region
      %50 = dma.done [#allocation7], 64
    $region49: #{tpu_custom_call.1} parent=1 // pred_fallthru
      _
    %51 = sfence
    %v53 = vld [vmem:[%s10] sm:$0x1]
    %v54 = vld [vmem:[%s10 + $0x1] sm:$0x1]
    %v55 = vld [vmem:[%s10 + $0x2] sm:$0x1]
    %v56 = vld [vmem:[%s10 + $0x3] sm:$0x1]
    %v57 = vld [vmem:[%s10 + $0x4] sm:$0x1]
    %v58 = vld [vmem:[%s10 + $0x5] sm:$0x1]
    %p59 = scmp.eq.s32.totalorder 0, 0
    // Predicated region
    $region50: #{tpu_custom_call.1} parent=1 // pred_check
      %p60 = pneg %p59
    $region51: #{tpu_custom_call.1} parent=1 // pred_check_branch
      %62 = sbr.rel (%p60) target = $region53
    $region52: #{tpu_custom_call.1} parent=1 // pred_region
      %vm63 = vcmask 7168
      %64 = vst.msk [vmem:[#allocation3] sm:$0xff] %vm63, -inf
      %65 = vst.msk [vmem:[#allocation3 + $0x8] sm:$0xff] %vm63, -inf
      %66 = vst.msk [vmem:[#allocation3 + $0x10] sm:$0xff] %vm63, -inf
      %67 = vst.msk [vmem:[#allocation3 + $0x18] sm:$0xff] %vm63, -inf
      %68 = vst.msk [vmem:[#allocation4] sm:$0xff] %vm63, 0.0
      %69 = vst.msk [vmem:[#allocation4 + $0x8] sm:$0xff] %vm63, 0.0
      %70 = vst.msk [vmem:[#allocation4 + $0x10] sm:$0xff] %vm63, 0.0
      %71 = vst.msk [vmem:[#allocation4 + $0x18] sm:$0xff] %vm63, 0.0
      %72 = vst [vmem:[#allocation2] sm:$0xff] 0.0
    $region53: #{tpu_custom_call.1} parent=1 // pred_fallthru
      _
    %v73 = vld [vmem:[%s0] sm:$0xff]
    %vm74 = vcmask 261120
    %v75 = vsel %vm74, %v73, 0.0
    %76 = vadd.xlane.f32.xlu0 %v75
    %v77 = vpop.xlane.xlu0 %76
    %v78 = vrcp.pop 32.0
    %v79 = vmul.f32 %v77, %v78
    %v80 = vsub.f32 %v73, %v79
    %v81 = vmul.f32 %v80, %v80
    %v82 = vsel %vm74, %v81, 0.0
    %83 = vadd.xlane.f32.xlu0 %v82
    %v84 = vpop.xlane.xlu0 %83
    %v85 = vmul.f32 %v84, %v78
    %v86 = vadd.f32 %v85, 1e-05
    %v87 = vrsqrt.pop %v86
    %v88 = vmul.f32 %v80, %v87
    %v89 = vlaneseq
    %v90 = vshrl.u32 %v89, 7
    %v91 = vsub.s32 0, %v90
    %v92 = vrot.slane %v53, %v91
    %v93 = vmul.f32 %v88, %v92
    %v94 = vlaneseq
    %v95 = vshrl.u32 %v94, 7
    %v96 = vsub.s32 0, %v95
    %v97 = vrot.slane %v54, %v96
    %v98 = vadd.f32 %v93, %v97
    %v99 = vpack.c.bf16 %v98, %v98
    %v100 = vld [vmem:[%s1] sm:$0xff]
    %v101 = vsel %vm74, %v100, 0.0
    %102 = vadd.xlane.f32.xlu0 %v101
    %v103 = vpop.xlane.xlu0 %102
    %v104 = vmul.f32 %v103, %v78
    %v105 = vsub.f32 %v100, %v104
    %v106 = vmul.f32 %v105, %v105
    %v107 = vsel %vm74, %v106, 0.0
    %108 = vadd.xlane.f32.xlu0 %v107
    %v109 = vpop.xlane.xlu0 %108
    %v110 = vmul.f32 %v109, %v78
    %v111 = vadd.f32 %v110, 1e-05
    %v112 = vrsqrt.pop %v111
    %v113 = vmul.f32 %v105, %v112
    %v114 = vmul.f32 %v113, %v92
    %v115 = vadd.f32 %v114, %v97
    %v116 = vpack.c.bf16 %v115, %v115
    %v117 = vld [vmem:[%s5] sm:$0xf]
    %v118 = vld [vmem:[%s5 + $0xc] sm:$0xf]
    %v119 = vld [vmem:[%s5 + $0x18] sm:$0xf]
    %v120 = vld [vmem:[%s5 + $0x24] sm:$0xf]
    %v121 = vld [vmem:[%s6] sm:$0x1]
    %v123 = vlaneseq
    %v124 = vshrl.u32 %v123, 7
    %v125 = vsub.s32 0, %v124
    %v126 = vrot.slane %v121, %v125
    %v132 = vunpack.c.l.b16 %v117
    %v133 = vunpack.c.l.b16 %v118
    %v134 = vunpack.c.l.b16 %v119
    %v135 = vunpack.c.l.b16 %v120
    %v136 = vpack.c.b16 %v133, %v132
    %v137 = vpack.c.b16 %v135, %v134
    %v141 = vsel %vm74, %v99, 0
    %143 = vmatprep.subr.bf16.mxu0 0
    %144 = vmatpush1.bf16.msra.mxu0 0
    %145 = vmatprep.subr.bf16.mxu0 0
    %146 = vmatpush1.bf16.msra.mxu0 0
    %147 = vmatprep.subr.bf16.mxu0 0
    %148 = vmatpush1.bf16.msra.mxu0 0
    %149 = vmatprep.subr.bf16.mxu0 0
    %150 = vmatpush1.bf16.msra.mxu0 0
    %151 = vmatprep.subr.bf16.mxu0 0
    %152 = vmatpush1.bf16.msra.mxu0 0
    %153 = vmatprep.subr.bf16.mxu0 0
    %154 = vmatpush1.bf16.msra.mxu0 0
    %155 = vmatprep.subr.bf16.mxu0 0
    %156 = vmatpush1.bf16.msra.mxu0 %v137
    %157 = vmatprep.subr.bf16.mxu0 0
    %158 = vmatpush1.bf16.msra.mxu0 %v136
    %159 = vmatprep.subr.bf16.mxu0 0
    %160 = vmatpush2.bf16.msra.mxu0 0
    %161 = vmatprep.subr.bf16.mxu0 0
    %162 = vmatpush2.bf16.msra.mxu0 0
    %163 = vmatprep.subr.bf16.mxu0 0
    %164 = vmatpush2.bf16.msra.mxu0 0
    %165 = vmatprep.subr.bf16.mxu0 0
    %166 = vmatpush2.bf16.msra.mxu0 0
    %167 = vmatprep.subr.bf16.mxu0 0
    %168 = vmatpush2.bf16.msra.mxu0 0
    %169 = vmatprep.subr.bf16.mxu0 0
    %170 = vmatpush2.bf16.msra.mxu0 0
    %171 = vmatprep.subr.bf16.mxu0 0
    %172 = vmatpush2.bf16.msra.mxu0 0
    %173 = vmatprep.subr.bf16.mxu0 0
    %174 = vmatpush2.bf16.msra.mxu0 0
    %175 = vmatprep.mubr.bf16.mxu0 0
    %176 = vmatmul.mubr.bf16.gmra.mxu0 %v141
    %v177 = vpop.f32.mrf.mxu0
    %v178 = vadd.f32 %v126, %v177
    %v179 = vpop.f32.mrf.mxu0
    %v180 = vpop.f32.mrf.mxu0
    %v181 = vpop.f32.mrf.mxu0
    %182 = vdwg.mxu0
    %v183 = vld [vmem:[%s5 + $0x4] sm:$0xff]
    %v184 = vld [vmem:[%s5 + $0x10] sm:$0xff]
    %v185 = vld [vmem:[%s5 + $0x1c] sm:$0xff]
    %v186 = vld [vmem:[%s5 + $0x28] sm:$0xff]
    %v187 = vld [vmem:[%s6 + $0x1] sm:$0x3]
    %v189 = vlaneseq
    %v190 = vshrl.u32 %v189, 7
    %v191 = vsub.s32 0, %v190
    %v192 = vrot.slane %v187, %v191
    %v193 = vlaneseq
    %v194 = vshrl.u32 %v193, 7
    %v195 = vsub.s32 1, %v194
    %v196 = vrot.slane %v187, %v195
    %v203 = vunpack.c.l.b16 %v183
    %v204 = vunpack.c.h.b16 %v183
    %v205 = vunpack.c.l.b16 %v184
    %v206 = vunpack.c.h.b16 %v184
    %v207 = vunpack.c.l.b16 %v185
    %v208 = vunpack.c.h.b16 %v185
    %v209 = vunpack.c.l.b16 %v186
    %v210 = vunpack.c.h.b16 %v186
    %v211 = vpack.c.b16 %v205, %v203
    %v212 = vpack.c.b16 %v206, %v204
    %v213 = vpack.c.b16 %v209, %v207
    %v214 = vpack.c.b16 %v210, %v208
    %v220 = vsel %vm74, %v116, 0
    %222 = vmatprep.subr.bf16.mxu0 0
    %223 = vmatpush1.bf16.msra.mxu0 0
    %224 = vmatprep.subr.bf16.mxu0 0
    %225 = vmatpush1.bf16.msra.mxu0 0
    %226 = vmatprep.subr.bf16.mxu0 0
    %227 = vmatpush1.bf16.msra.mxu0 0
    %228 = vmatprep.subr.bf16.mxu0 0
    %229 = vmatpush1.bf16.msra.mxu0 0
    %230 = vmatprep.subr.bf16.mxu0 0
    %231 = vmatpush1.bf16.msra.mxu0 0
    %232 = vmatprep.subr.bf16.mxu0 0
    %233 = vmatpush1.bf16.msra.mxu0 0
    %234 = vmatprep.subr.bf16.mxu0 %v214
    %235 = vmatpush1.bf16.msra.mxu0 %v213
    %236 = vmatprep.subr.bf16.mxu0 %v212
    %237 = vmatpush1.bf16.msra.mxu0 %v211
    %238 = vmatprep.subr.bf16.mxu0 0
    %239 = vmatpush2.bf16.msra.mxu0 0
    %240 = vmatprep.subr.bf16.mxu0 0
    %241 = vmatpush2.bf16.msra.mxu0 0
    %242 = vmatprep.subr.bf16.mxu0 0
    %243 = vmatpush2.bf16.msra.mxu0 0
    %244 = vmatprep.subr.bf16.mxu0 0
    %245 = vmatpush2.bf16.msra.mxu0 0
    %246 = vmatprep.subr.bf16.mxu0 0
    %247 = vmatpush2.bf16.msra.mxu0 0
    %248 = vmatprep.subr.bf16.mxu0 0
    %249 = vmatpush2.bf16.msra.mxu0 0
    %250 = vmatprep.subr.bf16.mxu0 0
    %251 = vmatpush2.bf16.msra.mxu0 0
    %252 = vmatprep.subr.bf16.mxu0 0
    %253 = vmatpush2.bf16.msra.mxu0 0
    %254 = vmatprep.mubr.bf16.mxu0 0
    %255 = vmatmul.mubr.bf16.gmra.mxu0 %v220
    %v256 = vpop.f32.mrf.mxu0
    %v257 = vadd.f32 %v192, %v256
    %v258 = vpop.f32.mrf.mxu0
    %v259 = vadd.f32 %v196, %v258
    %v260 = vpop.f32.mrf.mxu0
    %v261 = vpop.f32.mrf.mxu0
    %262 = vdwg.mxu0
    %v263 = vld [vmem:[%s2] sm:$0xff]
    %v264 = vld [vmem:[%s3] sm:$0xff]
    %v265 = vpack.c.bf16 %v178, %v178
    %v266 = vpack.c.bf16 %v257, %v257
    %v267 = vpack.c.bf16 %v259, %v259
    %v269 = vsel %vm74, %v265, 0
    %v272 = vsel %vm74, %v266, 0
    %274 = vmatprep.subr.bf16.mxu0 0
    %275 = vmatpush1.bf16.xpose.msra.mxu0 0
    %276 = vmatprep.subr.bf16.mxu0 0
    %277 = vmatpush1.bf16.xpose.msra.mxu0 0
    %278 = vmatprep.subr.bf16.mxu0 0
    %279 = vmatpush1.bf16.xpose.msra.mxu0 0
    %280 = vmatprep.subr.bf16.mxu0 0
    %281 = vmatpush1.bf16.xpose.msra.mxu0 0
    %282 = vmatprep.subr.bf16.mxu0 0
    %283 = vmatpush1.bf16.xpose.msra.mxu0 0
    %284 = vmatprep.subr.bf16.mxu0 0
    %285 = vmatpush1.bf16.xpose.msra.mxu0 0
    %286 = vmatprep.subr.bf16.mxu0 0
    %287 = vmatpush1.bf16.xpose.msra.mxu0 0
    %288 = vmatprep.subr.bf16.mxu0 0
    %289 = vmatpush1.bf16.xpose.msra.mxu0 %v272
    %290 = vmatprep.subr.bf16.mxu0 0
    %291 = vmatpush2.bf16.xpose.msra.mxu0 0
    %292 = vmatprep.subr.bf16.mxu0 0
    %293 = vmatpush2.bf16.xpose.msra.mxu0 0
    %294 = vmatprep.subr.bf16.mxu0 0
    %295 = vmatpush2.bf16.xpose.msra.mxu0 0
    %296 = vmatprep.subr.bf16.mxu0 0
    %297 = vmatpush2.bf16.xpose.msra.mxu0 0
    %298 = vmatprep.subr.bf16.mxu0 0
    %299 = vmatpush2.bf16.xpose.msra.mxu0 0
    %300 = vmatprep.subr.bf16.mxu0 0
    %301 = vmatpush2.bf16.xpose.msra.mxu0 0
    %302 = vmatprep.subr.bf16.mxu0 0
    %303 = vmatpush2.bf16.xpose.msra.mxu0 0
    %304 = vmatprep.subr.bf16.mxu0 0
    %305 = vmatpush2.bf16.xpose.msra.mxu0 0
    %306 = vmatprep.mubr.bf16.mxu0 0
    %307 = vmatmul.mubr.bf16.gmra.mxu0 %v269
    %v308 = vpop.f32.mrf.mxu0
    %v309 = vadd.f32 0.0, %v308
    %v310 = vpop.f32.mrf.mxu0
    %v311 = vpop.f32.mrf.mxu0
    %v312 = vpop.f32.mrf.mxu0
    %313 = vdwg.mxu0
    %v314 = vmul.f32 %v309, 0.17677669
    %v315 = vadd.f32 %v314, %v263
    %s316 = sld [smem:[#allocation5]]
    %v317 = vld [vmem:[%s4] sm:$0xf]
    %v318 = vunpack.c.l.bf16 %v317
    %v319 = vstv %s316
    %v320 = vmul.f32 %v319, %v318
    %v321 = vadd.f32 %v315, %v320
    %s322 = sld [smem:[#allocation5 + $0x1]]
    %s323 = scalar_lea.vmem %s4, 4
    %v324 = vld [vmem:[%s323] sm:$0xf]
    %v325 = vunpack.c.l.bf16 %v324
    %v326 = vstv %s322
    %v327 = vmul.f32 %v326, %v325
    %v328 = vadd.f32 %v321, %v327
    %s329 = sld [smem:[#allocation5 + $0x2]]
    %s330 = scalar_lea.vmem %s4, 8
    %v331 = vld [vmem:[%s330] sm:$0xf]
    %v332 = vunpack.c.l.bf16 %v331
    %v333 = vstv %s329
    %v334 = vmul.f32 %v333, %v332
    %v335 = vadd.f32 %v328, %v334
    %s336 = sld [smem:[#allocation5 + $0x3]]
    %s337 = scalar_lea.vmem %s4, 12
    %v338 = vld [vmem:[%s337] sm:$0xf]
    %v339 = vunpack.c.l.bf16 %v338
    %v340 = vstv %s336
    %v341 = vmul.f32 %v340, %v339
    %v342 = vadd.f32 %v335, %v341
    %s343 = sld [smem:[#allocation5 + $0x4]]
    %s344 = scalar_lea.vmem %s4, 16
    %v345 = vld [vmem:[%s344] sm:$0xf]
    %v346 = vunpack.c.l.bf16 %v345
    %v347 = vstv %s343
    %v348 = vmul.f32 %v347, %v346
    %v349 = vadd.f32 %v342, %v348
    %s350 = sld [smem:[#allocation5 + $0x5]]
    %s351 = scalar_lea.vmem %s4, 20
    %v352 = vld [vmem:[%s351] sm:$0xf]
    %v353 = vunpack.c.l.bf16 %v352
    %v354 = vstv %s350
    %v355 = vmul.f32 %v354, %v353
    %v356 = vadd.f32 %v349, %v355
    %s357 = sld [smem:[#allocation5 + $0x6]]
    %s358 = scalar_lea.vmem %s4, 24
    %v359 = vld [vmem:[%s358] sm:$0xf]
    %v360 = vunpack.c.l.bf16 %v359
    %v361 = vstv %s357
    %v362 = vmul.f32 %v361, %v360
    %v363 = vadd.f32 %v356, %v362
    %s364 = sld [smem:[#allocation5 + $0x7]]
    %s365 = scalar_lea.vmem %s4, 28
    %v366 = vld [vmem:[%s365] sm:$0xf]
    %v367 = vunpack.c.l.bf16 %v366
    %v368 = vstv %s364
    %v369 = vmul.f32 %v368, %v367
    %v370 = vadd.f32 %v363, %v369
    %s371 = sld [smem:[#allocation5 + $0x8]]
    %s372 = scalar_lea.vmem %s4, 32
    %v373 = vld [vmem:[%s372] sm:$0xf]
    %v374 = vunpack.c.l.bf16 %v373
    %v375 = vstv %s371
    %v376 = vmul.f32 %v375, %v374
    %v377 = vadd.f32 %v370, %v376
    %s378 = sld [smem:[#allocation5 + $0x9]]
    %s379 = scalar_lea.vmem %s4, 36
    %v380 = vld [vmem:[%s379] sm:$0xf]
    %v381 = vunpack.c.l.bf16 %v380
    %v382 = vstv %s378
    %v383 = vmul.f32 %v382, %v381
    %v384 = vadd.f32 %v377, %v383
    %s385 = sld [smem:[#allocation5 + $0xa]]
    %s386 = scalar_lea.vmem %s4, 40
    %v387 = vld [vmem:[%s386] sm:$0xf]
    %v388 = vunpack.c.l.bf16 %v387
    %v389 = vstv %s385
    %v390 = vmul.f32 %v389, %v388
    %v391 = vadd.f32 %v384, %v390
    %s392 = sld [smem:[#allocation5 + $0xb]]
    %s393 = scalar_lea.vmem %s4, 44
    %v394 = vld [vmem:[%s393] sm:$0xf]
    %v395 = vunpack.c.l.bf16 %v394
    %v396 = vstv %s392
    %v397 = vmul.f32 %v396, %v395
    %v398 = vadd.f32 %v391, %v397
    %s399 = sld [smem:[#allocation5 + $0xc]]
    %s400 = scalar_lea.vmem %s4, 48
    %v401 = vld [vmem:[%s400] sm:$0xf]
    %v402 = vunpack.c.l.bf16 %v401
    %v403 = vstv %s399
    %v404 = vmul.f32 %v403, %v402
    %v405 = vadd.f32 %v398, %v404
    %s406 = sld [smem:[#allocation5 + $0xd]]
    %s407 = scalar_lea.vmem %s4, 52
    %v408 = vld [vmem:[%s407] sm:$0xf]
    %v409 = vunpack.c.l.bf16 %v408
    %v410 = vstv %s406
    %v411 = vmul.f32 %v410, %v409
    %v412 = vadd.f32 %v405, %v411
    %s413 = sld [smem:[#allocation5 + $0xe]]
    %s414 = scalar_lea.vmem %s4, 56
    %v415 = vld [vmem:[%s414] sm:$0xf]
    %v416 = vunpack.c.l.bf16 %v415
    %v417 = vstv %s413
    %v418 = vmul.f32 %v417, %v416
    %v419 = vadd.f32 %v412, %v418
    %s420 = sld [smem:[#allocation5 + $0xf]]
    %s421 = scalar_lea.vmem %s4, 60
    %v422 = vld [vmem:[%s421] sm:$0xf]
    %v423 = vunpack.c.l.bf16 %v422
    %v424 = vstv %s420
    %v425 = vmul.f32 %v424, %v423
    %v426 = vadd.f32 %v419, %v425
    %v427 = vmul.f32 %v426, %v264
    %v428 = vld [vmem:[#allocation3] sm:$0xff]
    %vm429 = vcmask 64512
    %v430 = vsel %vm429, %v427, -inf
    %431 = vmax.xlane.f32.xlu0 %v430
    %v432 = vpop.xlane.xlu0 %431
    %v433 = vmax.f32 %v428, %v432
    %v434 = vsub.f32 %v428, %v433
    %v435 = vmul.f32 %v434, 1.442695
    %v436 = vpow.pop %v435
    %438 = vset.pattern.permute.xlu0 0
    %439 = vperm.xlu0 %438, %v433
    %v440 = vpop.permute.xlu0 %439
    %v442 = vsub.f32 %v427, %v440
    %v443 = vmul.f32 %v442, 1.442695
    %v444 = vpow.pop %v443
    %v445 = vld [vmem:[#allocation4] sm:$0xff]
    %v446 = vmul.f32 %v436, %v445
    %v447 = vsel %vm429, %v444, 0.0
    %448 = vadd.xlane.f32.xlu0 %v447
    %v449 = vpop.xlane.xlu0 %448
    %v450 = vadd.f32 %v446, %v449
    %vm451 = vcmask 7168
    %452 = vst.msk [vmem:[#allocation4] sm:$0xff] %vm451, %v450
    %453 = vst.msk [vmem:[#allocation3] sm:$0xff] %vm451, %v433
    %v454 = vpack.c.bf16 %v444, %v444
    %v456 = vsel %vm429, %v454, 0
    %vm458 = vcmask 1043456
    %v460 = vsel %vm458, %v267, 0
    %462 = vmatprep.subr.bf16.mxu0 0
    %463 = vmatpush1.bf16.msra.mxu0 0
    %464 = vmatprep.subr.bf16.mxu0 0
    %465 = vmatpush1.bf16.msra.mxu0 0
    %466 = vmatprep.subr.bf16.mxu0 0
    %467 = vmatpush1.bf16.msra.mxu0 0
    %468 = vmatprep.subr.bf16.mxu0 0
    %469 = vmatpush1.bf16.msra.mxu0 0
    %470 = vmatprep.subr.bf16.mxu0 0
    %471 = vmatpush1.bf16.msra.mxu0 0
    %472 = vmatprep.subr.bf16.mxu0 0
    %473 = vmatpush1.bf16.msra.mxu0 0
    %474 = vmatprep.subr.bf16.mxu0 0
    %475 = vmatpush1.bf16.msra.mxu0 0
    %476 = vmatprep.subr.bf16.mxu0 0
    %477 = vmatpush1.bf16.msra.mxu0 %v460
    %478 = vmatprep.subr.bf16.mxu0 0
    %479 = vmatpush2.bf16.msra.mxu0 0
    %480 = vmatprep.subr.bf16.mxu0 0
    %481 = vmatpush2.bf16.msra.mxu0 0
    %482 = vmatprep.subr.bf16.mxu0 0
    %483 = vmatpush2.bf16.msra.mxu0 0
    %484 = vmatprep.subr.bf16.mxu0 0
    %485 = vmatpush2.bf16.msra.mxu0 0
    %486 = vmatprep.subr.bf16.mxu0 0
    %487 = vmatpush2.bf16.msra.mxu0 0
    %488 = vmatprep.subr.bf16.mxu0 0
    %489 = vmatpush2.bf16.msra.mxu0 0
    %490 = vmatprep.subr.bf16.mxu0 0
    %491 = vmatpush2.bf16.msra.mxu0 0
    %492 = vmatprep.subr.bf16.mxu0 0
    %493 = vmatpush2.bf16.msra.mxu0 0
    %494 = vmatprep.mubr.bf16.mxu0 0
    %495 = vmatmul.mubr.bf16.gmra.mxu0 %v456
    %v496 = vpop.f32.mrf.mxu0
    %v497 = vadd.f32 0.0, %v496
    %v498 = vpop.f32.mrf.mxu0
    %v499 = vpop.f32.mrf.mxu0
    %v500 = vpop.f32.mrf.mxu0
    %501 = vdwg.mxu0
    %v502 = vld [vmem:[#allocation2] sm:$0xff]
    %504 = vset.pattern.permute.xlu0 0
    %505 = vperm.xlu0 %504, %v436
    %v506 = vpop.permute.xlu0 %505
    %v508 = vmul.f32 %v506, %v502
    %v509 = vadd.f32 %v508, %v497
    %510 = vst.msk [vmem:[#allocation2] sm:$0xff] %vm74, %v509
    %512 = vrot.lane.b32.xlu0 %v265, 96
    %v513 = vpop.permute.xlu0 %512
    %515 = vrot.lane.b32.xlu0 %v266, 96
    %v516 = vpop.permute.xlu0 %515
    %v518 = vsel %vm74, %v513, 0
    %v521 = vsel %vm74, %v516, 0
    %523 = vmatprep.subr.bf16.mxu0 0
    %524 = vmatpush1.bf16.xpose.msra.mxu0 0
    %525 = vmatprep.subr.bf16.mxu0 0
    %526 = vmatpush1.bf16.xpose.msra.mxu0 0
    %527 = vmatprep.subr.bf16.mxu0 0
    %528 = vmatpush1.bf16.xpose.msra.mxu0 0
    %529 = vmatprep.subr.bf16.mxu0 0
    %530 = vmatpush1.bf16.xpose.msra.mxu0 0
    %531 = vmatprep.subr.bf16.mxu0 0
    %532 = vmatpush1.bf16.xpose.msra.mxu0 0
    %533 = vmatprep.subr.bf16.mxu0 0
    %534 = vmatpush1.bf16.xpose.msra.mxu0 0
    %535 = vmatprep.subr.bf16.mxu0 0
    %536 = vmatpush1.bf16.xpose.msra.mxu0 0
    %537 = vmatprep.subr.bf16.mxu0 0
    %538 = vmatpush1.bf16.xpose.msra.mxu0 %v521
    %539 = vmatprep.subr.bf16.mxu0 0
    %540 = vmatpush2.bf16.xpose.msra.mxu0 0
    %541 = vmatprep.subr.bf16.mxu0 0
    %542 = vmatpush2.bf16.xpose.msra.mxu0 0
    %543 = vmatprep.subr.bf16.mxu0 0
    %544 = vmatpush2.bf16.xpose.msra.mxu0 0
    %545 = vmatprep.subr.bf16.mxu0 0
    %546 = vmatpush2.bf16.xpose.msra.mxu0 0
    %547 = vmatprep.subr.bf16.mxu0 0
    %548 = vmatpush2.bf16.xpose.msra.mxu0 0
    %549 = vmatprep.subr.bf16.mxu0 0
    %550 = vmatpush2.bf16.xpose.msra.mxu0 0
    %551 = vmatprep.subr.bf16.mxu0 0
    %552 = vmatpush2.bf16.xpose.msra.mxu0 0
    %553 = vmatprep.subr.bf16.mxu0 0
    %554 = vmatpush2.bf16.xpose.msra.mxu0 0
    %555 = vmatprep.mubr.bf16.mxu0 0
    %556 = vmatmul.mubr.bf16.gmra.mxu0 %v518
    %v557 = vpop.f32.mrf.mxu0
    %v558 = vadd.f32 0.0, %v557
    %v559 = vpop.f32.mrf.mxu0
    %v560 = vpop.f32.mrf.mxu0
    %v561 = vpop.f32.mrf.mxu0
    %562 = vdwg.mxu0
    %v563 = vmul.f32 %v558, 0.17677669
    %v564 = vadd.f32 %v563, %v263
    %s565 = sld [smem:[#allocation5 + $0x80]]
    %v566 = vld [vmem:[%s4] sm:$0xf]
    %v567 = vunpack.c.l.bf16 %v566
    %v568 = vstv %s565
    %v569 = vmul.f32 %v568, %v567
    %v570 = vadd.f32 %v564, %v569
    %s571 = sld [smem:[#allocation5 + $0x81]]
    %v572 = vld [vmem:[%s323] sm:$0xf]
    %v573 = vunpack.c.l.bf16 %v572
    %v574 = vstv %s571
    %v575 = vmul.f32 %v574, %v573
    %v576 = vadd.f32 %v570, %v575
    %s577 = sld [smem:[#allocation5 + $0x82]]
    %v578 = vld [vmem:[%s330] sm:$0xf]
    %v579 = vunpack.c.l.bf16 %v578
    %v580 = vstv %s577
    %v581 = vmul.f32 %v580, %v579
    %v582 = vadd.f32 %v576, %v581
    %s583 = sld [smem:[#allocation5 + $0x83]]
    %v584 = vld [vmem:[%s337] sm:$0xf]
    %v585 = vunpack.c.l.bf16 %v584
    %v586 = vstv %s583
    %v587 = vmul.f32 %v586, %v585
    %v588 = vadd.f32 %v582, %v587
    %s589 = sld [smem:[#allocation5 + $0x84]]
    %v590 = vld [vmem:[%s344] sm:$0xf]
    %v591 = vunpack.c.l.bf16 %v590
    %v592 = vstv %s589
    %v593 = vmul.f32 %v592, %v591
    %v594 = vadd.f32 %v588, %v593
    %s595 = sld [smem:[#allocation5 + $0x85]]
    %v596 = vld [vmem:[%s351] sm:$0xf]
    %v597 = vunpack.c.l.bf16 %v596
    %v598 = vstv %s595
    %v599 = vmul.f32 %v598, %v597
    %v600 = vadd.f32 %v594, %v599
    %s601 = sld [smem:[#allocation5 + $0x86]]
    %v602 = vld [vmem:[%s358] sm:$0xf]
    %v603 = vunpack.c.l.bf16 %v602
    %v604 = vstv %s601
    %v605 = vmul.f32 %v604, %v603
    %v606 = vadd.f32 %v600, %v605
    %s607 = sld [smem:[#allocation5 + $0x87]]
    %v608 = vld [vmem:[%s365] sm:$0xf]
    %v609 = vunpack.c.l.bf16 %v608
    %v610 = vstv %s607
    %v611 = vmul.f32 %v610, %v609
    %v612 = vadd.f32 %v606, %v611
    %s613 = sld [smem:[#allocation5 + $0x88]]
    %v614 = vld [vmem:[%s372] sm:$0xf]
    %v615 = vunpack.c.l.bf16 %v614
    %v616 = vstv %s613
    %v617 = vmul.f32 %v616, %v615
    %v618 = vadd.f32 %v612, %v617
    %s619 = sld [smem:[#allocation5 + $0x89]]
    %v620 = vld [vmem:[%s379] sm:$0xf]
    %v621 = vunpack.c.l.bf16 %v620
    %v622 = vstv %s619
    %v623 = vmul.f32 %v622, %v621
    %v624 = vadd.f32 %v618, %v623
    %s625 = sld [smem:[#allocation5 + $0x8a]]
    %v626 = vld [vmem:[%s386] sm:$0xf]
    %v627 = vunpack.c.l.bf16 %v626
    %v628 = vstv %s625
    %v629 = vmul.f32 %v628, %v627
    %v630 = vadd.f32 %v624, %v629
    %s631 = sld [smem:[#allocation5 + $0x8b]]
    %v632 = vld [vmem:[%s393] sm:$0xf]
    %v633 = vunpack.c.l.bf16 %v632
    %v634 = vstv %s631
    %v635 = vmul.f32 %v634, %v633
    %v636 = vadd.f32 %v630, %v635
    %s637 = sld [smem:[#allocation5 + $0x8c]]
    %v638 = vld [vmem:[%s400] sm:$0xf]
    %v639 = vunpack.c.l.bf16 %v638
    %v640 = vstv %s637
    %v641 = vmul.f32 %v640, %v639
    %v642 = vadd.f32 %v636, %v641
    %s643 = sld [smem:[#allocation5 + $0x8d]]
    %v644 = vld [vmem:[%s407] sm:$0xf]
    %v645 = vunpack.c.l.bf16 %v644
    %v646 = vstv %s643
    %v647 = vmul.f32 %v646, %v645
    %v648 = vadd.f32 %v642, %v647
    %s649 = sld [smem:[#allocation5 + $0x8e]]
    %v650 = vld [vmem:[%s414] sm:$0xf]
    %v651 = vunpack.c.l.bf16 %v650
    %v652 = vstv %s649
    %v653 = vmul.f32 %v652, %v651
    %v654 = vadd.f32 %v648, %v653
    %s655 = sld [smem:[#allocation5 + $0x8f]]
    %v656 = vld [vmem:[%s421] sm:$0xf]
    %v657 = vunpack.c.l.bf16 %v656
    %v658 = vstv %s655
    %v659 = vmul.f32 %v658, %v657
    %v660 = vadd.f32 %v654, %v659
    %v661 = vmul.f32 %v660, %v264
    %s662 = scalar_lea.vmem [#allocation3], 8
    %v663 = vld [vmem:[%s662] sm:$0xff]
    %v664 = vsel %vm429, %v661, -inf
    %665 = vmax.xlane.f32.xlu0 %v664
    %v666 = vpop.xlane.xlu0 %665
    %v667 = vmax.f32 %v663, %v666
    %v668 = vsub.f32 %v663, %v667
    %v669 = vmul.f32 %v668, 1.442695
    %v670 = vpow.pop %v669
    %672 = vset.pattern.permute.xlu0 0
    %673 = vperm.xlu0 %672, %v667
    %v674 = vpop.permute.xlu0 %673
    %v676 = vsub.f32 %v661, %v674
    %v677 = vmul.f32 %v676, 1.442695
    %v678 = vpow.pop %v677
    %s679 = scalar_lea.vmem [#allocation4], 8
    %v680 = vld [vmem:[%s679] sm:$0xff]
    %v681 = vmul.f32 %v670, %v680
    %v682 = vsel %vm429, %v678, 0.0
    %683 = vadd.xlane.f32.xlu0 %v682
    %v684 = vpop.xlane.xlu0 %683
    %v685 = vadd.f32 %v681, %v684
    %686 = vst.msk [vmem:[%s679] sm:$0xff] %vm451, %v685
    %687 = vst.msk [vmem:[%s662] sm:$0xff] %vm451, %v667
    %v688 = vpack.c.bf16 %v678, %v678
    %690 = vrot.lane.b32.xlu0 %v267, 96
    %v691 = vpop.permute.xlu0 %690
    %v693 = vsel %vm429, %v688, 0
    %v696 = vsel %vm458, %v691, 0
    %698 = vmatprep.subr.bf16.mxu0 0
    %699 = vmatpush1.bf16.msra.mxu0 0
    %700 = vmatprep.subr.bf16.mxu0 0
    %701 = vmatpush1.bf16.msra.mxu0 0
    %702 = vmatprep.subr.bf16.mxu0 0
    %703 = vmatpush1.bf16.msra.mxu0 0
    %704 = vmatprep.subr.bf16.mxu0 0
    %705 = vmatpush1.bf16.msra.mxu0 0
    %706 = vmatprep.subr.bf16.mxu0 0
    %707 = vmatpush1.bf16.msra.mxu0 0
    %708 = vmatprep.subr.bf16.mxu0 0
    %709 = vmatpush1.bf16.msra.mxu0 0
    %710 = vmatprep.subr.bf16.mxu0 0
    %711 = vmatpush1.bf16.msra.mxu0 0
    %712 = vmatprep.subr.bf16.mxu0 0
    %713 = vmatpush1.bf16.msra.mxu0 %v696
    %714 = vmatprep.subr.bf16.mxu0 0
    %715 = vmatpush2.bf16.msra.mxu0 0
    %716 = vmatprep.subr.bf16.mxu0 0
    %717 = vmatpush2.bf16.msra.mxu0 0
    %718 = vmatprep.subr.bf16.mxu0 0
    %719 = vmatpush2.bf16.msra.mxu0 0
    %720 = vmatprep.subr.bf16.mxu0 0
    %721 = vmatpush2.bf16.msra.mxu0 0
    %722 = vmatprep.subr.bf16.mxu0 0
    %723 = vmatpush2.bf16.msra.mxu0 0
    %724 = vmatprep.subr.bf16.mxu0 0
    %725 = vmatpush2.bf16.msra.mxu0 0
    %726 = vmatprep.subr.bf16.mxu0 0
    %727 = vmatpush2.bf16.msra.mxu0 0
    %728 = vmatprep.subr.bf16.mxu0 0
    %729 = vmatpush2.bf16.msra.mxu0 0
    %730 = vmatprep.mubr.bf16.mxu0 0
    %731 = vmatmul.mubr.bf16.gmra.mxu0 %v693
    %v732 = vpop.f32.mrf.mxu0
    %v733 = vadd.f32 0.0, %v732
    %v734 = vpop.f32.mrf.mxu0
    %v735 = vpop.f32.mrf.mxu0
    %v736 = vpop.f32.mrf.mxu0
    %737 = vdwg.mxu0
    %v738 = vld [vmem:[#allocation2] sm:$0xff]
    %740 = vset.pattern.permute.xlu0 0
    %741 = vperm.xlu0 %740, %v670
    %v742 = vpop.permute.xlu0 %741
    %v744 = vmul.f32 %v742, %v738
    %746 = vrot.lane.b32.xlu0 %v733, 32
    %v747 = vpop.permute.xlu0 %746
    %v749 = vadd.f32 %v744, %v747
    %vm750 = vcmask 523520
    %751 = vst.msk [vmem:[#allocation2] sm:$0xff] %vm750, %v749
    %752 = vrot.lane.b32.xlu0 %v265, 64
    %v753 = vpop.permute.xlu0 %752
    %754 = vrot.lane.b32.xlu0 %v266, 64
    %v755 = vpop.permute.xlu0 %754
    %v757 = vsel %vm74, %v753, 0
    %v760 = vsel %vm74, %v755, 0
    %762 = vmatprep.subr.bf16.mxu0 0
    %763 = vmatpush1.bf16.xpose.msra.mxu0 0
    %764 = vmatprep.subr.bf16.mxu0 0
    %765 = vmatpush1.bf16.xpose.msra.mxu0 0
    %766 = vmatprep.subr.bf16.mxu0 0
    %767 = vmatpush1.bf16.xpose.msra.mxu0 0
    %768 = vmatprep.subr.bf16.mxu0 0
    %769 = vmatpush1.bf16.xpose.msra.mxu0 0
    %770 = vmatprep.subr.bf16.mxu0 0
    %771 = vmatpush1.bf16.xpose.msra.mxu0 0
    %772 = vmatprep.subr.bf16.mxu0 0
    %773 = vmatpush1.bf16.xpose.msra.mxu0 0
    %774 = vmatprep.subr.bf16.mxu0 0
    %775 = vmatpush1.bf16.xpose.msra.mxu0 0
    %776 = vmatprep.subr.bf16.mxu0 0
    %777 = vmatpush1.bf16.xpose.msra.mxu0 %v760
    %778 = vmatprep.subr.bf16.mxu0 0
    %779 = vmatpush2.bf16.xpose.msra.mxu0 0
    %780 = vmatprep.subr.bf16.mxu0 0
    %781 = vmatpush2.bf16.xpose.msra.mxu0 0
    %782 = vmatprep.subr.bf16.mxu0 0
    %783 = vmatpush2.bf16.xpose.msra.mxu0 0
    %784 = vmatprep.subr.bf16.mxu0 0
    %785 = vmatpush2.bf16.xpose.msra.mxu0 0
    %786 = vmatprep.subr.bf16.mxu0 0
    %787 = vmatpush2.bf16.xpose.msra.mxu0 0
    %788 = vmatprep.subr.bf16.mxu0 0
    %789 = vmatpush2.bf16.xpose.msra.mxu0 0
    %790 = vmatprep.subr.bf16.mxu0 0
    %791 = vmatpush2.bf16.xpose.msra.mxu0 0
    %792 = vmatprep.subr.bf16.mxu0 0
    %793 = vmatpush2.bf16.xpose.msra.mxu0 0
    %794 = vmatprep.mubr.bf16.mxu0 0
    %795 = vmatmul.mubr.bf16.gmra.mxu0 %v757
    %v796 = vpop.f32.mrf.mxu0
    %v797 = vadd.f32 0.0, %v796
    %v798 = vpop.f32.mrf.mxu0
    %v799 = vpop.f32.mrf.mxu0
    %v800 = vpop.f32.mrf.mxu0
    %801 = vdwg.mxu0
    %v802 = vmul.f32 %v797, 0.17677669
    %v803 = vadd.f32 %v802, %v263
    %s804 = sld [smem:[#allocation5 + $0x100]]
    %v805 = vld [vmem:[%s4] sm:$0xf]
    %v806 = vunpack.c.l.bf16 %v805
    %v807 = vstv %s804
    %v808 = vmul.f32 %v807, %v806
    %v809 = vadd.f32 %v803, %v808
    %s810 = sld [smem:[#allocation5 + $0x101]]
    %v811 = vld [vmem:[%s323] sm:$0xf]
    %v812 = vunpack.c.l.bf16 %v811
    %v813 = vstv %s810
    %v814 = vmul.f32 %v813, %v812
    %v815 = vadd.f32 %v809, %v814
    %s816 = sld [smem:[#allocation5 + $0x102]]
    %v817 = vld [vmem:[%s330] sm:$0xf]
    %v818 = vunpack.c.l.bf16 %v817
    %v819 = vstv %s816
    %v820 = vmul.f32 %v819, %v818
    %v821 = vadd.f32 %v815, %v820
    %s822 = sld [smem:[#allocation5 + $0x103]]
    %v823 = vld [vmem:[%s337] sm:$0xf]
    %v824 = vunpack.c.l.bf16 %v823
    %v825 = vstv %s822
    %v826 = vmul.f32 %v825, %v824
    %v827 = vadd.f32 %v821, %v826
    %s828 = sld [smem:[#allocation5 + $0x104]]
    %v829 = vld [vmem:[%s344] sm:$0xf]
    %v830 = vunpack.c.l.bf16 %v829
    %v831 = vstv %s828
    %v832 = vmul.f32 %v831, %v830
    %v833 = vadd.f32 %v827, %v832
    %s834 = sld [smem:[#allocation5 + $0x105]]
    %v835 = vld [vmem:[%s351] sm:$0xf]
    %v836 = vunpack.c.l.bf16 %v835
    %v837 = vstv %s834
    %v838 = vmul.f32 %v837, %v836
    %v839 = vadd.f32 %v833, %v838
    %s840 = sld [smem:[#allocation5 + $0x106]]
    %v841 = vld [vmem:[%s358] sm:$0xf]
    %v842 = vunpack.c.l.bf16 %v841
    %v843 = vstv %s840
    %v844 = vmul.f32 %v843, %v842
    %v845 = vadd.f32 %v839, %v844
    %s846 = sld [smem:[#allocation5 + $0x107]]
    %v847 = vld [vmem:[%s365] sm:$0xf]
    %v848 = vunpack.c.l.bf16 %v847
    %v849 = vstv %s846
    %v850 = vmul.f32 %v849, %v848
    %v851 = vadd.f32 %v845, %v850
    %s852 = sld [smem:[#allocation5 + $0x108]]
    %v853 = vld [vmem:[%s372] sm:$0xf]
    %v854 = vunpack.c.l.bf16 %v853
    %v855 = vstv %s852
    %v856 = vmul.f32 %v855, %v854
    %v857 = vadd.f32 %v851, %v856
    %s858 = sld [smem:[#allocation5 + $0x109]]
    %v859 = vld [vmem:[%s379] sm:$0xf]
    %v860 = vunpack.c.l.bf16 %v859
    %v861 = vstv %s858
    %v862 = vmul.f32 %v861, %v860
    %v863 = vadd.f32 %v857, %v862
    %s864 = sld [smem:[#allocation5 + $0x10a]]
    %v865 = vld [vmem:[%s386] sm:$0xf]
    %v866 = vunpack.c.l.bf16 %v865
    %v867 = vstv %s864
    %v868 = vmul.f32 %v867, %v866
    %v869 = vadd.f32 %v863, %v868
    %s870 = sld [smem:[#allocation5 + $0x10b]]
    %v871 = vld [vmem:[%s393] sm:$0xf]
    %v872 = vunpack.c.l.bf16 %v871
    %v873 = vstv %s870
    %v874 = vmul.f32 %v873, %v872
    %v875 = vadd.f32 %v869, %v874
    %s876 = sld [smem:[#allocation5 + $0x10c]]
    %v877 = vld [vmem:[%s400] sm:$0xf]
    %v878 = vunpack.c.l.bf16 %v877
    %v879 = vstv %s876
    %v880 = vmul.f32 %v879, %v878
    %v881 = vadd.f32 %v875, %v880
    %s882 = sld [smem:[#allocation5 + $0x10d]]
    %v883 = vld [vmem:[%s407] sm:$0xf]
    %v884 = vunpack.c.l.bf16 %v883
    %v885 = vstv %s882
    %v886 = vmul.f32 %v885, %v884
    %v887 = vadd.f32 %v881, %v886
    %s888 = sld [smem:[#allocation5 + $0x10e]]
    %v889 = vld [vmem:[%s414] sm:$0xf]
    %v890 = vunpack.c.l.bf16 %v889
    %v891 = vstv %s888
    %v892 = vmul.f32 %v891, %v890
    %v893 = vadd.f32 %v887, %v892
    %s894 = sld [smem:[#allocation5 + $0x10f]]
    %v895 = vld [vmem:[%s421] sm:$0xf]
    %v896 = vunpack.c.l.bf16 %v895
    %v897 = vstv %s894
    %v898 = vmul.f32 %v897, %v896
    %v899 = vadd.f32 %v893, %v898
    %v900 = vmul.f32 %v899, %v264
    %s901 = scalar_lea.vmem [#allocation3], 16
    %v902 = vld [vmem:[%s901] sm:$0xff]
    %v903 = vsel %vm429, %v900, -inf
    %904 = vmax.xlane.f32.xlu0 %v903
    %v905 = vpop.xlane.xlu0 %904
    %v906 = vmax.f32 %v902, %v905
    %v907 = vsub.f32 %v902, %v906
    %v908 = vmul.f32 %v907, 1.442695
    %v909 = vpow.pop %v908
    %911 = vset.pattern.permute.xlu0 0
    %912 = vperm.xlu0 %911, %v906
    %v913 = vpop.permute.xlu0 %912
    %v915 = vsub.f32 %v900, %v913
    %v916 = vmul.f32 %v915, 1.442695
    %v917 = vpow.pop %v916
    %s918 = scalar_lea.vmem [#allocation4], 16
    %v919 = vld [vmem:[%s918] sm:$0xff]
    %v920 = vmul.f32 %v909, %v919
    %v921 = vsel %vm429, %v917, 0.0
    %922 = vadd.xlane.f32.xlu0 %v921
    %v923 = vpop.xlane.xlu0 %922
    %v924 = vadd.f32 %v920, %v923
    %925 = vst.msk [vmem:[%s918] sm:$0xff] %vm451, %v924
    %926 = vst.msk [vmem:[%s901] sm:$0xff] %vm451, %v906
    %v927 = vpack.c.bf16 %v917, %v917
    %928 = vrot.lane.b32.xlu0 %v267, 64
    %v929 = vpop.permute.xlu0 %928
    %v931 = vsel %vm429, %v927, 0
    %v934 = vsel %vm458, %v929, 0
    %936 = vmatprep.subr.bf16.mxu0 0
    %937 = vmatpush1.bf16.msra.mxu0 0
    %938 = vmatprep.subr.bf16.mxu0 0
    %939 = vmatpush1.bf16.msra.mxu0 0
    %940 = vmatprep.subr.bf16.mxu0 0
    %941 = vmatpush1.bf16.msra.mxu0 0
    %942 = vmatprep.subr.bf16.mxu0 0
    %943 = vmatpush1.bf16.msra.mxu0 0
    %944 = vmatprep.subr.bf16.mxu0 0
    %945 = vmatpush1.bf16.msra.mxu0 0
    %946 = vmatprep.subr.bf16.mxu0 0
    %947 = vmatpush1.bf16.msra.mxu0 0
    %948 = vmatprep.subr.bf16.mxu0 0
    %949 = vmatpush1.bf16.msra.mxu0 0
    %950 = vmatprep.subr.bf16.mxu0 0
    %951 = vmatpush1.bf16.msra.mxu0 %v934
    %952 = vmatprep.subr.bf16.mxu0 0
    %953 = vmatpush2.bf16.msra.mxu0 0
    %954 = vmatprep.subr.bf16.mxu0 0
    %955 = vmatpush2.bf16.msra.mxu0 0
    %956 = vmatprep.subr.bf16.mxu0 0
    %957 = vmatpush2.bf16.msra.mxu0 0
    %958 = vmatprep.subr.bf16.mxu0 0
    %959 = vmatpush2.bf16.msra.mxu0 0
    %960 = vmatprep.subr.bf16.mxu0 0
    %961 = vmatpush2.bf16.msra.mxu0 0
    %962 = vmatprep.subr.bf16.mxu0 0
    %963 = vmatpush2.bf16.msra.mxu0 0
    %964 = vmatprep.subr.bf16.mxu0 0
    %965 = vmatpush2.bf16.msra.mxu0 0
    %966 = vmatprep.subr.bf16.mxu0 0
    %967 = vmatpush2.bf16.msra.mxu0 0
    %968 = vmatprep.mubr.bf16.mxu0 0
    %969 = vmatmul.mubr.bf16.gmra.mxu0 %v931
    %v970 = vpop.f32.mrf.mxu0
    %v971 = vadd.f32 0.0, %v970
    %v972 = vpop.f32.mrf.mxu0
    %v973 = vpop.f32.mrf.mxu0
    %v974 = vpop.f32.mrf.mxu0
    %975 = vdwg.mxu0
    %v976 = vld [vmem:[#allocation2] sm:$0xff]
    %978 = vset.pattern.permute.xlu0 0
    %979 = vperm.xlu0 %978, %v909
    %v980 = vpop.permute.xlu0 %979
    %v982 = vmul.f32 %v980, %v976
    %984 = vrot.lane.b32.xlu0 %v971, 64
    %v985 = vpop.permute.xlu0 %984
    %v987 = vadd.f32 %v982, %v985
    %vm988 = vcmask 785920
    %989 = vst.msk [vmem:[#allocation2] sm:$0xff] %vm988, %v987
    %990 = vrot.lane.b32.xlu0 %v265, 32
    %v991 = vpop.permute.xlu0 %990
    %992 = vrot.lane.b32.xlu0 %v266, 32
    %v993 = vpop.permute.xlu0 %992
    %v995 = vsel %vm74, %v991, 0
    %v998 = vsel %vm74, %v993, 0
    %1000 = vmatprep.subr.bf16.mxu0 0
    %1001 = vmatpush1.bf16.xpose.msra.mxu0 0
    %1002 = vmatprep.subr.bf16.mxu0 0
    %1003 = vmatpush1.bf16.xpose.msra.mxu0 0
    %1004 = vmatprep.subr.bf16.mxu0 0
    %1005 = vmatpush1.bf16.xpose.msra.mxu0 0
    %1006 = vmatprep.subr.bf16.mxu0 0
    %1007 = vmatpush1.bf16.xpose.msra.mxu0 0
    %1008 = vmatprep.subr.bf16.mxu0 0
    %1009 = vmatpush1.bf16.xpose.msra.mxu0 0
    %1010 = vmatprep.subr.bf16.mxu0 0
    %1011 = vmatpush1.bf16.xpose.msra.mxu0 0
    %1012 = vmatprep.subr.bf16.mxu0 0
    %1013 = vmatpush1.bf16.xpose.msra.mxu0 0
    %1014 = vmatprep.subr.bf16.mxu0 0
    %1015 = vmatpush1.bf16.xpose.msra.mxu0 %v998
    %1016 = vmatprep.subr.bf16.mxu0 0
    %1017 = vmatpush2.bf16.xpose.msra.mxu0 0
    %1018 = vmatprep.subr.bf16.mxu0 0
    %1019 = vmatpush2.bf16.xpose.msra.mxu0 0
    %1020 = vmatprep.subr.bf16.mxu0 0
    %1021 = vmatpush2.bf16.xpose.msra.mxu0 0
    %1022 = vmatprep.subr.bf16.mxu0 0
    %1023 = vmatpush2.bf16.xpose.msra.mxu0 0
    %1024 = vmatprep.subr.bf16.mxu0 0
    %1025 = vmatpush2.bf16.xpose.msra.mxu0 0
    %1026 = vmatprep.subr.bf16.mxu0 0
    %1027 = vmatpush2.bf16.xpose.msra.mxu0 0
    %1028 = vmatprep.subr.bf16.mxu0 0
    %1029 = vmatpush2.bf16.xpose.msra.mxu0 0
    %1030 = vmatprep.subr.bf16.mxu0 0
    %1031 = vmatpush2.bf16.xpose.msra.mxu0 0
    %1032 = vmatprep.mubr.bf16.mxu0 0
    %1033 = vmatmul.mubr.bf16.gmra.mxu0 %v995
    %v1034 = vpop.f32.mrf.mxu0
    %v1035 = vadd.f32 0.0, %v1034
    %v1036 = vpop.f32.mrf.mxu0
    %v1037 = vpop.f32.mrf.mxu0
    %v1038 = vpop.f32.mrf.mxu0
    %1039 = vdwg.mxu0
    %v1040 = vmul.f32 %v1035, 0.17677669
    %v1041 = vadd.f32 %v1040, %v263
    %s1042 = sld [smem:[#allocation5 + $0x180]]
    %v1043 = vld [vmem:[%s4] sm:$0xf]
    %v1044 = vunpack.c.l.bf16 %v1043
    %v1045 = vstv %s1042
    %v1046 = vmul.f32 %v1045, %v1044
    %v1047 = vadd.f32 %v1041, %v1046
    %s1048 = sld [smem:[#allocation5 + $0x181]]
    %v1049 = vld [vmem:[%s323] sm:$0xf]
    %v1050 = vunpack.c.l.bf16 %v1049
    %v1051 = vstv %s1048
    %v1052 = vmul.f32 %v1051, %v1050
    %v1053 = vadd.f32 %v1047, %v1052
    %s1054 = sld [smem:[#allocation5 + $0x182]]
    %v1055 = vld [vmem:[%s330] sm:$0xf]
    %v1056 = vunpack.c.l.bf16 %v1055
    %v1057 = vstv %s1054
    %v1058 = vmul.f32 %v1057, %v1056
    %v1059 = vadd.f32 %v1053, %v1058
    %s1060 = sld [smem:[#allocation5 + $0x183]]
    %v1061 = vld [vmem:[%s337] sm:$0xf]
    %v1062 = vunpack.c.l.bf16 %v1061
    %v1063 = vstv %s1060
    %v1064 = vmul.f32 %v1063, %v1062
    %v1065 = vadd.f32 %v1059, %v1064
    %s1066 = sld [smem:[#allocation5 + $0x184]]
    %v1067 = vld [vmem:[%s344] sm:$0xf]
    %v1068 = vunpack.c.l.bf16 %v1067
    %v1069 = vstv %s1066
    %v1070 = vmul.f32 %v1069, %v1068
    %v1071 = vadd.f32 %v1065, %v1070
    %s1072 = sld [smem:[#allocation5 + $0x185]]
    %v1073 = vld [vmem:[%s351] sm:$0xf]
    %v1074 = vunpack.c.l.bf16 %v1073
    %v1075 = vstv %s1072
    %v1076 = vmul.f32 %v1075, %v1074
    %v1077 = vadd.f32 %v1071, %v1076
    %s1078 = sld [smem:[#allocation5 + $0x186]]
    %v1079 = vld [vmem:[%s358] sm:$0xf]
    %v1080 = vunpack.c.l.bf16 %v1079
    %v1081 = vstv %s1078
    %v1082 = vmul.f32 %v1081, %v1080
    %v1083 = vadd.f32 %v1077, %v1082
    %s1084 = sld [smem:[#allocation5 + $0x187]]
    %v1085 = vld [vmem:[%s365] sm:$0xf]
    %v1086 = vunpack.c.l.bf16 %v1085
    %v1087 = vstv %s1084
    %v1088 = vmul.f32 %v1087, %v1086
    %v1089 = vadd.f32 %v1083, %v1088
    %s1090 = sld [smem:[#allocation5 + $0x188]]
    %v1091 = vld [vmem:[%s372] sm:$0xf]
    %v1092 = vunpack.c.l.bf16 %v1091
    %v1093 = vstv %s1090
    %v1094 = vmul.f32 %v1093, %v1092
    %v1095 = vadd.f32 %v1089, %v1094
    %s1096 = sld [smem:[#allocation5 + $0x189]]
    %v1097 = vld [vmem:[%s379] sm:$0xf]
    %v1098 = vunpack.c.l.bf16 %v1097
    %v1099 = vstv %s1096
    %v1100 = vmul.f32 %v1099, %v1098
    %v1101 = vadd.f32 %v1095, %v1100
    %s1102 = sld [smem:[#allocation5 + $0x18a]]
    %v1103 = vld [vmem:[%s386] sm:$0xf]
    %v1104 = vunpack.c.l.bf16 %v1103
    %v1105 = vstv %s1102
    %v1106 = vmul.f32 %v1105, %v1104
    %v1107 = vadd.f32 %v1101, %v1106
    %s1108 = sld [smem:[#allocation5 + $0x18b]]
    %v1109 = vld [vmem:[%s393] sm:$0xf]
    %v1110 = vunpack.c.l.bf16 %v1109
    %v1111 = vstv %s1108
    %v1112 = vmul.f32 %v1111, %v1110
    %v1113 = vadd.f32 %v1107, %v1112
    %s1114 = sld [smem:[#allocation5 + $0x18c]]
    %v1115 = vld [vmem:[%s400] sm:$0xf]
    %v1116 = vunpack.c.l.bf16 %v1115
    %v1117 = vstv %s1114
    %v1118 = vmul.f32 %v1117, %v1116
    %v1119 = vadd.f32 %v1113, %v1118
    %s1120 = sld [smem:[#allocation5 + $0x18d]]
    %v1121 = vld [vmem:[%s407] sm:$0xf]
    %v1122 = vunpack.c.l.bf16 %v1121
    %v1123 = vstv %s1120
    %v1124 = vmul.f32 %v1123, %v1122
    %v1125 = vadd.f32 %v1119, %v1124
    %s1126 = sld [smem:[#allocation5 + $0x18e]]
    %v1127 = vld [vmem:[%s414] sm:$0xf]
    %v1128 = vunpack.c.l.bf16 %v1127
    %v1129 = vstv %s1126
    %v1130 = vmul.f32 %v1129, %v1128
    %v1131 = vadd.f32 %v1125, %v1130
    %s1132 = sld [smem:[#allocation5 + $0x18f]]
    %v1133 = vld [vmem:[%s421] sm:$0xf]
    %v1134 = vunpack.c.l.bf16 %v1133
    %v1135 = vstv %s1132
    %v1136 = vmul.f32 %v1135, %v1134
    %v1137 = vadd.f32 %v1131, %v1136
    %v1138 = vmul.f32 %v1137, %v264
    %s1139 = scalar_lea.vmem [#allocation3], 24
    %v1140 = vld [vmem:[%s1139] sm:$0xff]
    %v1141 = vsel %vm429, %v1138, -inf
    %1142 = vmax.xlane.f32.xlu0 %v1141
    %v1143 = vpop.xlane.xlu0 %1142
    %v1144 = vmax.f32 %v1140, %v1143
    %v1145 = vsub.f32 %v1140, %v1144
    %v1146 = vmul.f32 %v1145, 1.442695
    %v1147 = vpow.pop %v1146
    %1149 = vset.pattern.permute.xlu0 0
    %1150 = vperm.xlu0 %1149, %v1144
    %v1151 = vpop.permute.xlu0 %1150
    %v1153 = vsub.f32 %v1138, %v1151
    %v1154 = vmul.f32 %v1153, 1.442695
    %v1155 = vpow.pop %v1154
    %s1156 = scalar_lea.vmem [#allocation4], 24
    %v1157 = vld [vmem:[%s1156] sm:$0xff]
    %v1158 = vmul.f32 %v1147, %v1157
    %v1159 = vsel %vm429, %v1155, 0.0
    %1160 = vadd.xlane.f32.xlu0 %v1159
    %v1161 = vpop.xlane.xlu0 %1160
    %v1162 = vadd.f32 %v1158, %v1161
    %1163 = vst.msk [vmem:[%s1156] sm:$0xff] %vm451, %v1162
    %1164 = vst.msk [vmem:[%s1139] sm:$0xff] %vm451, %v1144
    %v1165 = vpack.c.bf16 %v1155, %v1155
    %1166 = vrot.lane.b32.xlu0 %v267, 32
    %v1167 = vpop.permute.xlu0 %1166
    %v1169 = vsel %vm429, %v1165, 0
    %v1172 = vsel %vm458, %v1167, 0
    %1174 = vmatprep.subr.bf16.mxu0 0
    %1175 = vmatpush1.bf16.msra.mxu0 0
    %1176 = vmatprep.subr.bf16.mxu0 0
    %1177 = vmatpush1.bf16.msra.mxu0 0
    %1178 = vmatprep.subr.bf16.mxu0 0
    %1179 = vmatpush1.bf16.msra.mxu0 0
    %1180 = vmatprep.subr.bf16.mxu0 0
    %1181 = vmatpush1.bf16.msra.mxu0 0
    %1182 = vmatprep.subr.bf16.mxu0 0
    %1183 = vmatpush1.bf16.msra.mxu0 0
    %1184 = vmatprep.subr.bf16.mxu0 0
    %1185 = vmatpush1.bf16.msra.mxu0 0
    %1186 = vmatprep.subr.bf16.mxu0 0
    %1187 = vmatpush1.bf16.msra.mxu0 0
    %1188 = vmatprep.subr.bf16.mxu0 0
    %1189 = vmatpush1.bf16.msra.mxu0 %v1172
    %1190 = vmatprep.subr.bf16.mxu0 0
    %1191 = vmatpush2.bf16.msra.mxu0 0
    %1192 = vmatprep.subr.bf16.mxu0 0
    %1193 = vmatpush2.bf16.msra.mxu0 0
    %1194 = vmatprep.subr.bf16.mxu0 0
    %1195 = vmatpush2.bf16.msra.mxu0 0
    %1196 = vmatprep.subr.bf16.mxu0 0
    %1197 = vmatpush2.bf16.msra.mxu0 0
    %1198 = vmatprep.subr.bf16.mxu0 0
    %1199 = vmatpush2.bf16.msra.mxu0 0
    %1200 = vmatprep.subr.bf16.mxu0 0
    %1201 = vmatpush2.bf16.msra.mxu0 0
    %1202 = vmatprep.subr.bf16.mxu0 0
    %1203 = vmatpush2.bf16.msra.mxu0 0
    %1204 = vmatprep.subr.bf16.mxu0 0
    %1205 = vmatpush2.bf16.msra.mxu0 0
    %1206 = vmatprep.mubr.bf16.mxu0 0
    %1207 = vmatmul.mubr.bf16.gmra.mxu0 %v1169
    %v1208 = vpop.f32.mrf.mxu0
    %v1209 = vadd.f32 0.0, %v1208
    %v1210 = vpop.f32.mrf.mxu0
    %v1211 = vpop.f32.mrf.mxu0
    %v1212 = vpop.f32.mrf.mxu0
    %1213 = vdwg.mxu0
    %v1214 = vld [vmem:[#allocation2] sm:$0xff]
    %1216 = vset.pattern.permute.xlu0 0
    %1217 = vperm.xlu0 %1216, %v1147
    %v1218 = vpop.permute.xlu0 %1217
    %v1220 = vmul.f32 %v1218, %v1214
    %1222 = vrot.lane.b32.xlu0 %v1209, 96
    %v1223 = vpop.permute.xlu0 %1222
    %v1225 = vadd.f32 %v1220, %v1223
    %vm1226 = vcmask 1048320
    %1227 = vst.msk [vmem:[#allocation2] sm:$0xff] %vm1226, %v1225
    // Predicated region
    $region54: #{tpu_custom_call.1} parent=1 // pred_check
      %p1228 = pneg %p59
    $region55: #{tpu_custom_call.1} parent=1 // pred_check_branch
      %1230 = sbr.rel (%p1228) target = $region57
    $region56: #{tpu_custom_call.1} parent=1 // pred_region
      %v1231 = vld [vmem:[#allocation4] sm:$0xff]
      %v1232 = vrcp.pop %v1231
      %v1233 = vld [vmem:[#allocation2] sm:$0xff]
      %1235 = vset.pattern.permute.xlu0 0
      %1236 = vperm.xlu0 %1235, %v1232
      %v1237 = vpop.permute.xlu0 %1236
      %v1239 = vmul.f32 %v1233, %v1237
      %1240 = vst.msk [vmem:[#allocation2] sm:$0xff] %vm74, %v1239
      %v1241 = vld [vmem:[%s679] sm:$0xff]
      %v1242 = vrcp.pop %v1241
      %v1243 = vld [vmem:[#allocation2] sm:$0xff]
      %1245 = vset.pattern.permute.xlu0 0
      %1246 = vperm.xlu0 %1245, %v1242
      %v1247 = vpop.permute.xlu0 %1246
      %v1249 = vmul.f32 %v1243, %v1247
      %1250 = vst.msk [vmem:[#allocation2] sm:$0xff] %vm750, %v1249
      %v1251 = vld [vmem:[%s918] sm:$0xff]
      %v1252 = vrcp.pop %v1251
      %v1253 = vld [vmem:[#allocation2] sm:$0xff]
      %1255 = vset.pattern.permute.xlu0 0
      %1256 = vperm.xlu0 %1255, %v1252
      %v1257 = vpop.permute.xlu0 %1256
      %v1259 = vmul.f32 %v1253, %v1257
      %1260 = vst.msk [vmem:[#allocation2] sm:$0xff] %vm988, %v1259
      %v1261 = vld [vmem:[%s1156] sm:$0xff]
      %v1262 = vrcp.pop %v1261
      %v1263 = vld [vmem:[#allocation2] sm:$0xff]
      %1265 = vset.pattern.permute.xlu0 0
      %1266 = vperm.xlu0 %1265, %v1262
      %v1267 = vpop.permute.xlu0 %1266
      %v1269 = vmul.f32 %v1263, %v1267
      %1270 = vst.msk [vmem:[#allocation2] sm:$0xff] %vm1226, %v1269
      %v1271 = vld [vmem:[#allocation2] sm:$0xff]
      %v1272 = vpack.c.bf16 %v1271, %v1271
      %v1273 = vld [vmem:[%s8] sm:$0xf]
      %v1274 = vld [vmem:[%s8 + $0x4] sm:$0xf]
      %v1275 = vld [vmem:[%s8 + $0x8] sm:$0xf]
      %v1276 = vld [vmem:[%s8 + $0xc] sm:$0xf]
      %v1277 = vld [vmem:[%s8 + $0x10] sm:$0xf]
      %v1278 = vld [vmem:[%s8 + $0x14] sm:$0xf]
      %v1279 = vld [vmem:[%s8 + $0x18] sm:$0xf]
      %v1280 = vld [vmem:[%s8 + $0x1c] sm:$0xf]
      %v1281 = vld [vmem:[%s8 + $0x20] sm:$0xf]
      %v1282 = vld [vmem:[%s8 + $0x24] sm:$0xf]
      %v1283 = vld [vmem:[%s8 + $0x28] sm:$0xf]
      %v1284 = vld [vmem:[%s8 + $0x2c] sm:$0xf]
      %v1285 = vld [vmem:[%s8 + $0x30] sm:$0xf]
      %v1286 = vld [vmem:[%s8 + $0x34] sm:$0xf]
      %v1287 = vld [vmem:[%s8 + $0x38] sm:$0xf]
      %v1288 = vld [vmem:[%s8 + $0x3c] sm:$0xf]
      %v1289 = vlaneseq
      %v1290 = vshrl.u32 %v1289, 7
      %v1291 = vsub.s32 0, %v1290
      %v1292 = vrot.slane %v57, %v1291
      %v1309 = vunpack.c.l.b16 %v1273
      %v1310 = vunpack.c.l.b16 %v1274
      %v1311 = vunpack.c.l.b16 %v1275
      %v1312 = vunpack.c.l.b16 %v1276
      %v1313 = vunpack.c.l.b16 %v1277
      %v1314 = vunpack.c.l.b16 %v1278
      %v1315 = vunpack.c.l.b16 %v1279
      %v1316 = vunpack.c.l.b16 %v1280
      %v1317 = vunpack.c.l.b16 %v1281
      %v1318 = vunpack.c.l.b16 %v1282
      %v1319 = vunpack.c.l.b16 %v1283
      %v1320 = vunpack.c.l.b16 %v1284
      %v1321 = vunpack.c.l.b16 %v1285
      %v1322 = vunpack.c.l.b16 %v1286
      %v1323 = vunpack.c.l.b16 %v1287
      %v1324 = vunpack.c.l.b16 %v1288
      %v1325 = vpack.c.b16 %v1310, %v1309
      %v1326 = vpack.c.b16 %v1312, %v1311
      %v1327 = vpack.c.b16 %v1314, %v1313
      %v1328 = vpack.c.b16 %v1316, %v1315
      %v1329 = vpack.c.b16 %v1318, %v1317
      %v1330 = vpack.c.b16 %v1320, %v1319
      %v1331 = vpack.c.b16 %v1322, %v1321
      %v1332 = vpack.c.b16 %v1324, %v1323
      %1341 = vmatprep.subr.bf16.mxu0 0
      %1342 = vmatpush1.bf16.msra.mxu0 %v1332
      %1343 = vmatprep.subr.bf16.mxu0 0
      %1344 = vmatpush1.bf16.msra.mxu0 %v1331
      %1345 = vmatprep.subr.bf16.mxu0 0
      %1346 = vmatpush1.bf16.msra.mxu0 %v1330
      %1347 = vmatprep.subr.bf16.mxu0 0
      %1348 = vmatpush1.bf16.msra.mxu0 %v1329
      %1349 = vmatprep.subr.bf16.mxu0 0
      %1350 = vmatpush1.bf16.msra.mxu0 %v1328
      %1351 = vmatprep.subr.bf16.mxu0 0
      %1352 = vmatpush1.bf16.msra.mxu0 %v1327
      %1353 = vmatprep.subr.bf16.mxu0 0
      %1354 = vmatpush1.bf16.msra.mxu0 %v1326
      %1355 = vmatprep.subr.bf16.mxu0 0
      %1356 = vmatpush1.bf16.msra.mxu0 %v1325
      %1357 = vmatprep.subr.bf16.mxu0 0
      %1358 = vmatpush2.bf16.msra.mxu0 0
      %1359 = vmatprep.subr.bf16.mxu0 0
      %1360 = vmatpush2.bf16.msra.mxu0 0
      %1361 = vmatprep.subr.bf16.mxu0 0
      %1362 = vmatpush2.bf16.msra.mxu0 0
      %1363 = vmatprep.subr.bf16.mxu0 0
      %1364 = vmatpush2.bf16.msra.mxu0 0
      %1365 = vmatprep.subr.bf16.mxu0 0
      %1366 = vmatpush2.bf16.msra.mxu0 0
      %1367 = vmatprep.subr.bf16.mxu0 0
      %1368 = vmatpush2.bf16.msra.mxu0 0
      %1369 = vmatprep.subr.bf16.mxu0 0
      %1370 = vmatpush2.bf16.msra.mxu0 0
      %1371 = vmatprep.subr.bf16.mxu0 0
      %1372 = vmatpush2.bf16.msra.mxu0 0
      %1373 = vmatprep.mubr.bf16.mxu0 0
      %1374 = vmatmul.mubr.bf16.gmra.mxu0 %v1272
      %v1375 = vpop.f32.mrf.mxu0
      %v1376 = vadd.f32 %v1292, %v1375
      %v1377 = vpop.f32.mrf.mxu0
      %v1378 = vpop.f32.mrf.mxu0
      %v1379 = vpop.f32.mrf.mxu0
      %1380 = vdwg.mxu0
      %v1381 = vadd.f32 %v1376, %v73
      %v1382 = vsel %vm74, %v1381, 0.0
      %1383 = vadd.xlane.f32.xlu0 %v1382
      %v1384 = vpop.xlane.xlu0 %1383
      %v1385 = vmul.f32 %v1384, %v78
      %v1386 = vsub.f32 %v1381, %v1385
      %v1387 = vmul.f32 %v1386, %v1386
      %v1388 = vsel %vm74, %v1387, 0.0
      %1389 = vadd.xlane.f32.xlu0 %v1388
      %v1390 = vpop.xlane.xlu0 %1389
      %v1391 = vmul.f32 %v1390, %v78
      %v1392 = vadd.f32 %v1391, 1e-05
      %v1393 = vrsqrt.pop %v1392
      %v1394 = vmul.f32 %v1386, %v1393
      %v1395 = vlaneseq
      %v1396 = vshrl.u32 %v1395, 7
      %v1397 = vsub.s32 0, %v1396
      %v1398 = vrot.slane %v55, %v1397
      %v1399 = vmul.f32 %v1394, %v1398
      %v1400 = vlaneseq
      %v1401 = vshrl.u32 %v1400, 7
      %v1402 = vsub.s32 0, %v1401
      %v1403 = vrot.slane %v56, %v1402
      %v1404 = vadd.f32 %v1399, %v1403
      %v1405 = vpack.c.bf16 %v1404, %v1404
      %v1406 = vld [vmem:[%s9] sm:$0xf]
      %v1407 = vld [vmem:[%s9 + $0x4] sm:$0xf]
      %v1408 = vld [vmem:[%s9 + $0x8] sm:$0xf]
      %v1409 = vld [vmem:[%s9 + $0xc] sm:$0xf]
      %v1410 = vlaneseq
      %v1411 = vshrl.u32 %v1410, 7
      %v1412 = vsub.s32 0, %v1411
      %v1413 = vrot.slane %v58, %v1412
      %v1418 = vunpack.c.l.b16 %v1406
      %v1419 = vunpack.c.l.b16 %v1407
      %v1420 = vunpack.c.l.b16 %v1408
      %v1421 = vunpack.c.l.b16 %v1409
      %v1422 = vpack.c.b16 %v1419, %v1418
      %v1423 = vpack.c.b16 %v1421, %v1420
      %v1427 = vsel %vm74, %v1405, 0
      %1429 = vmatprep.subr.bf16.mxu0 0
      %1430 = vmatpush1.bf16.msra.mxu0 0
      %1431 = vmatprep.subr.bf16.mxu0 0
      %1432 = vmatpush1.bf16.msra.mxu0 0
      %1433 = vmatprep.subr.bf16.mxu0 0
      %1434 = vmatpush1.bf16.msra.mxu0 0
      %1435 = vmatprep.subr.bf16.mxu0 0
      %1436 = vmatpush1.bf16.msra.mxu0 0
      %1437 = vmatprep.subr.bf16.mxu0 0
      %1438 = vmatpush1.bf16.msra.mxu0 0
      %1439 = vmatprep.subr.bf16.mxu0 0
      %1440 = vmatpush1.bf16.msra.mxu0 0
      %1441 = vmatprep.subr.bf16.mxu0 0
      %1442 = vmatpush1.bf16.msra.mxu0 %v1423
      %1443 = vmatprep.subr.bf16.mxu0 0
      %1444 = vmatpush1.bf16.msra.mxu0 %v1422
      %1445 = vmatprep.subr.bf16.mxu0 0
      %1446 = vmatpush2.bf16.msra.mxu0 0
      %1447 = vmatprep.subr.bf16.mxu0 0
      %1448 = vmatpush2.bf16.msra.mxu0 0
      %1449 = vmatprep.subr.bf16.mxu0 0
      %1450 = vmatpush2.bf16.msra.mxu0 0
      %1451 = vmatprep.subr.bf16.mxu0 0
      %1452 = vmatpush2.bf16.msra.mxu0 0
      %1453 = vmatprep.subr.bf16.mxu0 0
      %1454 = vmatpush2.bf16.msra.mxu0 0
      %1455 = vmatprep.subr.bf16.mxu0 0
      %1456 = vmatpush2.bf16.msra.mxu0 0
      %1457 = vmatprep.subr.bf16.mxu0 0
      %1458 = vmatpush2.bf16.msra.mxu0 0
      %1459 = vmatprep.subr.bf16.mxu0 0
      %1460 = vmatpush2.bf16.msra.mxu0 0
      %1461 = vmatprep.mubr.bf16.mxu0 0
      %1462 = vmatmul.mubr.bf16.gmra.mxu0 %v1427
      %v1463 = vpop.f32.mrf.mxu0
      %v1464 = vadd.f32 %v1413, %v1463
      %v1465 = vpop.f32.mrf.mxu0
      %v1466 = vpop.f32.mrf.mxu0
      %v1467 = vpop.f32.mrf.mxu0
      %1468 = vdwg.mxu0
      %v1469 = vadd.f32 %v1464, %v1381
      %v1470 = vsel %vm74, %v1469, 0.0
      %1471 = vst [vmem:[#allocation8] sm:$0xff] %v1470
    $region57: #{tpu_custom_call.1} parent=1 // pred_fallthru
      _
    // Predicated region
    $region58: #{tpu_custom_call.1} parent=1 // pred_check
      _
    $region59: #{tpu_custom_call.1} parent=1 // pred_check_branch
      %1473 = sbr.rel (0) target = $region61
    $region60: #{tpu_custom_call.1} parent=1 // pred_region
      %s1475 = ssub.s32 128, 128
      %1476 = vsyncadd [#allocation6], %s1475
      %s1478 = sshll.u32 [#allocation8], 4
      %s1479 = int_to_ptr.vmem [resolvable:$true] %s1478
      %1481 = dma.vmem_to_hbm [thread:$0]  %s1479, 128, %s11, [#allocation6]
    $region61: #{tpu_custom_call.1} parent=1 // pred_fallthru
      _
    // Predicated region
    $region62: #{tpu_custom_call.1} parent=1 // pred_check
      _
    $region63: #{tpu_custom_call.1} parent=1 // pred_check_branch
      %1483 = sbr.rel (0) target = $region65
    $region64: #{tpu_custom_call.1} parent=1 // pred_region
      %1484 = dma.done [#allocation6], 128
    $region65: #{tpu_custom_call.1} parent=1 // pred_fallthru
      _
    %1485 = vsyncpa [#allocation6], 1
    %1486 = vsyncpa [#allocation7], 1

</llo_original>
